<compile_context>
chip_gen: v7x
topology: tpu7x:2x2x1
jax: 0.10.0
libtpu: 0.0.40
codegen_flags: <defaults>
</compile_context>

<pallas_src>
import numpy as np
import jax
import jax.numpy as jnp
from jax.experimental import pallas as pl
from jax.experimental.pallas import tpu as pltpu


def gru_decoder_kernel(
    gi0_ref,    # (S, B, 3H)          layer-0 input-gate preactivations (gi-side biases folded in)
    h0_ref,     # (L, B, H)           initial hidden state
    wih_ref,    # (max(L-1,1), H, 3H) fused input-projection weights, layers 1..L-1
    whh_ref,    # (L, H, 3H)          fused hidden-projection weights
    bi_ref,     # (max(L-1,1), 1, 3H) pre-summed gi-side biases, layers 1..L-1
    bhn_ref,    # (L, 1, H)           hidden-side bias of the n gate (stays inside r * (.))
    wout_ref,   # (H, O)
    bout_ref,   # (1, O)
    out_ref,    # (S*B, O)
    r_scratch,  # (S*B, H)            VMEM scratch collecting top-layer hiddens
):
    S, B, _ = gi0_ref.shape
    L, _, H = h0_ref.shape

    # Loop-invariant loads & broadcasts: weights/biases read from VMEM exactly once,
    # bias broadcasts hoisted (not re-emitted every unrolled step).
    whh = [whh_ref[l] for l in range(L)]
    wih = [wih_ref[l - 1] for l in range(1, L)]   # layer 0 has no in-kernel input proj
    bi = [jnp.broadcast_to(bi_ref[l - 1], (B, 3 * H)) for l in range(1, L)]
    bhn = [jnp.broadcast_to(bhn_ref[l], (B, H)) for l in range(L)]

    # Hidden state lives in registers across the statically unrolled time loop.
    h = [h0_ref[l] for l in range(L)]

    for t in range(S):                        # static unroll: S is small and fixed
        layer_in = None
        for l in range(L):                    # static unroll over layers
            h_prev = h[l]
            if l == 0:
                gi = gi0_ref[t]               # precomputed; biases already included
            else:
                gi = (jnp.dot(layer_in, wih[l - 1],
                              preferred_element_type=jnp.float32) + bi[l - 1])
            gh = jnp.dot(h_prev, whh[l], preferred_element_type=jnp.float32)
            # r and z gates share one fused sigmoid over the first 2H lanes.
            rz = jax.nn.sigmoid(gi[:, : 2 * H] + gh[:, : 2 * H])
            r, z = rz[:, :H], rz[:, H:]
            n = jnp.tanh(gi[:, 2 * H:] + r * (gh[:, 2 * H:] + bhn[l]))
            h_new = (1.0 - z) * n + z * h_prev
            h[l] = h_new
            layer_in = h_new
        # Static-offset store of this step's top-layer hidden (off the gate path).
        r_scratch[pl.ds(t * B, B), :] = layer_in

    # Output Linear after the recurrence: one MXU op, one block store.
    out_ref[...] = (
        jnp.dot(r_scratch[...], wout_ref[...], preferred_element_type=jnp.float32)
        + bout_ref[...]
    ).astype(out_ref.dtype)


def decoder_rnn_forward(x, hn, params):
    """Pallas wrapper reproducing Decoder_RNN.forward(x, hn) -> out."""
    S, B, in_dim = x.shape
    L, _, H = hn.shape
    O = params["w_out"].shape[0]

    whh_list, bhn_list = [], []
    wih_rest, bi_rest = [], []
    bi0 = None
    for l in range(L):
        whh_list.append(params[f"weight_hh_l{l}"].T)             # (H, 3H)
        b_ih = params[f"bias_ih_l{l}"]                            # (3H,)
        b_hh = params[f"bias_hh_l{l}"]                            # (3H,)
        # gi-side bias: b_ih + [b_hh_r, b_hh_z, 0]  (b_hh_n must stay on the gh side)
        b_gi = b_ih + jnp.concatenate(
            [b_hh[: 2 * H], jnp.zeros((H,), b_hh.dtype)])
        bhn_list.append(b_hh[2 * H:][None, :])                    # (1, H)
        if l == 0:
            bi0 = b_gi                                            # folded into gi0 below
        else:
            wih_rest.append(params[f"weight_ih_l{l}"].T)          # (H, 3H)
            bi_rest.append(b_gi[None, :])                         # (1, 3H)

    whh = jnp.stack(whh_list)                                     # (L, H, 3H)
    bhn = jnp.stack(bhn_list)                                     # (L, 1, H)
    if L > 1:
        wih = jnp.stack(wih_rest)                                 # (L-1, H, 3H)
        bi = jnp.stack(bi_rest)                                   # (L-1, 1, 3H)
    else:
        # Dummy single slot so the kernel signature stays fixed; never read when L == 1.
        wih = jnp.zeros((1, H, 3 * H), jnp.float32)
        bi = jnp.zeros((1, 1, 3 * H), jnp.float32)

    # Hoisted layer-0 input projection (no recurrence dependence, true K dim = in_dim = 1):
    # gi0[t] = x[t] @ W_ih_l0^T + b_ih_l0 + [b_hh_r_l0, b_hh_z_l0, 0]
    w_ih0 = params["weight_ih_l0"]                                # (3H, in_dim)
    gi0 = jnp.einsum("sbi,gi->sbg", x, w_ih0) + bi0               # (S, B, 3H)

    wout = params["w_out"].T                                      # (H, O)
    bout = params["b_out"][None, :]                               # (1, O)

    inputs = (gi0, hn, wih, whh, bi, bhn, wout, bout)
    vmem = pl.BlockSpec(memory_space=pltpu.MemorySpace.VMEM)

    out_flat = pl.pallas_call(
        gru_decoder_kernel,
        out_shape=jax.ShapeDtypeStruct((S * B, O), x.dtype),
        in_specs=[vmem] * len(inputs),
        out_specs=vmem,
        scratch_shapes=[pltpu.VMEM((S * B, H), jnp.float32)],
    )(*inputs)
    return out_flat.reshape(S, B, O)


def decoder_rnn_reference(x, hn, params):
    """Pure-JAX reference matching torch.nn.GRU + Linear semantics."""
    S, B, _ = x.shape
    L, _, H = hn.shape
    h = [hn[l] for l in range(L)]
    outs = []
    for t in range(S):
        inp = x[t]
        for l in range(L):
            W_ih = params[f"weight_ih_l{l}"]
            W_hh = params[f"weight_hh_l{l}"]
            b_ih = params[f"bias_ih_l{l}"]
            b_hh = params[f"bias_hh_l{l}"]
            gi = inp @ W_ih.T + b_ih
            gh = h[l] @ W_hh.T + b_hh
            i_r, i_z, i_n = jnp.split(gi, 3, axis=-1)
            h_r, h_z, h_n = jnp.split(gh, 3, axis=-1)
            r = jax.nn.sigmoid(i_r + h_r)
            z = jax.nn.sigmoid(i_z + h_z)
            n = jnp.tanh(i_n + r * h_n)
            h[l] = (1.0 - z) * n + z * h[l]
            inp = h[l]
        outs.append(inp)
    r_out = jnp.stack(outs)                                      # (S, B, H)
    return r_out @ params["w_out"].T + params["b_out"]


def init_params(key, hidden_size, output_size, num_layer, input_size=1):
    """Deterministic PyTorch-style init: U(-1/sqrt(H), 1/sqrt(H))."""
    k = 1.0 / float(np.sqrt(hidden_size))
    keys = jax.random.split(key, 4 * num_layer + 2)
    params = {}
    idx = 0
    for l in range(num_layer):
        in_dim = input_size if l == 0 else hidden_size
        params[f"weight_ih_l{l}"] = jax.random.uniform(
            keys[idx], (3 * hidden_size, in_dim), jnp.float32, -k, k); idx += 1
        params[f"weight_hh_l{l}"] = jax.random.uniform(
            keys[idx], (3 * hidden_size, hidden_size), jnp.float32, -k, k); idx += 1
        params[f"bias_ih_l{l}"] = jax.random.uniform(
            keys[idx], (3 * hidden_size,), jnp.float32, -k, k); idx += 1
        params[f"bias_hh_l{l}"] = jax.random.uniform(
            keys[idx], (3 * hidden_size,), jnp.float32, -k, k); idx += 1
    params["w_out"] = jax.random.uniform(
        keys[idx], (output_size, hidden_size), jnp.float32, -k, k); idx += 1
    params["b_out"] = jax.random.uniform(
        keys[idx], (output_size,), jnp.float32, -k, k)
    return params


if __name__ == "__main__":
    hidden_size, output_size, num_layer = 32, 16, 2
    seq, batch = 8, 4

    key = jax.random.PRNGKey(0)
    kp, kx, kh = jax.random.split(key, 3)
    params = init_params(kp, hidden_size, output_size, num_layer)
    x = jax.random.normal(kx, (seq, batch, 1), jnp.float32)
    hn = jax.random.normal(kh, (num_layer, batch, hidden_size), jnp.float32)

    out = decoder_rnn_forward(x, hn, params)
    out = jax.block_until_ready(out)

    ref = decoder_rnn_reference(x, hn, params)
    assert out.shape == (seq, batch, output_size)
    np.testing.assert_allclose(np.asarray(out), np.asarray(ref),
                               rtol=2e-4, atol=3e-5)

    print("KERNEL_OK")
</pallas_src>

<mosaic_0001>
module attributes {stable_mosaic.version = 11 : i64} {
  func.func @gru_decoder_kernel(%arg0: memref<8x4x96xf32, #tpu.memory_space<vmem>>, %arg1: memref<2x4x32xf32, #tpu.memory_space<vmem>>, %arg2: memref<1x32x96xf32, #tpu.memory_space<vmem>>, %arg3: memref<2x32x96xf32, #tpu.memory_space<vmem>>, %arg4: memref<1x1x96xf32, #tpu.memory_space<vmem>>, %arg5: memref<2x1x32xf32, #tpu.memory_space<vmem>>, %arg6: memref<32x16xf32, #tpu.memory_space<vmem>>, %arg7: memref<1x16xf32, #tpu.memory_space<vmem>>, %arg8: memref<32x16xf32, #tpu.memory_space<vmem>>, %arg9: memref<32x32xf32, #tpu.memory_space<vmem>>) attributes {dimension_semantics = [], scalar_prefetch = 0 : i64, scratch_operands = 1 : i64, tpu.core_type = #tpu.core_type<tc>} {
    %c0 = arith.constant 0 : index
    %c0_0 = arith.constant 0 : index
    %c0_1 = arith.constant 0 : index
    %0 = vector.load %arg3[%c0, %c0_0, %c0_1] : memref<2x32x96xf32, #tpu.memory_space<vmem>>, vector<1x32x96xf32>
    %1 = vector.shape_cast %0 : vector<1x32x96xf32> to vector<32x96xf32>
    %c1 = arith.constant 1 : index
    %c0_2 = arith.constant 0 : index
    %c0_3 = arith.constant 0 : index
    %2 = vector.load %arg3[%c1, %c0_2, %c0_3] : memref<2x32x96xf32, #tpu.memory_space<vmem>>, vector<1x32x96xf32>
    %3 = vector.shape_cast %2 : vector<1x32x96xf32> to vector<32x96xf32>
    %c0_4 = arith.constant 0 : index
    %c0_5 = arith.constant 0 : index
    %c0_6 = arith.constant 0 : index
    %4 = vector.load %arg2[%c0_4, %c0_5, %c0_6] : memref<1x32x96xf32, #tpu.memory_space<vmem>>, vector<1x32x96xf32>
    %5 = vector.shape_cast %4 : vector<1x32x96xf32> to vector<32x96xf32>
    %c0_7 = arith.constant 0 : index
    %c0_8 = arith.constant 0 : index
    %c0_9 = arith.constant 0 : index
    %6 = vector.load %arg4[%c0_7, %c0_8, %c0_9] : memref<1x1x96xf32, #tpu.memory_space<vmem>>, vector<1x1x96xf32>
    %7 = vector.shape_cast %6 : vector<1x1x96xf32> to vector<1x96xf32>
    %8 = vector.shape_cast %7 : vector<1x96xf32> to vector<1x96xf32>
    %9 = vector.broadcast %8 : vector<1x96xf32> to vector<4x96xf32>
    %c0_10 = arith.constant 0 : index
    %c0_11 = arith.constant 0 : index
    %c0_12 = arith.constant 0 : index
    %10 = vector.load %arg5[%c0_10, %c0_11, %c0_12] : memref<2x1x32xf32, #tpu.memory_space<vmem>>, vector<1x1x32xf32>
    %11 = vector.shape_cast %10 : vector<1x1x32xf32> to vector<1x32xf32>
    %12 = vector.shape_cast %11 : vector<1x32xf32> to vector<1x32xf32>
    %13 = vector.broadcast %12 : vector<1x32xf32> to vector<4x32xf32>
    %c1_13 = arith.constant 1 : index
    %c0_14 = arith.constant 0 : index
    %c0_15 = arith.constant 0 : index
    %14 = vector.load %arg5[%c1_13, %c0_14, %c0_15] : memref<2x1x32xf32, #tpu.memory_space<vmem>>, vector<1x1x32xf32>
    %15 = vector.shape_cast %14 : vector<1x1x32xf32> to vector<1x32xf32>
    %16 = vector.shape_cast %15 : vector<1x32xf32> to vector<1x32xf32>
    %17 = vector.broadcast %16 : vector<1x32xf32> to vector<4x32xf32>
    %c0_16 = arith.constant 0 : index
    %c0_17 = arith.constant 0 : index
    %c0_18 = arith.constant 0 : index
    %18 = vector.load %arg1[%c0_16, %c0_17, %c0_18] : memref<2x4x32xf32, #tpu.memory_space<vmem>>, vector<1x4x32xf32>
    %19 = vector.shape_cast %18 : vector<1x4x32xf32> to vector<4x32xf32>
    %c1_19 = arith.constant 1 : index
    %c0_20 = arith.constant 0 : index
    %c0_21 = arith.constant 0 : index
    %20 = vector.load %arg1[%c1_19, %c0_20, %c0_21] : memref<2x4x32xf32, #tpu.memory_space<vmem>>, vector<1x4x32xf32>
    %21 = vector.shape_cast %20 : vector<1x4x32xf32> to vector<4x32xf32>
    %c0_22 = arith.constant 0 : index
    %c0_23 = arith.constant 0 : index
    %c0_24 = arith.constant 0 : index
    %22 = vector.load %arg0[%c0_22, %c0_23, %c0_24] : memref<8x4x96xf32, #tpu.memory_space<vmem>>, vector<1x4x96xf32>
    %23 = vector.shape_cast %22 : vector<1x4x96xf32> to vector<4x96xf32>
    %cst = arith.constant dense<0.000000e+00> : vector<4x96xf32>
    %24 = tpu.matmul %19, %1, %cst {dimension_numbers = #tpu.dot_dimension_numbers<[1], [0], [0], [1], [0, 0, 1, 1], [], []>} : vector<4x32xf32>, vector<32x96xf32>, vector<4x96xf32> -> vector<4x96xf32>
    %25 = vector.extract_strided_slice %23 {offsets = [0, 0], sizes = [4, 64], strides = [1, 1]} : vector<4x96xf32> to vector<4x64xf32>
    %26 = vector.extract_strided_slice %24 {offsets = [0, 0], sizes = [4, 64], strides = [1, 1]} : vector<4x96xf32> to vector<4x64xf32>
    %27 = arith.addf %25, %26 : vector<4x64xf32>
    %28 = arith.negf %27 : vector<4x64xf32>
    %29 = math.exp %28 : vector<4x64xf32>
    %cst_25 = arith.constant 1.000000e+00 : f32
    %30 = vector.broadcast %cst_25 : f32 to vector<4x64xf32>
    %31 = arith.addf %30, %29 : vector<4x64xf32>
    %32 = arith.divf %30, %31 : vector<4x64xf32>
    %33 = vector.extract_strided_slice %32 {offsets = [0, 0], sizes = [4, 32], strides = [1, 1]} : vector<4x64xf32> to vector<4x32xf32>
    %34 = vector.extract_strided_slice %32 {offsets = [0, 32], sizes = [4, 32], strides = [1, 1]} : vector<4x64xf32> to vector<4x32xf32>
    %35 = vector.extract_strided_slice %23 {offsets = [0, 64], sizes = [4, 32], strides = [1, 1]} : vector<4x96xf32> to vector<4x32xf32>
    %36 = vector.extract_strided_slice %24 {offsets = [0, 64], sizes = [4, 32], strides = [1, 1]} : vector<4x96xf32> to vector<4x32xf32>
    %37 = arith.addf %36, %13 : vector<4x32xf32>
    %38 = arith.mulf %33, %37 : vector<4x32xf32>
    %39 = arith.addf %35, %38 : vector<4x32xf32>
    %40 = math.tanh %39 : vector<4x32xf32>
    %cst_26 = arith.constant 1.000000e+00 : f32
    %41 = vector.broadcast %cst_26 : f32 to vector<4x32xf32>
    %42 = arith.subf %41, %34 : vector<4x32xf32>
    %43 = arith.mulf %42, %40 : vector<4x32xf32>
    %44 = arith.mulf %34, %19 : vector<4x32xf32>
    %45 = arith.addf %43, %44 : vector<4x32xf32>
    %cst_27 = arith.constant dense<0.000000e+00> : vector<4x96xf32>
    %46 = tpu.matmul %45, %5, %cst_27 {dimension_numbers = #tpu.dot_dimension_numbers<[1], [0], [0], [1], [0, 0, 1, 1], [], []>} : vector<4x32xf32>, vector<32x96xf32>, vector<4x96xf32> -> vector<4x96xf32>
    %47 = arith.addf %46, %9 : vector<4x96xf32>
    %cst_28 = arith.constant dense<0.000000e+00> : vector<4x96xf32>
    %48 = tpu.matmul %21, %3, %cst_28 {dimension_numbers = #tpu.dot_dimension_numbers<[1], [0], [0], [1], [0, 0, 1, 1], [], []>} : vector<4x32xf32>, vector<32x96xf32>, vector<4x96xf32> -> vector<4x96xf32>
    %49 = vector.extract_strided_slice %47 {offsets = [0, 0], sizes = [4, 64], strides = [1, 1]} : vector<4x96xf32> to vector<4x64xf32>
    %50 = vector.extract_strided_slice %48 {offsets = [0, 0], sizes = [4, 64], strides = [1, 1]} : vector<4x96xf32> to vector<4x64xf32>
    %51 = arith.addf %49, %50 : vector<4x64xf32>
    %52 = arith.negf %51 : vector<4x64xf32>
    %53 = math.exp %52 : vector<4x64xf32>
    %cst_29 = arith.constant 1.000000e+00 : f32
    %54 = vector.broadcast %cst_29 : f32 to vector<4x64xf32>
    %55 = arith.addf %54, %53 : vector<4x64xf32>
    %56 = arith.divf %54, %55 : vector<4x64xf32>
    %57 = vector.extract_strided_slice %56 {offsets = [0, 0], sizes = [4, 32], strides = [1, 1]} : vector<4x64xf32> to vector<4x32xf32>
    %58 = vector.extract_strided_slice %56 {offsets = [0, 32], sizes = [4, 32], strides = [1, 1]} : vector<4x64xf32> to vector<4x32xf32>
    %59 = vector.extract_strided_slice %47 {offsets = [0, 64], sizes = [4, 32], strides = [1, 1]} : vector<4x96xf32> to vector<4x32xf32>
    %60 = vector.extract_strided_slice %48 {offsets = [0, 64], sizes = [4, 32], strides = [1, 1]} : vector<4x96xf32> to vector<4x32xf32>
    %61 = arith.addf %60, %17 : vector<4x32xf32>
    %62 = arith.mulf %57, %61 : vector<4x32xf32>
    %63 = arith.addf %59, %62 : vector<4x32xf32>
    %64 = math.tanh %63 : vector<4x32xf32>
    %cst_30 = arith.constant 1.000000e+00 : f32
    %65 = vector.broadcast %cst_30 : f32 to vector<4x32xf32>
    %66 = arith.subf %65, %58 : vector<4x32xf32>
    %67 = arith.mulf %66, %64 : vector<4x32xf32>
    %68 = arith.mulf %58, %21 : vector<4x32xf32>
    %69 = arith.addf %67, %68 : vector<4x32xf32>
    %c0_31 = arith.constant 0 : index
    %c0_32 = arith.constant 0 : index
    %70 = vector.load %arg9[%c0_31, %c0_32] : memref<32x32xf32, #tpu.memory_space<vmem>>, vector<4x32xf32>
    tpu.vector_store %arg9[%c0_31, %c0_32], %69 {strides = array<i32>} : memref<32x32xf32, #tpu.memory_space<vmem>>, vector<4x32xf32>,
    %c1_33 = arith.constant 1 : index
    %c0_34 = arith.constant 0 : index
    %c0_35 = arith.constant 0 : index
    %71 = vector.load %arg0[%c1_33, %c0_34, %c0_35] : memref<8x4x96xf32, #tpu.memory_space<vmem>>, vector<1x4x96xf32>
    %72 = vector.shape_cast %71 : vector<1x4x96xf32> to vector<4x96xf32>
    %cst_36 = arith.constant dense<0.000000e+00> : vector<4x96xf32>
    %73 = tpu.matmul %45, %1, %cst_36 {dimension_numbers = #tpu.dot_dimension_numbers<[1], [0], [0], [1], [0, 0, 1, 1], [], []>} : vector<4x32xf32>, vector<32x96xf32>, vector<4x96xf32> -> vector<4x96xf32>
    %74 = vector.extract_strided_slice %72 {offsets = [0, 0], sizes = [4, 64], strides = [1, 1]} : vector<4x96xf32> to vector<4x64xf32>
    %75 = vector.extract_strided_slice %73 {offsets = [0, 0], sizes = [4, 64], strides = [1, 1]} : vector<4x96xf32> to vector<4x64xf32>
    %76 = arith.addf %74, %75 : vector<4x64xf32>
    %77 = arith.negf %76 : vector<4x64xf32>
    %78 = math.exp %77 : vector<4x64xf32>
    %cst_37 = arith.constant 1.000000e+00 : f32
    %79 = vector.broadcast %cst_37 : f32 to vector<4x64xf32>
    %80 = arith.addf %79, %78 : vector<4x64xf32>
    %81 = arith.divf %79, %80 : vector<4x64xf32>
    %82 = vector.extract_strided_slice %81 {offsets = [0, 0], sizes = [4, 32], strides = [1, 1]} : vector<4x64xf32> to vector<4x32xf32>
    %83 = vector.extract_strided_slice %81 {offsets = [0, 32], sizes = [4, 32], strides = [1, 1]} : vector<4x64xf32> to vector<4x32xf32>
    %84 = vector.extract_strided_slice %72 {offsets = [0, 64], sizes = [4, 32], strides = [1, 1]} : vector<4x96xf32> to vector<4x32xf32>
    %85 = vector.extract_strided_slice %73 {offsets = [0, 64], sizes = [4, 32], strides = [1, 1]} : vector<4x96xf32> to vector<4x32xf32>
    %86 = arith.addf %85, %13 : vector<4x32xf32>
    %87 = arith.mulf %82, %86 : vector<4x32xf32>
    %88 = arith.addf %84, %87 : vector<4x32xf32>
    %89 = math.tanh %88 : vector<4x32xf32>
    %cst_38 = arith.constant 1.000000e+00 : f32
    %90 = vector.broadcast %cst_38 : f32 to vector<4x32xf32>
    %91 = arith.subf %90, %83 : vector<4x32xf32>
    %92 = arith.mulf %91, %89 : vector<4x32xf32>
    %93 = arith.mulf %83, %45 : vector<4x32xf32>
    %94 = arith.addf %92, %93 : vector<4x32xf32>
    %cst_39 = arith.constant dense<0.000000e+00> : vector<4x96xf32>
    %95 = tpu.matmul %94, %5, %cst_39 {dimension_numbers = #tpu.dot_dimension_numbers<[1], [0], [0], [1], [0, 0, 1, 1], [], []>} : vector<4x32xf32>, vector<32x96xf32>, vector<4x96xf32> -> vector<4x96xf32>
    %96 = arith.addf %95, %9 : vector<4x96xf32>
    %cst_40 = arith.constant dense<0.000000e+00> : vector<4x96xf32>
    %97 = tpu.matmul %69, %3, %cst_40 {dimension_numbers = #tpu.dot_dimension_numbers<[1], [0], [0], [1], [0, 0, 1, 1], [], []>} : vector<4x32xf32>, vector<32x96xf32>, vector<4x96xf32> -> vector<4x96xf32>
    %98 = vector.extract_strided_slice %96 {offsets = [0, 0], sizes = [4, 64], strides = [1, 1]} : vector<4x96xf32> to vector<4x64xf32>
    %99 = vector.extract_strided_slice %97 {offsets = [0, 0], sizes = [4, 64], strides = [1, 1]} : vector<4x96xf32> to vector<4x64xf32>
    %100 = arith.addf %98, %99 : vector<4x64xf32>
    %101 = arith.negf %100 : vector<4x64xf32>
    %102 = math.exp %101 : vector<4x64xf32>
    %cst_41 = arith.constant 1.000000e+00 : f32
    %103 = vector.broadcast %cst_41 : f32 to vector<4x64xf32>
    %104 = arith.addf %103, %102 : vector<4x64xf32>
    %105 = arith.divf %103, %104 : vector<4x64xf32>
    %106 = vector.extract_strided_slice %105 {offsets = [0, 0], sizes = [4, 32], strides = [1, 1]} : vector<4x64xf32> to vector<4x32xf32>
    %107 = vector.extract_strided_slice %105 {offsets = [0, 32], sizes = [4, 32], strides = [1, 1]} : vector<4x64xf32> to vector<4x32xf32>
    %108 = vector.extract_strided_slice %96 {offsets = [0, 64], sizes = [4, 32], strides = [1, 1]} : vector<4x96xf32> to vector<4x32xf32>
    %109 = vector.extract_strided_slice %97 {offsets = [0, 64], sizes = [4, 32], strides = [1, 1]} : vector<4x96xf32> to vector<4x32xf32>
    %110 = arith.addf %109, %17 : vector<4x32xf32>
    %111 = arith.mulf %106, %110 : vector<4x32xf32>
    %112 = arith.addf %108, %111 : vector<4x32xf32>
    %113 = math.tanh %112 : vector<4x32xf32>
    %cst_42 = arith.constant 1.000000e+00 : f32
    %114 = vector.broadcast %cst_42 : f32 to vector<4x32xf32>
    %115 = arith.subf %114, %107 : vector<4x32xf32>
    %116 = arith.mulf %115, %113 : vector<4x32xf32>
    %117 = arith.mulf %107, %69 : vector<4x32xf32>
    %118 = arith.addf %116, %117 : vector<4x32xf32>
    %c4 = arith.constant 4 : index
    %c0_43 = arith.constant 0 : index
    %119 = vector.load %arg9[%c4, %c0_43] : memref<32x32xf32, #tpu.memory_space<vmem>>, vector<4x32xf32>
    tpu.vector_store %arg9[%c4, %c0_43], %118 {strides = array<i32>} : memref<32x32xf32, #tpu.memory_space<vmem>>, vector<4x32xf32>,
    %c2 = arith.constant 2 : index
    %c0_44 = arith.constant 0 : index
    %c0_45 = arith.constant 0 : index
    %120 = vector.load %arg0[%c2, %c0_44, %c0_45] : memref<8x4x96xf32, #tpu.memory_space<vmem>>, vector<1x4x96xf32>
    %121 = vector.shape_cast %120 : vector<1x4x96xf32> to vector<4x96xf32>
    %cst_46 = arith.constant dense<0.000000e+00> : vector<4x96xf32>
    %122 = tpu.matmul %94, %1, %cst_46 {dimension_numbers = #tpu.dot_dimension_numbers<[1], [0], [0], [1], [0, 0, 1, 1], [], []>} : vector<4x32xf32>, vector<32x96xf32>, vector<4x96xf32> -> vector<4x96xf32>
    %123 = vector.extract_strided_slice %121 {offsets = [0, 0], sizes = [4, 64], strides = [1, 1]} : vector<4x96xf32> to vector<4x64xf32>
    %124 = vector.extract_strided_slice %122 {offsets = [0, 0], sizes = [4, 64], strides = [1, 1]} : vector<4x96xf32> to vector<4x64xf32>
    %125 = arith.addf %123, %124 : vector<4x64xf32>
    %126 = arith.negf %125 : vector<4x64xf32>
    %127 = math.exp %126 : vector<4x64xf32>
    %cst_47 = arith.constant 1.000000e+00 : f32
    %128 = vector.broadcast %cst_47 : f32 to vector<4x64xf32>
    %129 = arith.addf %128, %127 : vector<4x64xf32>
    %130 = arith.divf %128, %129 : vector<4x64xf32>
    %131 = vector.extract_strided_slice %130 {offsets = [0, 0], sizes = [4, 32], strides = [1, 1]} : vector<4x64xf32> to vector<4x32xf32>
    %132 = vector.extract_strided_slice %130 {offsets = [0, 32], sizes = [4, 32], strides = [1, 1]} : vector<4x64xf32> to vector<4x32xf32>
    %133 = vector.extract_strided_slice %121 {offsets = [0, 64], sizes = [4, 32], strides = [1, 1]} : vector<4x96xf32> to vector<4x32xf32>
    %134 = vector.extract_strided_slice %122 {offsets = [0, 64], sizes = [4, 32], strides = [1, 1]} : vector<4x96xf32> to vector<4x32xf32>
    %135 = arith.addf %134, %13 : vector<4x32xf32>
    %136 = arith.mulf %131, %135 : vector<4x32xf32>
    %137 = arith.addf %133, %136 : vector<4x32xf32>
    %138 = math.tanh %137 : vector<4x32xf32>
    %cst_48 = arith.constant 1.000000e+00 : f32
    %139 = vector.broadcast %cst_48 : f32 to vector<4x32xf32>
    %140 = arith.subf %139, %132 : vector<4x32xf32>
    %141 = arith.mulf %140, %138 : vector<4x32xf32>
    %142 = arith.mulf %132, %94 : vector<4x32xf32>
    %143 = arith.addf %141, %142 : vector<4x32xf32>
    %cst_49 = arith.constant dense<0.000000e+00> : vector<4x96xf32>
    %144 = tpu.matmul %143, %5, %cst_49 {dimension_numbers = #tpu.dot_dimension_numbers<[1], [0], [0], [1], [0, 0, 1, 1], [], []>} : vector<4x32xf32>, vector<32x96xf32>, vector<4x96xf32> -> vector<4x96xf32>
    %145 = arith.addf %144, %9 : vector<4x96xf32>
    %cst_50 = arith.constant dense<0.000000e+00> : vector<4x96xf32>
    %146 = tpu.matmul %118, %3, %cst_50 {dimension_numbers = #tpu.dot_dimension_numbers<[1], [0], [0], [1], [0, 0, 1, 1], [], []>} : vector<4x32xf32>, vector<32x96xf32>, vector<4x96xf32> -> vector<4x96xf32>
    %147 = vector.extract_strided_slice %145 {offsets = [0, 0], sizes = [4, 64], strides = [1, 1]} : vector<4x96xf32> to vector<4x64xf32>
    %148 = vector.extract_strided_slice %146 {offsets = [0, 0], sizes = [4, 64], strides = [1, 1]} : vector<4x96xf32> to vector<4x64xf32>
    %149 = arith.addf %147, %148 : vector<4x64xf32>
    %150 = arith.negf %149 : vector<4x64xf32>
    %151 = math.exp %150 : vector<4x64xf32>
    %cst_51 = arith.constant 1.000000e+00 : f32
    %152 = vector.broadcast %cst_51 : f32 to vector<4x64xf32>
    %153 = arith.addf %152, %151 : vector<4x64xf32>
    %154 = arith.divf %152, %153 : vector<4x64xf32>
    %155 = vector.extract_strided_slice %154 {offsets = [0, 0], sizes = [4, 32], strides = [1, 1]} : vector<4x64xf32> to vector<4x32xf32>
    %156 = vector.extract_strided_slice %154 {offsets = [0, 32], sizes = [4, 32], strides = [1, 1]} : vector<4x64xf32> to vector<4x32xf32>
    %157 = vector.extract_strided_slice %145 {offsets = [0, 64], sizes = [4, 32], strides = [1, 1]} : vector<4x96xf32> to vector<4x32xf32>
    %158 = vector.extract_strided_slice %146 {offsets = [0, 64], sizes = [4, 32], strides = [1, 1]} : vector<4x96xf32> to vector<4x32xf32>
    %159 = arith.addf %158, %17 : vector<4x32xf32>
    %160 = arith.mulf %155, %159 : vector<4x32xf32>
    %161 = arith.addf %157, %160 : vector<4x32xf32>
    %162 = math.tanh %161 : vector<4x32xf32>
    %cst_52 = arith.constant 1.000000e+00 : f32
    %163 = vector.broadcast %cst_52 : f32 to vector<4x32xf32>
    %164 = arith.subf %163, %156 : vector<4x32xf32>
    %165 = arith.mulf %164, %162 : vector<4x32xf32>
    %166 = arith.mulf %156, %118 : vector<4x32xf32>
    %167 = arith.addf %165, %166 : vector<4x32xf32>
    %c8 = arith.constant 8 : index
    %c0_53 = arith.constant 0 : index
    %168 = vector.load %arg9[%c8, %c0_53] : memref<32x32xf32, #tpu.memory_space<vmem>>, vector<4x32xf32>
    tpu.vector_store %arg9[%c8, %c0_53], %167 {strides = array<i32>} : memref<32x32xf32, #tpu.memory_space<vmem>>, vector<4x32xf32>,
    %c3 = arith.constant 3 : index
    %c0_54 = arith.constant 0 : index
    %c0_55 = arith.constant 0 : index
    %169 = vector.load %arg0[%c3, %c0_54, %c0_55] : memref<8x4x96xf32, #tpu.memory_space<vmem>>, vector<1x4x96xf32>
    %170 = vector.shape_cast %169 : vector<1x4x96xf32> to vector<4x96xf32>
    %cst_56 = arith.constant dense<0.000000e+00> : vector<4x96xf32>
    %171 = tpu.matmul %143, %1, %cst_56 {dimension_numbers = #tpu.dot_dimension_numbers<[1], [0], [0], [1], [0, 0, 1, 1], [], []>} : vector<4x32xf32>, vector<32x96xf32>, vector<4x96xf32> -> vector<4x96xf32>
    %172 = vector.extract_strided_slice %170 {offsets = [0, 0], sizes = [4, 64], strides = [1, 1]} : vector<4x96xf32> to vector<4x64xf32>
    %173 = vector.extract_strided_slice %171 {offsets = [0, 0], sizes = [4, 64], strides = [1, 1]} : vector<4x96xf32> to vector<4x64xf32>
    %174 = arith.addf %172, %173 : vector<4x64xf32>
    %175 = arith.negf %174 : vector<4x64xf32>
    %176 = math.exp %175 : vector<4x64xf32>
    %cst_57 = arith.constant 1.000000e+00 : f32
    %177 = vector.broadcast %cst_57 : f32 to vector<4x64xf32>
    %178 = arith.addf %177, %176 : vector<4x64xf32>
    %179 = arith.divf %177, %178 : vector<4x64xf32>
    %180 = vector.extract_strided_slice %179 {offsets = [0, 0], sizes = [4, 32], strides = [1, 1]} : vector<4x64xf32> to vector<4x32xf32>
    %181 = vector.extract_strided_slice %179 {offsets = [0, 32], sizes = [4, 32], strides = [1, 1]} : vector<4x64xf32> to vector<4x32xf32>
    %182 = vector.extract_strided_slice %170 {offsets = [0, 64], sizes = [4, 32], strides = [1, 1]} : vector<4x96xf32> to vector<4x32xf32>
    %183 = vector.extract_strided_slice %171 {offsets = [0, 64], sizes = [4, 32], strides = [1, 1]} : vector<4x96xf32> to vector<4x32xf32>
    %184 = arith.addf %183, %13 : vector<4x32xf32>
    %185 = arith.mulf %180, %184 : vector<4x32xf32>
    %186 = arith.addf %182, %185 : vector<4x32xf32>
    %187 = math.tanh %186 : vector<4x32xf32>
    %cst_58 = arith.constant 1.000000e+00 : f32
    %188 = vector.broadcast %cst_58 : f32 to vector<4x32xf32>
    %189 = arith.subf %188, %181 : vector<4x32xf32>
    %190 = arith.mulf %189, %187 : vector<4x32xf32>
    %191 = arith.mulf %181, %143 : vector<4x32xf32>
    %192 = arith.addf %190, %191 : vector<4x32xf32>
    %cst_59 = arith.constant dense<0.000000e+00> : vector<4x96xf32>
    %193 = tpu.matmul %192, %5, %cst_59 {dimension_numbers = #tpu.dot_dimension_numbers<[1], [0], [0], [1], [0, 0, 1, 1], [], []>} : vector<4x32xf32>, vector<32x96xf32>, vector<4x96xf32> -> vector<4x96xf32>
    %194 = arith.addf %193, %9 : vector<4x96xf32>
    %cst_60 = arith.constant dense<0.000000e+00> : vector<4x96xf32>
    %195 = tpu.matmul %167, %3, %cst_60 {dimension_numbers = #tpu.dot_dimension_numbers<[1], [0], [0], [1], [0, 0, 1, 1], [], []>} : vector<4x32xf32>, vector<32x96xf32>, vector<4x96xf32> -> vector<4x96xf32>
    %196 = vector.extract_strided_slice %194 {offsets = [0, 0], sizes = [4, 64], strides = [1, 1]} : vector<4x96xf32> to vector<4x64xf32>
    %197 = vector.extract_strided_slice %195 {offsets = [0, 0], sizes = [4, 64], strides = [1, 1]} : vector<4x96xf32> to vector<4x64xf32>
    %198 = arith.addf %196, %197 : vector<4x64xf32>
    %199 = arith.negf %198 : vector<4x64xf32>
    %200 = math.exp %199 : vector<4x64xf32>
    %cst_61 = arith.constant 1.000000e+00 : f32
    %201 = vector.broadcast %cst_61 : f32 to vector<4x64xf32>
    %202 = arith.addf %201, %200 : vector<4x64xf32>
    %203 = arith.divf %201, %202 : vector<4x64xf32>
    %204 = vector.extract_strided_slice %203 {offsets = [0, 0], sizes = [4, 32], strides = [1, 1]} : vector<4x64xf32> to vector<4x32xf32>
    %205 = vector.extract_strided_slice %203 {offsets = [0, 32], sizes = [4, 32], strides = [1, 1]} : vector<4x64xf32> to vector<4x32xf32>
    %206 = vector.extract_strided_slice %194 {offsets = [0, 64], sizes = [4, 32], strides = [1, 1]} : vector<4x96xf32> to vector<4x32xf32>
    %207 = vector.extract_strided_slice %195 {offsets = [0, 64], sizes = [4, 32], strides = [1, 1]} : vector<4x96xf32> to vector<4x32xf32>
    %208 = arith.addf %207, %17 : vector<4x32xf32>
    %209 = arith.mulf %204, %208 : vector<4x32xf32>
    %210 = arith.addf %206, %209 : vector<4x32xf32>
    %211 = math.tanh %210 : vector<4x32xf32>
    %cst_62 = arith.constant 1.000000e+00 : f32
    %212 = vector.broadcast %cst_62 : f32 to vector<4x32xf32>
    %213 = arith.subf %212, %205 : vector<4x32xf32>
    %214 = arith.mulf %213, %211 : vector<4x32xf32>
    %215 = arith.mulf %205, %167 : vector<4x32xf32>
    %216 = arith.addf %214, %215 : vector<4x32xf32>
    %c12 = arith.constant 12 : index
    %c0_63 = arith.constant 0 : index
    %217 = vector.load %arg9[%c12, %c0_63] : memref<32x32xf32, #tpu.memory_space<vmem>>, vector<4x32xf32>
    tpu.vector_store %arg9[%c12, %c0_63], %216 {strides = array<i32>} : memref<32x32xf32, #tpu.memory_space<vmem>>, vector<4x32xf32>,
    %c4_64 = arith.constant 4 : index
    %c0_65 = arith.constant 0 : index
    %c0_66 = arith.constant 0 : index
    %218 = vector.load %arg0[%c4_64, %c0_65, %c0_66] : memref<8x4x96xf32, #tpu.memory_space<vmem>>, vector<1x4x96xf32>
    %219 = vector.shape_cast %218 : vector<1x4x96xf32> to vector<4x96xf32>
    %cst_67 = arith.constant dense<0.000000e+00> : vector<4x96xf32>
    %220 = tpu.matmul %192, %1, %cst_67 {dimension_numbers = #tpu.dot_dimension_numbers<[1], [0], [0], [1], [0, 0, 1, 1], [], []>} : vector<4x32xf32>, vector<32x96xf32>, vector<4x96xf32> -> vector<4x96xf32>
    %221 = vector.extract_strided_slice %219 {offsets = [0, 0], sizes = [4, 64], strides = [1, 1]} : vector<4x96xf32> to vector<4x64xf32>
    %222 = vector.extract_strided_slice %220 {offsets = [0, 0], sizes = [4, 64], strides = [1, 1]} : vector<4x96xf32> to vector<4x64xf32>
    %223 = arith.addf %221, %222 : vector<4x64xf32>
    %224 = arith.negf %223 : vector<4x64xf32>
    %225 = math.exp %224 : vector<4x64xf32>
    %cst_68 = arith.constant 1.000000e+00 : f32
    %226 = vector.broadcast %cst_68 : f32 to vector<4x64xf32>
    %227 = arith.addf %226, %225 : vector<4x64xf32>
    %228 = arith.divf %226, %227 : vector<4x64xf32>
    %229 = vector.extract_strided_slice %228 {offsets = [0, 0], sizes = [4, 32], strides = [1, 1]} : vector<4x64xf32> to vector<4x32xf32>
    %230 = vector.extract_strided_slice %228 {offsets = [0, 32], sizes = [4, 32], strides = [1, 1]} : vector<4x64xf32> to vector<4x32xf32>
    %231 = vector.extract_strided_slice %219 {offsets = [0, 64], sizes = [4, 32], strides = [1, 1]} : vector<4x96xf32> to vector<4x32xf32>
    %232 = vector.extract_strided_slice %220 {offsets = [0, 64], sizes = [4, 32], strides = [1, 1]} : vector<4x96xf32> to vector<4x32xf32>
    %233 = arith.addf %232, %13 : vector<4x32xf32>
    %234 = arith.mulf %229, %233 : vector<4x32xf32>
    %235 = arith.addf %231, %234 : vector<4x32xf32>
    %236 = math.tanh %235 : vector<4x32xf32>
    %cst_69 = arith.constant 1.000000e+00 : f32
    %237 = vector.broadcast %cst_69 : f32 to vector<4x32xf32>
    %238 = arith.subf %237, %230 : vector<4x32xf32>
    %239 = arith.mulf %238, %236 : vector<4x32xf32>
    %240 = arith.mulf %230, %192 : vector<4x32xf32>
    %241 = arith.addf %239, %240 : vector<4x32xf32>
    %cst_70 = arith.constant dense<0.000000e+00> : vector<4x96xf32>
    %242 = tpu.matmul %241, %5, %cst_70 {dimension_numbers = #tpu.dot_dimension_numbers<[1], [0], [0], [1], [0, 0, 1, 1], [], []>} : vector<4x32xf32>, vector<32x96xf32>, vector<4x96xf32> -> vector<4x96xf32>
    %243 = arith.addf %242, %9 : vector<4x96xf32>
    %cst_71 = arith.constant dense<0.000000e+00> : vector<4x96xf32>
    %244 = tpu.matmul %216, %3, %cst_71 {dimension_numbers = #tpu.dot_dimension_numbers<[1], [0], [0], [1], [0, 0, 1, 1], [], []>} : vector<4x32xf32>, vector<32x96xf32>, vector<4x96xf32> -> vector<4x96xf32>
    %245 = vector.extract_strided_slice %243 {offsets = [0, 0], sizes = [4, 64], strides = [1, 1]} : vector<4x96xf32> to vector<4x64xf32>
    %246 = vector.extract_strided_slice %244 {offsets = [0, 0], sizes = [4, 64], strides = [1, 1]} : vector<4x96xf32> to vector<4x64xf32>
    %247 = arith.addf %245, %246 : vector<4x64xf32>
    %248 = arith.negf %247 : vector<4x64xf32>
    %249 = math.exp %248 : vector<4x64xf32>
    %cst_72 = arith.constant 1.000000e+00 : f32
    %250 = vector.broadcast %cst_72 : f32 to vector<4x64xf32>
    %251 = arith.addf %250, %249 : vector<4x64xf32>
    %252 = arith.divf %250, %251 : vector<4x64xf32>
    %253 = vector.extract_strided_slice %252 {offsets = [0, 0], sizes = [4, 32], strides = [1, 1]} : vector<4x64xf32> to vector<4x32xf32>
    %254 = vector.extract_strided_slice %252 {offsets = [0, 32], sizes = [4, 32], strides = [1, 1]} : vector<4x64xf32> to vector<4x32xf32>
    %255 = vector.extract_strided_slice %243 {offsets = [0, 64], sizes = [4, 32], strides = [1, 1]} : vector<4x96xf32> to vector<4x32xf32>
    %256 = vector.extract_strided_slice %244 {offsets = [0, 64], sizes = [4, 32], strides = [1, 1]} : vector<4x96xf32> to vector<4x32xf32>
    %257 = arith.addf %256, %17 : vector<4x32xf32>
    %258 = arith.mulf %253, %257 : vector<4x32xf32>
    %259 = arith.addf %255, %258 : vector<4x32xf32>
    %260 = math.tanh %259 : vector<4x32xf32>
    %cst_73 = arith.constant 1.000000e+00 : f32
    %261 = vector.broadcast %cst_73 : f32 to vector<4x32xf32>
    %262 = arith.subf %261, %254 : vector<4x32xf32>
    %263 = arith.mulf %262, %260 : vector<4x32xf32>
    %264 = arith.mulf %254, %216 : vector<4x32xf32>
    %265 = arith.addf %263, %264 : vector<4x32xf32>
    %c16 = arith.constant 16 : index
    %c0_74 = arith.constant 0 : index
    %266 = vector.load %arg9[%c16, %c0_74] : memref<32x32xf32, #tpu.memory_space<vmem>>, vector<4x32xf32>
    tpu.vector_store %arg9[%c16, %c0_74], %265 {strides = array<i32>} : memref<32x32xf32, #tpu.memory_space<vmem>>, vector<4x32xf32>,
    %c5 = arith.constant 5 : index
    %c0_75 = arith.constant 0 : index
    %c0_76 = arith.constant 0 : index
    %267 = vector.load %arg0[%c5, %c0_75, %c0_76] : memref<8x4x96xf32, #tpu.memory_space<vmem>>, vector<1x4x96xf32>
    %268 = vector.shape_cast %267 : vector<1x4x96xf32> to vector<4x96xf32>
    %cst_77 = arith.constant dense<0.000000e+00> : vector<4x96xf32>
    %269 = tpu.matmul %241, %1, %cst_77 {dimension_numbers = #tpu.dot_dimension_numbers<[1], [0], [0], [1], [0, 0, 1, 1], [], []>} : vector<4x32xf32>, vector<32x96xf32>, vector<4x96xf32> -> vector<4x96xf32>
    %270 = vector.extract_strided_slice %268 {offsets = [0, 0], sizes = [4, 64], strides = [1, 1]} : vector<4x96xf32> to vector<4x64xf32>
    %271 = vector.extract_strided_slice %269 {offsets = [0, 0], sizes = [4, 64], strides = [1, 1]} : vector<4x96xf32> to vector<4x64xf32>
    %272 = arith.addf %270, %271 : vector<4x64xf32>
    %273 = arith.negf %272 : vector<4x64xf32>
    %274 = math.exp %273 : vector<4x64xf32>
    %cst_78 = arith.constant 1.000000e+00 : f32
    %275 = vector.broadcast %cst_78 : f32 to vector<4x64xf32>
    %276 = arith.addf %275, %274 : vector<4x64xf32>
    %277 = arith.divf %275, %276 : vector<4x64xf32>
    %278 = vector.extract_strided_slice %277 {offsets = [0, 0], sizes = [4, 32], strides = [1, 1]} : vector<4x64xf32> to vector<4x32xf32>
    %279 = vector.extract_strided_slice %277 {offsets = [0, 32], sizes = [4, 32], strides = [1, 1]} : vector<4x64xf32> to vector<4x32xf32>
    %280 = vector.extract_strided_slice %268 {offsets = [0, 64], sizes = [4, 32], strides = [1, 1]} : vector<4x96xf32> to vector<4x32xf32>
    %281 = vector.extract_strided_slice %269 {offsets = [0, 64], sizes = [4, 32], strides = [1, 1]} : vector<4x96xf32> to vector<4x32xf32>
    %282 = arith.addf %281, %13 : vector<4x32xf32>
    %283 = arith.mulf %278, %282 : vector<4x32xf32>
    %284 = arith.addf %280, %283 : vector<4x32xf32>
    %285 = math.tanh %284 : vector<4x32xf32>
    %cst_79 = arith.constant 1.000000e+00 : f32
    %286 = vector.broadcast %cst_79 : f32 to vector<4x32xf32>
    %287 = arith.subf %286, %279 : vector<4x32xf32>
    %288 = arith.mulf %287, %285 : vector<4x32xf32>
    %289 = arith.mulf %279, %241 : vector<4x32xf32>
    %290 = arith.addf %288, %289 : vector<4x32xf32>
    %cst_80 = arith.constant dense<0.000000e+00> : vector<4x96xf32>
    %291 = tpu.matmul %290, %5, %cst_80 {dimension_numbers = #tpu.dot_dimension_numbers<[1], [0], [0], [1], [0, 0, 1, 1], [], []>} : vector<4x32xf32>, vector<32x96xf32>, vector<4x96xf32> -> vector<4x96xf32>
    %292 = arith.addf %291, %9 : vector<4x96xf32>
    %cst_81 = arith.constant dense<0.000000e+00> : vector<4x96xf32>
    %293 = tpu.matmul %265, %3, %cst_81 {dimension_numbers = #tpu.dot_dimension_numbers<[1], [0], [0], [1], [0, 0, 1, 1], [], []>} : vector<4x32xf32>, vector<32x96xf32>, vector<4x96xf32> -> vector<4x96xf32>
    %294 = vector.extract_strided_slice %292 {offsets = [0, 0], sizes = [4, 64], strides = [1, 1]} : vector<4x96xf32> to vector<4x64xf32>
    %295 = vector.extract_strided_slice %293 {offsets = [0, 0], sizes = [4, 64], strides = [1, 1]} : vector<4x96xf32> to vector<4x64xf32>
    %296 = arith.addf %294, %295 : vector<4x64xf32>
    %297 = arith.negf %296 : vector<4x64xf32>
    %298 = math.exp %297 : vector<4x64xf32>
    %cst_82 = arith.constant 1.000000e+00 : f32
    %299 = vector.broadcast %cst_82 : f32 to vector<4x64xf32>
    %300 = arith.addf %299, %298 : vector<4x64xf32>
    %301 = arith.divf %299, %300 : vector<4x64xf32>
    %302 = vector.extract_strided_slice %301 {offsets = [0, 0], sizes = [4, 32], strides = [1, 1]} : vector<4x64xf32> to vector<4x32xf32>
    %303 = vector.extract_strided_slice %301 {offsets = [0, 32], sizes = [4, 32], strides = [1, 1]} : vector<4x64xf32> to vector<4x32xf32>
    %304 = vector.extract_strided_slice %292 {offsets = [0, 64], sizes = [4, 32], strides = [1, 1]} : vector<4x96xf32> to vector<4x32xf32>
    %305 = vector.extract_strided_slice %293 {offsets = [0, 64], sizes = [4, 32], strides = [1, 1]} : vector<4x96xf32> to vector<4x32xf32>
    %306 = arith.addf %305, %17 : vector<4x32xf32>
    %307 = arith.mulf %302, %306 : vector<4x32xf32>
    %308 = arith.addf %304, %307 : vector<4x32xf32>
    %309 = math.tanh %308 : vector<4x32xf32>
    %cst_83 = arith.constant 1.000000e+00 : f32
    %310 = vector.broadcast %cst_83 : f32 to vector<4x32xf32>
    %311 = arith.subf %310, %303 : vector<4x32xf32>
    %312 = arith.mulf %311, %309 : vector<4x32xf32>
    %313 = arith.mulf %303, %265 : vector<4x32xf32>
    %314 = arith.addf %312, %313 : vector<4x32xf32>
    %c20 = arith.constant 20 : index
    %c0_84 = arith.constant 0 : index
    %315 = vector.load %arg9[%c20, %c0_84] : memref<32x32xf32, #tpu.memory_space<vmem>>, vector<4x32xf32>
    tpu.vector_store %arg9[%c20, %c0_84], %314 {strides = array<i32>} : memref<32x32xf32, #tpu.memory_space<vmem>>, vector<4x32xf32>,
    %c6 = arith.constant 6 : index
    %c0_85 = arith.constant 0 : index
    %c0_86 = arith.constant 0 : index
    %316 = vector.load %arg0[%c6, %c0_85, %c0_86] : memref<8x4x96xf32, #tpu.memory_space<vmem>>, vector<1x4x96xf32>
    %317 = vector.shape_cast %316 : vector<1x4x96xf32> to vector<4x96xf32>
    %cst_87 = arith.constant dense<0.000000e+00> : vector<4x96xf32>
    %318 = tpu.matmul %290, %1, %cst_87 {dimension_numbers = #tpu.dot_dimension_numbers<[1], [0], [0], [1], [0, 0, 1, 1], [], []>} : vector<4x32xf32>, vector<32x96xf32>, vector<4x96xf32> -> vector<4x96xf32>
    %319 = vector.extract_strided_slice %317 {offsets = [0, 0], sizes = [4, 64], strides = [1, 1]} : vector<4x96xf32> to vector<4x64xf32>
    %320 = vector.extract_strided_slice %318 {offsets = [0, 0], sizes = [4, 64], strides = [1, 1]} : vector<4x96xf32> to vector<4x64xf32>
    %321 = arith.addf %319, %320 : vector<4x64xf32>
    %322 = arith.negf %321 : vector<4x64xf32>
    %323 = math.exp %322 : vector<4x64xf32>
    %cst_88 = arith.constant 1.000000e+00 : f32
    %324 = vector.broadcast %cst_88 : f32 to vector<4x64xf32>
    %325 = arith.addf %324, %323 : vector<4x64xf32>
    %326 = arith.divf %324, %325 : vector<4x64xf32>
    %327 = vector.extract_strided_slice %326 {offsets = [0, 0], sizes = [4, 32], strides = [1, 1]} : vector<4x64xf32> to vector<4x32xf32>
    %328 = vector.extract_strided_slice %326 {offsets = [0, 32], sizes = [4, 32], strides = [1, 1]} : vector<4x64xf32> to vector<4x32xf32>
    %329 = vector.extract_strided_slice %317 {offsets = [0, 64], sizes = [4, 32], strides = [1, 1]} : vector<4x96xf32> to vector<4x32xf32>
    %330 = vector.extract_strided_slice %318 {offsets = [0, 64], sizes = [4, 32], strides = [1, 1]} : vector<4x96xf32> to vector<4x32xf32>
    %331 = arith.addf %330, %13 : vector<4x32xf32>
    %332 = arith.mulf %327, %331 : vector<4x32xf32>
    %333 = arith.addf %329, %332 : vector<4x32xf32>
    %334 = math.tanh %333 : vector<4x32xf32>
    %cst_89 = arith.constant 1.000000e+00 : f32
    %335 = vector.broadcast %cst_89 : f32 to vector<4x32xf32>
    %336 = arith.subf %335, %328 : vector<4x32xf32>
    %337 = arith.mulf %336, %334 : vector<4x32xf32>
    %338 = arith.mulf %328, %290 : vector<4x32xf32>
    %339 = arith.addf %337, %338 : vector<4x32xf32>
    %cst_90 = arith.constant dense<0.000000e+00> : vector<4x96xf32>
    %340 = tpu.matmul %339, %5, %cst_90 {dimension_numbers = #tpu.dot_dimension_numbers<[1], [0], [0], [1], [0, 0, 1, 1], [], []>} : vector<4x32xf32>, vector<32x96xf32>, vector<4x96xf32> -> vector<4x96xf32>
    %341 = arith.addf %340, %9 : vector<4x96xf32>
    %cst_91 = arith.constant dense<0.000000e+00> : vector<4x96xf32>
    %342 = tpu.matmul %314, %3, %cst_91 {dimension_numbers = #tpu.dot_dimension_numbers<[1], [0], [0], [1], [0, 0, 1, 1], [], []>} : vector<4x32xf32>, vector<32x96xf32>, vector<4x96xf32> -> vector<4x96xf32>
    %343 = vector.extract_strided_slice %341 {offsets = [0, 0], sizes = [4, 64], strides = [1, 1]} : vector<4x96xf32> to vector<4x64xf32>
    %344 = vector.extract_strided_slice %342 {offsets = [0, 0], sizes = [4, 64], strides = [1, 1]} : vector<4x96xf32> to vector<4x64xf32>
    %345 = arith.addf %343, %344 : vector<4x64xf32>
    %346 = arith.negf %345 : vector<4x64xf32>
    %347 = math.exp %346 : vector<4x64xf32>
    %cst_92 = arith.constant 1.000000e+00 : f32
    %348 = vector.broadcast %cst_92 : f32 to vector<4x64xf32>
    %349 = arith.addf %348, %347 : vector<4x64xf32>
    %350 = arith.divf %348, %349 : vector<4x64xf32>
    %351 = vector.extract_strided_slice %350 {offsets = [0, 0], sizes = [4, 32], strides = [1, 1]} : vector<4x64xf32> to vector<4x32xf32>
    %352 = vector.extract_strided_slice %350 {offsets = [0, 32], sizes = [4, 32], strides = [1, 1]} : vector<4x64xf32> to vector<4x32xf32>
    %353 = vector.extract_strided_slice %341 {offsets = [0, 64], sizes = [4, 32], strides = [1, 1]} : vector<4x96xf32> to vector<4x32xf32>
    %354 = vector.extract_strided_slice %342 {offsets = [0, 64], sizes = [4, 32], strides = [1, 1]} : vector<4x96xf32> to vector<4x32xf32>
    %355 = arith.addf %354, %17 : vector<4x32xf32>
    %356 = arith.mulf %351, %355 : vector<4x32xf32>
    %357 = arith.addf %353, %356 : vector<4x32xf32>
    %358 = math.tanh %357 : vector<4x32xf32>
    %cst_93 = arith.constant 1.000000e+00 : f32
    %359 = vector.broadcast %cst_93 : f32 to vector<4x32xf32>
    %360 = arith.subf %359, %352 : vector<4x32xf32>
    %361 = arith.mulf %360, %358 : vector<4x32xf32>
    %362 = arith.mulf %352, %314 : vector<4x32xf32>
    %363 = arith.addf %361, %362 : vector<4x32xf32>
    %c24 = arith.constant 24 : index
    %c0_94 = arith.constant 0 : index
    %364 = vector.load %arg9[%c24, %c0_94] : memref<32x32xf32, #tpu.memory_space<vmem>>, vector<4x32xf32>
    tpu.vector_store %arg9[%c24, %c0_94], %363 {strides = array<i32>} : memref<32x32xf32, #tpu.memory_space<vmem>>, vector<4x32xf32>,
    %c7 = arith.constant 7 : index
    %c0_95 = arith.constant 0 : index
    %c0_96 = arith.constant 0 : index
    %365 = vector.load %arg0[%c7, %c0_95, %c0_96] : memref<8x4x96xf32, #tpu.memory_space<vmem>>, vector<1x4x96xf32>
    %366 = vector.shape_cast %365 : vector<1x4x96xf32> to vector<4x96xf32>
    %cst_97 = arith.constant dense<0.000000e+00> : vector<4x96xf32>
    %367 = tpu.matmul %339, %1, %cst_97 {dimension_numbers = #tpu.dot_dimension_numbers<[1], [0], [0], [1], [0, 0, 1, 1], [], []>} : vector<4x32xf32>, vector<32x96xf32>, vector<4x96xf32> -> vector<4x96xf32>
    %368 = vector.extract_strided_slice %366 {offsets = [0, 0], sizes = [4, 64], strides = [1, 1]} : vector<4x96xf32> to vector<4x64xf32>
    %369 = vector.extract_strided_slice %367 {offsets = [0, 0], sizes = [4, 64], strides = [1, 1]} : vector<4x96xf32> to vector<4x64xf32>
    %370 = arith.addf %368, %369 : vector<4x64xf32>
    %371 = arith.negf %370 : vector<4x64xf32>
    %372 = math.exp %371 : vector<4x64xf32>
    %cst_98 = arith.constant 1.000000e+00 : f32
    %373 = vector.broadcast %cst_98 : f32 to vector<4x64xf32>
    %374 = arith.addf %373, %372 : vector<4x64xf32>
    %375 = arith.divf %373, %374 : vector<4x64xf32>
    %376 = vector.extract_strided_slice %375 {offsets = [0, 0], sizes = [4, 32], strides = [1, 1]} : vector<4x64xf32> to vector<4x32xf32>
    %377 = vector.extract_strided_slice %375 {offsets = [0, 32], sizes = [4, 32], strides = [1, 1]} : vector<4x64xf32> to vector<4x32xf32>
    %378 = vector.extract_strided_slice %366 {offsets = [0, 64], sizes = [4, 32], strides = [1, 1]} : vector<4x96xf32> to vector<4x32xf32>
    %379 = vector.extract_strided_slice %367 {offsets = [0, 64], sizes = [4, 32], strides = [1, 1]} : vector<4x96xf32> to vector<4x32xf32>
    %380 = arith.addf %379, %13 : vector<4x32xf32>
    %381 = arith.mulf %376, %380 : vector<4x32xf32>
    %382 = arith.addf %378, %381 : vector<4x32xf32>
    %383 = math.tanh %382 : vector<4x32xf32>
    %cst_99 = arith.constant 1.000000e+00 : f32
    %384 = vector.broadcast %cst_99 : f32 to vector<4x32xf32>
    %385 = arith.subf %384, %377 : vector<4x32xf32>
    %386 = arith.mulf %385, %383 : vector<4x32xf32>
    %387 = arith.mulf %377, %339 : vector<4x32xf32>
    %388 = arith.addf %386, %387 : vector<4x32xf32>
    %cst_100 = arith.constant dense<0.000000e+00> : vector<4x96xf32>
    %389 = tpu.matmul %388, %5, %cst_100 {dimension_numbers = #tpu.dot_dimension_numbers<[1], [0], [0], [1], [0, 0, 1, 1], [], []>} : vector<4x32xf32>, vector<32x96xf32>, vector<4x96xf32> -> vector<4x96xf32>
    %390 = arith.addf %389, %9 : vector<4x96xf32>
    %cst_101 = arith.constant dense<0.000000e+00> : vector<4x96xf32>
    %391 = tpu.matmul %363, %3, %cst_101 {dimension_numbers = #tpu.dot_dimension_numbers<[1], [0], [0], [1], [0, 0, 1, 1], [], []>} : vector<4x32xf32>, vector<32x96xf32>, vector<4x96xf32> -> vector<4x96xf32>
    %392 = vector.extract_strided_slice %390 {offsets = [0, 0], sizes = [4, 64], strides = [1, 1]} : vector<4x96xf32> to vector<4x64xf32>
    %393 = vector.extract_strided_slice %391 {offsets = [0, 0], sizes = [4, 64], strides = [1, 1]} : vector<4x96xf32> to vector<4x64xf32>
    %394 = arith.addf %392, %393 : vector<4x64xf32>
    %395 = arith.negf %394 : vector<4x64xf32>
    %396 = math.exp %395 : vector<4x64xf32>
    %cst_102 = arith.constant 1.000000e+00 : f32
    %397 = vector.broadcast %cst_102 : f32 to vector<4x64xf32>
    %398 = arith.addf %397, %396 : vector<4x64xf32>
    %399 = arith.divf %397, %398 : vector<4x64xf32>
    %400 = vector.extract_strided_slice %399 {offsets = [0, 0], sizes = [4, 32], strides = [1, 1]} : vector<4x64xf32> to vector<4x32xf32>
    %401 = vector.extract_strided_slice %399 {offsets = [0, 32], sizes = [4, 32], strides = [1, 1]} : vector<4x64xf32> to vector<4x32xf32>
    %402 = vector.extract_strided_slice %390 {offsets = [0, 64], sizes = [4, 32], strides = [1, 1]} : vector<4x96xf32> to vector<4x32xf32>
    %403 = vector.extract_strided_slice %391 {offsets = [0, 64], sizes = [4, 32], strides = [1, 1]} : vector<4x96xf32> to vector<4x32xf32>
    %404 = arith.addf %403, %17 : vector<4x32xf32>
    %405 = arith.mulf %400, %404 : vector<4x32xf32>
    %406 = arith.addf %402, %405 : vector<4x32xf32>
    %407 = math.tanh %406 : vector<4x32xf32>
    %cst_103 = arith.constant 1.000000e+00 : f32
    %408 = vector.broadcast %cst_103 : f32 to vector<4x32xf32>
    %409 = arith.subf %408, %401 : vector<4x32xf32>
    %410 = arith.mulf %409, %407 : vector<4x32xf32>
    %411 = arith.mulf %401, %363 : vector<4x32xf32>
    %412 = arith.addf %410, %411 : vector<4x32xf32>
    %c28 = arith.constant 28 : index
    %c0_104 = arith.constant 0 : index
    %413 = vector.load %arg9[%c28, %c0_104] : memref<32x32xf32, #tpu.memory_space<vmem>>, vector<4x32xf32>
    tpu.vector_store %arg9[%c28, %c0_104], %412 {strides = array<i32>} : memref<32x32xf32, #tpu.memory_space<vmem>>, vector<4x32xf32>,
    %c0_105 = arith.constant 0 : index
    %c0_106 = arith.constant 0 : index
    %414 = vector.load %arg9[%c0_105, %c0_106] : memref<32x32xf32, #tpu.memory_space<vmem>>, vector<32x32xf32>
    %c0_107 = arith.constant 0 : index
    %c0_108 = arith.constant 0 : index
    %415 = vector.load %arg6[%c0_107, %c0_108] : memref<32x16xf32, #tpu.memory_space<vmem>>, vector<32x16xf32>
    %cst_109 = arith.constant dense<0.000000e+00> : vector<32x16xf32>
    %416 = tpu.matmul %414, %415, %cst_109 {dimension_numbers = #tpu.dot_dimension_numbers<[1], [0], [0], [1], [0, 0, 1, 1], [], []>} : vector<32x32xf32>, vector<32x16xf32>, vector<32x16xf32> -> vector<32x16xf32>
    %c0_110 = arith.constant 0 : index
    %c0_111 = arith.constant 0 : index
    %417 = vector.load %arg7[%c0_110, %c0_111] : memref<1x16xf32, #tpu.memory_space<vmem>>, vector<1x16xf32>
    %418 = vector.broadcast %417 : vector<1x16xf32> to vector<32x16xf32>
    %419 = arith.addf %416, %418 : vector<32x16xf32>
    %c0_112 = arith.constant 0 : index
    %c0_113 = arith.constant 0 : index
    %420 = vector.load %arg8[%c0_112, %c0_113] : memref<32x16xf32, #tpu.memory_space<vmem>>, vector<32x16xf32>
    tpu.vector_store %arg8[%c0_112, %c0_113], %419 {strides = array<i32>} : memref<32x16xf32, #tpu.memory_space<vmem>>, vector<32x16xf32>,
    return
  }
}

</mosaic_0001>

<llo_original>
// kernel: tpu_custom_call.1
$region0: #{tpu_custom_call.1}
  #allocation0 [shape = 'u32[]', space=smem, size = 0x4, offset = 0x4, fixed_abs, tag = 'smem constant byte address 0x4 - core index']
  #allocation1 [shape = 'u32[144,128]{1,0:T(1,128)}', space=vmem, size = 0x12000, scoped, tag = 'internal scratch']
  #allocation2 [shape = 'f32[32,32]{1,0:T(8,128)}', space=vmem, size = 0x4000, scoped, tag = 'scratch operand']
  %s0 = inlined_call_operand.vmem [shape: f32[8,4,96], index: 0, kind: input, shape index: {}]
  %s1 = inlined_call_operand.vmem [shape: f32[2,4,32], index: 1, kind: input, shape index: {}]
  %s2 = inlined_call_operand.hbm [shape: f32[1,32,96], index: 2, kind: input, shape index: {}]
  %s3 = inlined_call_operand.hbm [shape: f32[2,32,96], index: 3, kind: input, shape index: {}]
  %s4 = inlined_call_operand.vmem [shape: f32[1,1,96], index: 4, kind: input, shape index: {}]
  %s5 = inlined_call_operand.vmem [shape: f32[2,1,32], index: 5, kind: input, shape index: {}]
  %s6 = inlined_call_operand.vmem [shape: f32[32,16], index: 6, kind: input, shape index: {}]
  %s7 = inlined_call_operand.vmem [shape: f32[1,16], index: 7, kind: input, shape index: {}]
  %s8 = inlined_call_operand.vmem [shape: f32[32,16], index: 8, kind: output, shape index: {}]
  %s9 = sld [smem:[#allocation0]]
  $region50: #{tpu_custom_call.1} parent=0
    _
  %s11 = ssub.s32 1, %s9
  %s12 = scalar_select 0, %s11, %s9
  $region1: #{tpu_custom_call.1} parent=0
    #allocation3 [shape = 'u8[16384]{0}', space=vmem, size = 0x4000, scoped, tag = 'input window, operand 2, single buffered']
    #allocation4 [shape = 's32[1]{0}', space=sflag, size = 0x4, scoped, tag = 'scoped memory for tpu_custom_call.1']
    #allocation5 [shape = 'u8[32768]{0}', space=vmem, size = 0x8000, scoped, tag = 'input window, operand 3, single buffered']
    #allocation6 [shape = 's32[1]{0}', space=sflag, size = 0x4, scoped, tag = 'scoped memory for tpu_custom_call.1']
    %13 = vsyncpa [#allocation4], 0
    %14 = vsyncpa [#allocation6], 0
    // Predicated region
    $region2: #{tpu_custom_call.1} parent=1 // pred_check
      _
    $region3: #{tpu_custom_call.1} parent=1 // pred_check_branch
      %16 = sbr.rel (0) target = $region5
    $region4: #{tpu_custom_call.1} parent=1 // pred_region
      _
    $region5: #{tpu_custom_call.1} parent=1 // pred_fallthru
      _
    // Predicated region
    $region6: #{tpu_custom_call.1} parent=1 // pred_check
      _
    $region7: #{tpu_custom_call.1} parent=1 // pred_check_branch
      %18 = sbr.rel (0) target = $region9
    $region8: #{tpu_custom_call.1} parent=1 // pred_region
      _
    $region9: #{tpu_custom_call.1} parent=1 // pred_fallthru
      _
    // Predicated region
    $region10: #{tpu_custom_call.1} parent=1 // pred_check
      _
    $region11: #{tpu_custom_call.1} parent=1 // pred_check_branch
      %20 = sbr.rel (0) target = $region13
    $region12: #{tpu_custom_call.1} parent=1 // pred_region
      %s22 = ssub.s32 512, 512
      %23 = vsyncadd [#allocation4], %s22
      %s24 = sshll.u32 [#allocation3], 4
      %s25 = int_to_ptr.vmem [resolvable:$true] %s24
      %30 = dma.hbm_to_vmem [thread:$0]  %s2, 512, %s25, [#allocation4], 128, 128, 8
    $region13: #{tpu_custom_call.1} parent=1 // pred_fallthru
      _
    // Predicated region
    $region14: #{tpu_custom_call.1} parent=1 // pred_check
      _
    $region15: #{tpu_custom_call.1} parent=1 // pred_check_branch
      %32 = sbr.rel (0) target = $region17
    $region16: #{tpu_custom_call.1} parent=1 // pred_region
      %s34 = ssub.s32 1024, 1024
      %35 = vsyncadd [#allocation6], %s34
      %s36 = sshll.u32 [#allocation5], 4
      %s37 = int_to_ptr.vmem [resolvable:$true] %s36
      %42 = dma.hbm_to_vmem [thread:$0]  %s3, 1024, %s37, [#allocation6], 128, 128, 8
    $region17: #{tpu_custom_call.1} parent=1 // pred_fallthru
      _
    // Predicated region
    $region18: #{tpu_custom_call.1} parent=1 // pred_check
      _
    $region19: #{tpu_custom_call.1} parent=1 // pred_check_branch
      %44 = sbr.rel (0) target = $region21
    $region20: #{tpu_custom_call.1} parent=1 // pred_region
      _
    $region21: #{tpu_custom_call.1} parent=1 // pred_fallthru
      _
    // Predicated region
    $region22: #{tpu_custom_call.1} parent=1 // pred_check
      _
    $region23: #{tpu_custom_call.1} parent=1 // pred_check_branch
      %46 = sbr.rel (0) target = $region25
    $region24: #{tpu_custom_call.1} parent=1 // pred_region
      _
    $region25: #{tpu_custom_call.1} parent=1 // pred_fallthru
      _
    // Predicated region
    $region26: #{tpu_custom_call.1} parent=1 // pred_check
      _
    $region27: #{tpu_custom_call.1} parent=1 // pred_check_branch
      %48 = sbr.rel (0) target = $region29
    $region28: #{tpu_custom_call.1} parent=1 // pred_region
      _
    $region29: #{tpu_custom_call.1} parent=1 // pred_fallthru
      _
    // Predicated region
    $region30: #{tpu_custom_call.1} parent=1 // pred_check
      _
    $region31: #{tpu_custom_call.1} parent=1 // pred_check_branch
      %50 = sbr.rel (0) target = $region33
    $region32: #{tpu_custom_call.1} parent=1 // pred_region
      _
    $region33: #{tpu_custom_call.1} parent=1 // pred_fallthru
      _
    // Predicated region
    $region34: #{tpu_custom_call.1} parent=1 // pred_check
      _
    $region35: #{tpu_custom_call.1} parent=1 // pred_check_branch
      %52 = sbr.rel (0) target = $region37
    $region36: #{tpu_custom_call.1} parent=1 // pred_region
      %53 = dma.done [#allocation4], 512
    $region37: #{tpu_custom_call.1} parent=1 // pred_fallthru
      _
    // Predicated region
    $region38: #{tpu_custom_call.1} parent=1 // pred_check
      _
    $region39: #{tpu_custom_call.1} parent=1 // pred_check_branch
      %55 = sbr.rel (0) target = $region41
    $region40: #{tpu_custom_call.1} parent=1 // pred_region
      %56 = dma.done [#allocation6], 1024
    $region41: #{tpu_custom_call.1} parent=1 // pred_fallthru
      _
    %v57 = vld [vmem:[#allocation5] sm:$0xff]
    %v58 = vld [vmem:[#allocation5 + $0x8] sm:$0xff]
    %v59 = vld [vmem:[#allocation5 + $0x10] sm:$0xff]
    %v60 = vld [vmem:[#allocation5 + $0x18] sm:$0xff]
    %s61 = scalar_lea.vmem [#allocation5], 32
    %v62 = vld [vmem:[%s61] sm:$0xff]
    %v63 = vld [vmem:[%s61 + $0x8] sm:$0xff]
    %v64 = vld [vmem:[%s61 + $0x10] sm:$0xff]
    %v65 = vld [vmem:[%s61 + $0x18] sm:$0xff]
    %v66 = vld [vmem:[#allocation3] sm:$0xff]
    %v67 = vld [vmem:[#allocation3 + $0x8] sm:$0xff]
    %v68 = vld [vmem:[#allocation3 + $0x10] sm:$0xff]
    %v69 = vld [vmem:[#allocation3 + $0x18] sm:$0xff]
    %v70 = vld [vmem:[%s4] sm:$0x1]
    %v72 = vlaneseq
    %v73 = vshrl.u32 %v72, 7
    %v74 = vsub.s32 0, %v73
    %v75 = vrot.slane %v70, %v74
    %v77 = vld [vmem:[%s5] sm:$0x1]
    %v79 = vlaneseq
    %v80 = vshrl.u32 %v79, 7
    %v81 = vsub.s32 0, %v80
    %v82 = vrot.slane %v77, %v81
    %s83 = scalar_lea.vmem %s5, 1
    %v84 = vld [vmem:[%s83] sm:$0x1]
    %v86 = vlaneseq
    %v87 = vshrl.u32 %v86, 7
    %v88 = vsub.s32 0, %v87
    %v89 = vrot.slane %v84, %v88
    %v90 = vld [vmem:[%s1] sm:$0xf]
    %s91 = scalar_lea.vmem %s1, 4
    %v92 = vld [vmem:[%s91] sm:$0xf]
    %v93 = vld [vmem:[%s0] sm:$0xf]
    %vm94 = vcmask 261120
    %v96 = vsel %vm94, %v90, 0
    %98 = vmatprep.subr.mxu0 0.0
    %99 = vmatpush1.msra.mxu0 %v57
    %100 = vmatprep.subr.mxu0 0.0
    %101 = vmatpush1.msra.mxu0 %v58
    %102 = vmatprep.subr.mxu0 0.0
    %103 = vmatpush1.msra.mxu0 %v59
    %104 = vmatprep.subr.mxu0 0.0
    %105 = vmatpush1.msra.mxu0 %v60
    %106 = vmatprep.subr.mxu0 0.0
    %107 = vmatpush1.msra.mxu0 0.0
    %108 = vmatprep.subr.mxu0 0.0
    %109 = vmatpush1.msra.mxu0 0.0
    %110 = vmatprep.subr.mxu0 0.0
    %111 = vmatpush1.msra.mxu0 0.0
    %112 = vmatprep.subr.mxu0 0.0
    %113 = vmatpush1.msra.mxu0 0.0
    %114 = vmatprep.subr.mxu0 0.0
    %115 = vmatpush1.msra.mxu0 0.0
    %116 = vmatprep.subr.mxu0 0.0
    %117 = vmatpush1.msra.mxu0 0.0
    %118 = vmatprep.subr.mxu0 0.0
    %119 = vmatpush1.msra.mxu0 0.0
    %120 = vmatprep.subr.mxu0 0.0
    %121 = vmatpush1.msra.mxu0 0.0
    %122 = vmatprep.subr.mxu0 0.0
    %123 = vmatpush1.msra.mxu0 0.0
    %124 = vmatprep.subr.mxu0 0.0
    %125 = vmatpush1.msra.mxu0 0.0
    %126 = vmatprep.subr.mxu0 0.0
    %127 = vmatpush1.msra.mxu0 0.0
    %128 = vmatprep.subr.mxu0 0.0
    %129 = vmatpush1.msra.mxu0 0.0
    %130 = vmatprep.subr.mxu0 0.0
    %131 = vmatpush1.msra.mxu0 0.0
    %132 = vmatprep.subr.mxu0 0.0
    %133 = vmatpush1.msra.mxu0 0.0
    %134 = vmatprep.subr.mxu0 0.0
    %135 = vmatpush1.msra.mxu0 0.0
    %136 = vmatprep.subr.mxu0 0.0
    %137 = vmatpush1.msra.mxu0 0.0
    %138 = vmatprep.subr.mxu0 0.0
    %139 = vmatpush1.msra.mxu0 0.0
    %140 = vmatprep.subr.mxu0 0.0
    %141 = vmatpush1.msra.mxu0 0.0
    %142 = vmatprep.subr.mxu0 0.0
    %143 = vmatpush1.msra.mxu0 0.0
    %144 = vmatprep.subr.mxu0 0.0
    %145 = vmatpush1.msra.mxu0 0.0
    %146 = vmatprep.subr.mxu0 0.0
    %147 = vmatpush1.msra.mxu0 0.0
    %148 = vmatprep.subr.mxu0 0.0
    %149 = vmatpush1.msra.mxu0 0.0
    %150 = vmatprep.subr.mxu0 0.0
    %151 = vmatpush1.msra.mxu0 0.0
    %152 = vmatprep.subr.mxu0 0.0
    %153 = vmatpush1.msra.mxu0 0.0
    %154 = vmatprep.subr.mxu0 0.0
    %155 = vmatpush1.msra.mxu0 0.0
    %156 = vmatprep.subr.mxu0 0.0
    %157 = vmatpush1.msra.mxu0 0.0
    %158 = vmatprep.subr.mxu0 0.0
    %159 = vmatpush1.msra.mxu0 0.0
    %160 = vmatprep.subr.mxu0 0.0
    %161 = vmatpush1.msra.mxu0 0.0
    %162 = vmatprep.mubr.f32.mxu0 0.0
    %163 = vmatmul.mubr.f32.gmra.mrb[0].mxu0 %v96
    %v164 = vpop.f32.mrb[0].mxu0
    %v165 = vadd.f32 0.0, %v164
    %v166 = vpop.f32.mrb[0].mxu0
    %167 = vdwg.mxu0
    %v168 = vadd.f32 %v93, %v165
    %v169 = vxor.u32 %v168, 2147483648
    %v170 = vmul.f32 %v169, 1.442695
    %v171 = vpow.pop %v170
    %v172 = vadd.f32 %v171, 1.0
    %v173 = vrcp.pop %v172
    %v174 = vmul.f32 1.0, %v173
    %175 = vrot.lane.b32.xlu0 %v82, 64
    %v176 = vpop.permute.xlu0 %175
    %v178 = vadd.f32 %v165, %v176
    %180 = vrot.lane.b32.xlu0 %v178, 64
    %v181 = vpop.permute.xlu0 %180
    %v183 = vmul.f32 %v174, %v181
    %185 = vrot.lane.b32.xlu0 %v183, 64
    %v186 = vpop.permute.xlu0 %185
    %v188 = vadd.f32 %v93, %v186
    %v189 = vtanh.pop %v188
    %v190 = vsub.f32 1.0, %v174
    %192 = vrot.lane.b32.xlu0 %v189, 96
    %v193 = vpop.permute.xlu0 %192
    %v195 = vmul.f32 %v190, %v193
    %196 = vrot.lane.b32.xlu0 %v90, 32
    %v197 = vpop.permute.xlu0 %196
    %v199 = vmul.f32 %v174, %v197
    %v200 = vadd.f32 %v195, %v199
    %202 = vrot.lane.b32.xlu0 %v200, 96
    %v203 = vpop.permute.xlu0 %202
    %v204 = vsel %vm94, %v203, 0
    %206 = vmatprep.subr.mxu0 0.0
    %207 = vmatpush1.msra.mxu0 %v66
    %208 = vmatprep.subr.mxu0 0.0
    %209 = vmatpush1.msra.mxu0 %v67
    %210 = vmatprep.subr.mxu0 0.0
    %211 = vmatpush1.msra.mxu0 %v68
    %212 = vmatprep.subr.mxu0 0.0
    %213 = vmatpush1.msra.mxu0 %v69
    %214 = vmatprep.subr.mxu0 0.0
    %215 = vmatpush1.msra.mxu0 0.0
    %216 = vmatprep.subr.mxu0 0.0
    %217 = vmatpush1.msra.mxu0 0.0
    %218 = vmatprep.subr.mxu0 0.0
    %219 = vmatpush1.msra.mxu0 0.0
    %220 = vmatprep.subr.mxu0 0.0
    %221 = vmatpush1.msra.mxu0 0.0
    %222 = vmatprep.subr.mxu0 0.0
    %223 = vmatpush1.msra.mxu0 0.0
    %224 = vmatprep.subr.mxu0 0.0
    %225 = vmatpush1.msra.mxu0 0.0
    %226 = vmatprep.subr.mxu0 0.0
    %227 = vmatpush1.msra.mxu0 0.0
    %228 = vmatprep.subr.mxu0 0.0
    %229 = vmatpush1.msra.mxu0 0.0
    %230 = vmatprep.subr.mxu0 0.0
    %231 = vmatpush1.msra.mxu0 0.0
    %232 = vmatprep.subr.mxu0 0.0
    %233 = vmatpush1.msra.mxu0 0.0
    %234 = vmatprep.subr.mxu0 0.0
    %235 = vmatpush1.msra.mxu0 0.0
    %236 = vmatprep.subr.mxu0 0.0
    %237 = vmatpush1.msra.mxu0 0.0
    %238 = vmatprep.subr.mxu0 0.0
    %239 = vmatpush1.msra.mxu0 0.0
    %240 = vmatprep.subr.mxu0 0.0
    %241 = vmatpush1.msra.mxu0 0.0
    %242 = vmatprep.subr.mxu0 0.0
    %243 = vmatpush1.msra.mxu0 0.0
    %244 = vmatprep.subr.mxu0 0.0
    %245 = vmatpush1.msra.mxu0 0.0
    %246 = vmatprep.subr.mxu0 0.0
    %247 = vmatpush1.msra.mxu0 0.0
    %248 = vmatprep.subr.mxu0 0.0
    %249 = vmatpush1.msra.mxu0 0.0
    %250 = vmatprep.subr.mxu0 0.0
    %251 = vmatpush1.msra.mxu0 0.0
    %252 = vmatprep.subr.mxu0 0.0
    %253 = vmatpush1.msra.mxu0 0.0
    %254 = vmatprep.subr.mxu0 0.0
    %255 = vmatpush1.msra.mxu0 0.0
    %256 = vmatprep.subr.mxu0 0.0
    %257 = vmatpush1.msra.mxu0 0.0
    %258 = vmatprep.subr.mxu0 0.0
    %259 = vmatpush1.msra.mxu0 0.0
    %260 = vmatprep.subr.mxu0 0.0
    %261 = vmatpush1.msra.mxu0 0.0
    %262 = vmatprep.subr.mxu0 0.0
    %263 = vmatpush1.msra.mxu0 0.0
    %264 = vmatprep.subr.mxu0 0.0
    %265 = vmatpush1.msra.mxu0 0.0
    %266 = vmatprep.subr.mxu0 0.0
    %267 = vmatpush1.msra.mxu0 0.0
    %268 = vmatprep.subr.mxu0 0.0
    %269 = vmatpush1.msra.mxu0 0.0
    %270 = vmatprep.mubr.f32.mxu0 0.0
    %271 = vmatmul.mubr.f32.gmra.mrb[0].mxu0 %v204
    %v272 = vpop.f32.mrb[0].mxu0
    %v273 = vadd.f32 %v75, %v272
    %v274 = vpop.f32.mrb[0].mxu0
    %275 = vdwg.mxu0
    %v277 = vsel %vm94, %v92, 0
    %279 = vmatprep.subr.mxu0 0.0
    %280 = vmatpush1.msra.mxu0 %v62
    %281 = vmatprep.subr.mxu0 0.0
    %282 = vmatpush1.msra.mxu0 %v63
    %283 = vmatprep.subr.mxu0 0.0
    %284 = vmatpush1.msra.mxu0 %v64
    %285 = vmatprep.subr.mxu0 0.0
    %286 = vmatpush1.msra.mxu0 %v65
    %287 = vmatprep.subr.mxu0 0.0
    %288 = vmatpush1.msra.mxu0 0.0
    %289 = vmatprep.subr.mxu0 0.0
    %290 = vmatpush1.msra.mxu0 0.0
    %291 = vmatprep.subr.mxu0 0.0
    %292 = vmatpush1.msra.mxu0 0.0
    %293 = vmatprep.subr.mxu0 0.0
    %294 = vmatpush1.msra.mxu0 0.0
    %295 = vmatprep.subr.mxu0 0.0
    %296 = vmatpush1.msra.mxu0 0.0
    %297 = vmatprep.subr.mxu0 0.0
    %298 = vmatpush1.msra.mxu0 0.0
    %299 = vmatprep.subr.mxu0 0.0
    %300 = vmatpush1.msra.mxu0 0.0
    %301 = vmatprep.subr.mxu0 0.0
    %302 = vmatpush1.msra.mxu0 0.0
    %303 = vmatprep.subr.mxu0 0.0
    %304 = vmatpush1.msra.mxu0 0.0
    %305 = vmatprep.subr.mxu0 0.0
    %306 = vmatpush1.msra.mxu0 0.0
    %307 = vmatprep.subr.mxu0 0.0
    %308 = vmatpush1.msra.mxu0 0.0
    %309 = vmatprep.subr.mxu0 0.0
    %310 = vmatpush1.msra.mxu0 0.0
    %311 = vmatprep.subr.mxu0 0.0
    %312 = vmatpush1.msra.mxu0 0.0
    %313 = vmatprep.subr.mxu0 0.0
    %314 = vmatpush1.msra.mxu0 0.0
    %315 = vmatprep.subr.mxu0 0.0
    %316 = vmatpush1.msra.mxu0 0.0
    %317 = vmatprep.subr.mxu0 0.0
    %318 = vmatpush1.msra.mxu0 0.0
    %319 = vmatprep.subr.mxu0 0.0
    %320 = vmatpush1.msra.mxu0 0.0
    %321 = vmatprep.subr.mxu0 0.0
    %322 = vmatpush1.msra.mxu0 0.0
    %323 = vmatprep.subr.mxu0 0.0
    %324 = vmatpush1.msra.mxu0 0.0
    %325 = vmatprep.subr.mxu0 0.0
    %326 = vmatpush1.msra.mxu0 0.0
    %327 = vmatprep.subr.mxu0 0.0
    %328 = vmatpush1.msra.mxu0 0.0
    %329 = vmatprep.subr.mxu0 0.0
    %330 = vmatpush1.msra.mxu0 0.0
    %331 = vmatprep.subr.mxu0 0.0
    %332 = vmatpush1.msra.mxu0 0.0
    %333 = vmatprep.subr.mxu0 0.0
    %334 = vmatpush1.msra.mxu0 0.0
    %335 = vmatprep.subr.mxu0 0.0
    %336 = vmatpush1.msra.mxu0 0.0
    %337 = vmatprep.subr.mxu0 0.0
    %338 = vmatpush1.msra.mxu0 0.0
    %339 = vmatprep.subr.mxu0 0.0
    %340 = vmatpush1.msra.mxu0 0.0
    %341 = vmatprep.subr.mxu0 0.0
    %342 = vmatpush1.msra.mxu0 0.0
    %343 = vmatprep.mubr.f32.mxu0 0.0
    %344 = vmatmul.mubr.f32.gmra.mrb[0].mxu0 %v277
    %v345 = vpop.f32.mrb[0].mxu0
    %v346 = vadd.f32 0.0, %v345
    %v347 = vpop.f32.mrb[0].mxu0
    %348 = vdwg.mxu0
    %v349 = vadd.f32 %v273, %v346
    %v350 = vxor.u32 %v349, 2147483648
    %v351 = vmul.f32 %v350, 1.442695
    %v352 = vpow.pop %v351
    %v353 = vadd.f32 %v352, 1.0
    %v354 = vrcp.pop %v353
    %v355 = vmul.f32 1.0, %v354
    %356 = vrot.lane.b32.xlu0 %v89, 64
    %v357 = vpop.permute.xlu0 %356
    %v359 = vadd.f32 %v346, %v357
    %361 = vrot.lane.b32.xlu0 %v359, 64
    %v362 = vpop.permute.xlu0 %361
    %v364 = vmul.f32 %v355, %v362
    %366 = vrot.lane.b32.xlu0 %v364, 64
    %v367 = vpop.permute.xlu0 %366
    %v369 = vadd.f32 %v273, %v367
    %v370 = vtanh.pop %v369
    %v371 = vsub.f32 1.0, %v355
    %373 = vrot.lane.b32.xlu0 %v370, 96
    %v374 = vpop.permute.xlu0 %373
    %v376 = vmul.f32 %v371, %v374
    %377 = vrot.lane.b32.xlu0 %v92, 32
    %v378 = vpop.permute.xlu0 %377
    %v380 = vmul.f32 %v355, %v378
    %v381 = vadd.f32 %v376, %v380
    %383 = vrot.lane.b32.xlu0 %v381, 96
    %v384 = vpop.permute.xlu0 %383
    %vm386 = vcmask 257024
    %387 = vst.msk [vmem:[#allocation2] sm:$0xf] %vm386, %v384
    %s388 = scalar_lea.vmem %s0, 4
    %v389 = vld [vmem:[%s388] sm:$0xf]
    %390 = vmatprep.subr.mxu0 0.0
    %391 = vmatpush1.msra.mxu0 %v57
    %392 = vmatprep.subr.mxu0 0.0
    %393 = vmatpush1.msra.mxu0 %v58
    %394 = vmatprep.subr.mxu0 0.0
    %395 = vmatpush1.msra.mxu0 %v59
    %396 = vmatprep.subr.mxu0 0.0
    %397 = vmatpush1.msra.mxu0 %v60
    %398 = vmatprep.subr.mxu0 0.0
    %399 = vmatpush1.msra.mxu0 0.0
    %400 = vmatprep.subr.mxu0 0.0
    %401 = vmatpush1.msra.mxu0 0.0
    %402 = vmatprep.subr.mxu0 0.0
    %403 = vmatpush1.msra.mxu0 0.0
    %404 = vmatprep.subr.mxu0 0.0
    %405 = vmatpush1.msra.mxu0 0.0
    %406 = vmatprep.subr.mxu0 0.0
    %407 = vmatpush1.msra.mxu0 0.0
    %408 = vmatprep.subr.mxu0 0.0
    %409 = vmatpush1.msra.mxu0 0.0
    %410 = vmatprep.subr.mxu0 0.0
    %411 = vmatpush1.msra.mxu0 0.0
    %412 = vmatprep.subr.mxu0 0.0
    %413 = vmatpush1.msra.mxu0 0.0
    %414 = vmatprep.subr.mxu0 0.0
    %415 = vmatpush1.msra.mxu0 0.0
    %416 = vmatprep.subr.mxu0 0.0
    %417 = vmatpush1.msra.mxu0 0.0
    %418 = vmatprep.subr.mxu0 0.0
    %419 = vmatpush1.msra.mxu0 0.0
    %420 = vmatprep.subr.mxu0 0.0
    %421 = vmatpush1.msra.mxu0 0.0
    %422 = vmatprep.subr.mxu0 0.0
    %423 = vmatpush1.msra.mxu0 0.0
    %424 = vmatprep.subr.mxu0 0.0
    %425 = vmatpush1.msra.mxu0 0.0
    %426 = vmatprep.subr.mxu0 0.0
    %427 = vmatpush1.msra.mxu0 0.0
    %428 = vmatprep.subr.mxu0 0.0
    %429 = vmatpush1.msra.mxu0 0.0
    %430 = vmatprep.subr.mxu0 0.0
    %431 = vmatpush1.msra.mxu0 0.0
    %432 = vmatprep.subr.mxu0 0.0
    %433 = vmatpush1.msra.mxu0 0.0
    %434 = vmatprep.subr.mxu0 0.0
    %435 = vmatpush1.msra.mxu0 0.0
    %436 = vmatprep.subr.mxu0 0.0
    %437 = vmatpush1.msra.mxu0 0.0
    %438 = vmatprep.subr.mxu0 0.0
    %439 = vmatpush1.msra.mxu0 0.0
    %440 = vmatprep.subr.mxu0 0.0
    %441 = vmatpush1.msra.mxu0 0.0
    %442 = vmatprep.subr.mxu0 0.0
    %443 = vmatpush1.msra.mxu0 0.0
    %444 = vmatprep.subr.mxu0 0.0
    %445 = vmatpush1.msra.mxu0 0.0
    %446 = vmatprep.subr.mxu0 0.0
    %447 = vmatpush1.msra.mxu0 0.0
    %448 = vmatprep.subr.mxu0 0.0
    %449 = vmatpush1.msra.mxu0 0.0
    %450 = vmatprep.subr.mxu0 0.0
    %451 = vmatpush1.msra.mxu0 0.0
    %452 = vmatprep.subr.mxu0 0.0
    %453 = vmatpush1.msra.mxu0 0.0
    %454 = vmatprep.mubr.f32.mxu0 0.0
    %455 = vmatmul.mubr.f32.gmra.mrb[0].mxu0 %v204
    %v456 = vpop.f32.mrb[0].mxu0
    %v457 = vadd.f32 0.0, %v456
    %v458 = vpop.f32.mrb[0].mxu0
    %459 = vdwg.mxu0
    %v460 = vadd.f32 %v389, %v457
    %v461 = vxor.u32 %v460, 2147483648
    %v462 = vmul.f32 %v461, 1.442695
    %v463 = vpow.pop %v462
    %v464 = vadd.f32 %v463, 1.0
    %v465 = vrcp.pop %v464
    %v466 = vmul.f32 1.0, %v465
    %v467 = vadd.f32 %v457, %v176
    %469 = vrot.lane.b32.xlu0 %v467, 64
    %v470 = vpop.permute.xlu0 %469
    %v472 = vmul.f32 %v466, %v470
    %474 = vrot.lane.b32.xlu0 %v472, 64
    %v475 = vpop.permute.xlu0 %474
    %v477 = vadd.f32 %v389, %v475
    %v478 = vtanh.pop %v477
    %v479 = vsub.f32 1.0, %v466
    %481 = vrot.lane.b32.xlu0 %v478, 96
    %v482 = vpop.permute.xlu0 %481
    %v484 = vmul.f32 %v479, %v482
    %v485 = vmul.f32 %v466, %v200
    %v486 = vadd.f32 %v484, %v485
    %488 = vrot.lane.b32.xlu0 %v486, 96
    %v489 = vpop.permute.xlu0 %488
    %v490 = vsel %vm94, %v489, 0
    %492 = vmatprep.subr.mxu0 0.0
    %493 = vmatpush1.msra.mxu0 %v66
    %494 = vmatprep.subr.mxu0 0.0
    %495 = vmatpush1.msra.mxu0 %v67
    %496 = vmatprep.subr.mxu0 0.0
    %497 = vmatpush1.msra.mxu0 %v68
    %498 = vmatprep.subr.mxu0 0.0
    %499 = vmatpush1.msra.mxu0 %v69
    %500 = vmatprep.subr.mxu0 0.0
    %501 = vmatpush1.msra.mxu0 0.0
    %502 = vmatprep.subr.mxu0 0.0
    %503 = vmatpush1.msra.mxu0 0.0
    %504 = vmatprep.subr.mxu0 0.0
    %505 = vmatpush1.msra.mxu0 0.0
    %506 = vmatprep.subr.mxu0 0.0
    %507 = vmatpush1.msra.mxu0 0.0
    %508 = vmatprep.subr.mxu0 0.0
    %509 = vmatpush1.msra.mxu0 0.0
    %510 = vmatprep.subr.mxu0 0.0
    %511 = vmatpush1.msra.mxu0 0.0
    %512 = vmatprep.subr.mxu0 0.0
    %513 = vmatpush1.msra.mxu0 0.0
    %514 = vmatprep.subr.mxu0 0.0
    %515 = vmatpush1.msra.mxu0 0.0
    %516 = vmatprep.subr.mxu0 0.0
    %517 = vmatpush1.msra.mxu0 0.0
    %518 = vmatprep.subr.mxu0 0.0
    %519 = vmatpush1.msra.mxu0 0.0
    %520 = vmatprep.subr.mxu0 0.0
    %521 = vmatpush1.msra.mxu0 0.0
    %522 = vmatprep.subr.mxu0 0.0
    %523 = vmatpush1.msra.mxu0 0.0
    %524 = vmatprep.subr.mxu0 0.0
    %525 = vmatpush1.msra.mxu0 0.0
    %526 = vmatprep.subr.mxu0 0.0
    %527 = vmatpush1.msra.mxu0 0.0
    %528 = vmatprep.subr.mxu0 0.0
    %529 = vmatpush1.msra.mxu0 0.0
    %530 = vmatprep.subr.mxu0 0.0
    %531 = vmatpush1.msra.mxu0 0.0
    %532 = vmatprep.subr.mxu0 0.0
    %533 = vmatpush1.msra.mxu0 0.0
    %534 = vmatprep.subr.mxu0 0.0
    %535 = vmatpush1.msra.mxu0 0.0
    %536 = vmatprep.subr.mxu0 0.0
    %537 = vmatpush1.msra.mxu0 0.0
    %538 = vmatprep.subr.mxu0 0.0
    %539 = vmatpush1.msra.mxu0 0.0
    %540 = vmatprep.subr.mxu0 0.0
    %541 = vmatpush1.msra.mxu0 0.0
    %542 = vmatprep.subr.mxu0 0.0
    %543 = vmatpush1.msra.mxu0 0.0
    %544 = vmatprep.subr.mxu0 0.0
    %545 = vmatpush1.msra.mxu0 0.0
    %546 = vmatprep.subr.mxu0 0.0
    %547 = vmatpush1.msra.mxu0 0.0
    %548 = vmatprep.subr.mxu0 0.0
    %549 = vmatpush1.msra.mxu0 0.0
    %550 = vmatprep.subr.mxu0 0.0
    %551 = vmatpush1.msra.mxu0 0.0
    %552 = vmatprep.subr.mxu0 0.0
    %553 = vmatpush1.msra.mxu0 0.0
    %554 = vmatprep.subr.mxu0 0.0
    %555 = vmatpush1.msra.mxu0 0.0
    %556 = vmatprep.mubr.f32.mxu0 0.0
    %557 = vmatmul.mubr.f32.gmra.mrb[0].mxu0 %v490
    %v558 = vpop.f32.mrb[0].mxu0
    %v559 = vadd.f32 %v75, %v558
    %v560 = vpop.f32.mrb[0].mxu0
    %561 = vdwg.mxu0
    %v562 = vsel %vm94, %v384, 0
    %564 = vmatprep.subr.mxu0 0.0
    %565 = vmatpush1.msra.mxu0 %v62
    %566 = vmatprep.subr.mxu0 0.0
    %567 = vmatpush1.msra.mxu0 %v63
    %568 = vmatprep.subr.mxu0 0.0
    %569 = vmatpush1.msra.mxu0 %v64
    %570 = vmatprep.subr.mxu0 0.0
    %571 = vmatpush1.msra.mxu0 %v65
    %572 = vmatprep.subr.mxu0 0.0
    %573 = vmatpush1.msra.mxu0 0.0
    %574 = vmatprep.subr.mxu0 0.0
    %575 = vmatpush1.msra.mxu0 0.0
    %576 = vmatprep.subr.mxu0 0.0
    %577 = vmatpush1.msra.mxu0 0.0
    %578 = vmatprep.subr.mxu0 0.0
    %579 = vmatpush1.msra.mxu0 0.0
    %580 = vmatprep.subr.mxu0 0.0
    %581 = vmatpush1.msra.mxu0 0.0
    %582 = vmatprep.subr.mxu0 0.0
    %583 = vmatpush1.msra.mxu0 0.0
    %584 = vmatprep.subr.mxu0 0.0
    %585 = vmatpush1.msra.mxu0 0.0
    %586 = vmatprep.subr.mxu0 0.0
    %587 = vmatpush1.msra.mxu0 0.0
    %588 = vmatprep.subr.mxu0 0.0
    %589 = vmatpush1.msra.mxu0 0.0
    %590 = vmatprep.subr.mxu0 0.0
    %591 = vmatpush1.msra.mxu0 0.0
    %592 = vmatprep.subr.mxu0 0.0
    %593 = vmatpush1.msra.mxu0 0.0
    %594 = vmatprep.subr.mxu0 0.0
    %595 = vmatpush1.msra.mxu0 0.0
    %596 = vmatprep.subr.mxu0 0.0
    %597 = vmatpush1.msra.mxu0 0.0
    %598 = vmatprep.subr.mxu0 0.0
    %599 = vmatpush1.msra.mxu0 0.0
    %600 = vmatprep.subr.mxu0 0.0
    %601 = vmatpush1.msra.mxu0 0.0
    %602 = vmatprep.subr.mxu0 0.0
    %603 = vmatpush1.msra.mxu0 0.0
    %604 = vmatprep.subr.mxu0 0.0
    %605 = vmatpush1.msra.mxu0 0.0
    %606 = vmatprep.subr.mxu0 0.0
    %607 = vmatpush1.msra.mxu0 0.0
    %608 = vmatprep.subr.mxu0 0.0
    %609 = vmatpush1.msra.mxu0 0.0
    %610 = vmatprep.subr.mxu0 0.0
    %611 = vmatpush1.msra.mxu0 0.0
    %612 = vmatprep.subr.mxu0 0.0
    %613 = vmatpush1.msra.mxu0 0.0
    %614 = vmatprep.subr.mxu0 0.0
    %615 = vmatpush1.msra.mxu0 0.0
    %616 = vmatprep.subr.mxu0 0.0
    %617 = vmatpush1.msra.mxu0 0.0
    %618 = vmatprep.subr.mxu0 0.0
    %619 = vmatpush1.msra.mxu0 0.0
    %620 = vmatprep.subr.mxu0 0.0
    %621 = vmatpush1.msra.mxu0 0.0
    %622 = vmatprep.subr.mxu0 0.0
    %623 = vmatpush1.msra.mxu0 0.0
    %624 = vmatprep.subr.mxu0 0.0
    %625 = vmatpush1.msra.mxu0 0.0
    %626 = vmatprep.subr.mxu0 0.0
    %627 = vmatpush1.msra.mxu0 0.0
    %628 = vmatprep.mubr.f32.mxu0 0.0
    %629 = vmatmul.mubr.f32.gmra.mrb[0].mxu0 %v562
    %v630 = vpop.f32.mrb[0].mxu0
    %v631 = vadd.f32 0.0, %v630
    %v632 = vpop.f32.mrb[0].mxu0
    %633 = vdwg.mxu0
    %v634 = vadd.f32 %v559, %v631
    %v635 = vxor.u32 %v634, 2147483648
    %v636 = vmul.f32 %v635, 1.442695
    %v637 = vpow.pop %v636
    %v638 = vadd.f32 %v637, 1.0
    %v639 = vrcp.pop %v638
    %v640 = vmul.f32 1.0, %v639
    %v641 = vadd.f32 %v631, %v357
    %643 = vrot.lane.b32.xlu0 %v641, 64
    %v644 = vpop.permute.xlu0 %643
    %v646 = vmul.f32 %v640, %v644
    %648 = vrot.lane.b32.xlu0 %v646, 64
    %v649 = vpop.permute.xlu0 %648
    %v651 = vadd.f32 %v559, %v649
    %v652 = vtanh.pop %v651
    %v653 = vsub.f32 1.0, %v640
    %655 = vrot.lane.b32.xlu0 %v652, 96
    %v656 = vpop.permute.xlu0 %655
    %v658 = vmul.f32 %v653, %v656
    %v659 = vmul.f32 %v640, %v381
    %v660 = vadd.f32 %v658, %v659
    %662 = vrot.lane.b32.xlu0 %v660, 96
    %v663 = vpop.permute.xlu0 %662
    %665 = vst.msk [vmem:[#allocation2 + $0x4] sm:$0xf] %vm386, %v663
    %s666 = scalar_lea.vmem %s0, 8
    %v667 = vld [vmem:[%s666] sm:$0xf]
    %668 = vmatprep.subr.mxu0 0.0
    %669 = vmatpush1.msra.mxu0 %v57
    %670 = vmatprep.subr.mxu0 0.0
    %671 = vmatpush1.msra.mxu0 %v58
    %672 = vmatprep.subr.mxu0 0.0
    %673 = vmatpush1.msra.mxu0 %v59
    %674 = vmatprep.subr.mxu0 0.0
    %675 = vmatpush1.msra.mxu0 %v60
    %676 = vmatprep.subr.mxu0 0.0
    %677 = vmatpush1.msra.mxu0 0.0
    %678 = vmatprep.subr.mxu0 0.0
    %679 = vmatpush1.msra.mxu0 0.0
    %680 = vmatprep.subr.mxu0 0.0
    %681 = vmatpush1.msra.mxu0 0.0
    %682 = vmatprep.subr.mxu0 0.0
    %683 = vmatpush1.msra.mxu0 0.0
    %684 = vmatprep.subr.mxu0 0.0
    %685 = vmatpush1.msra.mxu0 0.0
    %686 = vmatprep.subr.mxu0 0.0
    %687 = vmatpush1.msra.mxu0 0.0
    %688 = vmatprep.subr.mxu0 0.0
    %689 = vmatpush1.msra.mxu0 0.0
    %690 = vmatprep.subr.mxu0 0.0
    %691 = vmatpush1.msra.mxu0 0.0
    %692 = vmatprep.subr.mxu0 0.0
    %693 = vmatpush1.msra.mxu0 0.0
    %694 = vmatprep.subr.mxu0 0.0
    %695 = vmatpush1.msra.mxu0 0.0
    %696 = vmatprep.subr.mxu0 0.0
    %697 = vmatpush1.msra.mxu0 0.0
    %698 = vmatprep.subr.mxu0 0.0
    %699 = vmatpush1.msra.mxu0 0.0
    %700 = vmatprep.subr.mxu0 0.0
    %701 = vmatpush1.msra.mxu0 0.0
    %702 = vmatprep.subr.mxu0 0.0
    %703 = vmatpush1.msra.mxu0 0.0
    %704 = vmatprep.subr.mxu0 0.0
    %705 = vmatpush1.msra.mxu0 0.0
    %706 = vmatprep.subr.mxu0 0.0
    %707 = vmatpush1.msra.mxu0 0.0
    %708 = vmatprep.subr.mxu0 0.0
    %709 = vmatpush1.msra.mxu0 0.0
    %710 = vmatprep.subr.mxu0 0.0
    %711 = vmatpush1.msra.mxu0 0.0
    %712 = vmatprep.subr.mxu0 0.0
    %713 = vmatpush1.msra.mxu0 0.0
    %714 = vmatprep.subr.mxu0 0.0
    %715 = vmatpush1.msra.mxu0 0.0
    %716 = vmatprep.subr.mxu0 0.0
    %717 = vmatpush1.msra.mxu0 0.0
    %718 = vmatprep.subr.mxu0 0.0
    %719 = vmatpush1.msra.mxu0 0.0
    %720 = vmatprep.subr.mxu0 0.0
    %721 = vmatpush1.msra.mxu0 0.0
    %722 = vmatprep.subr.mxu0 0.0
    %723 = vmatpush1.msra.mxu0 0.0
    %724 = vmatprep.subr.mxu0 0.0
    %725 = vmatpush1.msra.mxu0 0.0
    %726 = vmatprep.subr.mxu0 0.0
    %727 = vmatpush1.msra.mxu0 0.0
    %728 = vmatprep.subr.mxu0 0.0
    %729 = vmatpush1.msra.mxu0 0.0
    %730 = vmatprep.subr.mxu0 0.0
    %731 = vmatpush1.msra.mxu0 0.0
    %732 = vmatprep.mubr.f32.mxu0 0.0
    %733 = vmatmul.mubr.f32.gmra.mrb[0].mxu0 %v490
    %v734 = vpop.f32.mrb[0].mxu0
    %v735 = vadd.f32 0.0, %v734
    %v736 = vpop.f32.mrb[0].mxu0
    %737 = vdwg.mxu0
    %v738 = vadd.f32 %v667, %v735
    %v739 = vxor.u32 %v738, 2147483648
    %v740 = vmul.f32 %v739, 1.442695
    %v741 = vpow.pop %v740
    %v742 = vadd.f32 %v741, 1.0
    %v743 = vrcp.pop %v742
    %v744 = vmul.f32 1.0, %v743
    %v745 = vadd.f32 %v735, %v176
    %747 = vrot.lane.b32.xlu0 %v745, 64
    %v748 = vpop.permute.xlu0 %747
    %v750 = vmul.f32 %v744, %v748
    %752 = vrot.lane.b32.xlu0 %v750, 64
    %v753 = vpop.permute.xlu0 %752
    %v755 = vadd.f32 %v667, %v753
    %v756 = vtanh.pop %v755
    %v757 = vsub.f32 1.0, %v744
    %759 = vrot.lane.b32.xlu0 %v756, 96
    %v760 = vpop.permute.xlu0 %759
    %v762 = vmul.f32 %v757, %v760
    %v763 = vmul.f32 %v744, %v486
    %v764 = vadd.f32 %v762, %v763
    %766 = vrot.lane.b32.xlu0 %v764, 96
    %v767 = vpop.permute.xlu0 %766
    %v768 = vsel %vm94, %v767, 0
    %770 = vmatprep.subr.mxu0 0.0
    %771 = vmatpush1.msra.mxu0 %v66
    %772 = vmatprep.subr.mxu0 0.0
    %773 = vmatpush1.msra.mxu0 %v67
    %774 = vmatprep.subr.mxu0 0.0
    %775 = vmatpush1.msra.mxu0 %v68
    %776 = vmatprep.subr.mxu0 0.0
    %777 = vmatpush1.msra.mxu0 %v69
    %778 = vmatprep.subr.mxu0 0.0
    %779 = vmatpush1.msra.mxu0 0.0
    %780 = vmatprep.subr.mxu0 0.0
    %781 = vmatpush1.msra.mxu0 0.0
    %782 = vmatprep.subr.mxu0 0.0
    %783 = vmatpush1.msra.mxu0 0.0
    %784 = vmatprep.subr.mxu0 0.0
    %785 = vmatpush1.msra.mxu0 0.0
    %786 = vmatprep.subr.mxu0 0.0
    %787 = vmatpush1.msra.mxu0 0.0
    %788 = vmatprep.subr.mxu0 0.0
    %789 = vmatpush1.msra.mxu0 0.0
    %790 = vmatprep.subr.mxu0 0.0
    %791 = vmatpush1.msra.mxu0 0.0
    %792 = vmatprep.subr.mxu0 0.0
    %793 = vmatpush1.msra.mxu0 0.0
    %794 = vmatprep.subr.mxu0 0.0
    %795 = vmatpush1.msra.mxu0 0.0
    %796 = vmatprep.subr.mxu0 0.0
    %797 = vmatpush1.msra.mxu0 0.0
    %798 = vmatprep.subr.mxu0 0.0
    %799 = vmatpush1.msra.mxu0 0.0
    %800 = vmatprep.subr.mxu0 0.0
    %801 = vmatpush1.msra.mxu0 0.0
    %802 = vmatprep.subr.mxu0 0.0
    %803 = vmatpush1.msra.mxu0 0.0
    %804 = vmatprep.subr.mxu0 0.0
    %805 = vmatpush1.msra.mxu0 0.0
    %806 = vmatprep.subr.mxu0 0.0
    %807 = vmatpush1.msra.mxu0 0.0
    %808 = vmatprep.subr.mxu0 0.0
    %809 = vmatpush1.msra.mxu0 0.0
    %810 = vmatprep.subr.mxu0 0.0
    %811 = vmatpush1.msra.mxu0 0.0
    %812 = vmatprep.subr.mxu0 0.0
    %813 = vmatpush1.msra.mxu0 0.0
    %814 = vmatprep.subr.mxu0 0.0
    %815 = vmatpush1.msra.mxu0 0.0
    %816 = vmatprep.subr.mxu0 0.0
    %817 = vmatpush1.msra.mxu0 0.0
    %818 = vmatprep.subr.mxu0 0.0
    %819 = vmatpush1.msra.mxu0 0.0
    %820 = vmatprep.subr.mxu0 0.0
    %821 = vmatpush1.msra.mxu0 0.0
    %822 = vmatprep.subr.mxu0 0.0
    %823 = vmatpush1.msra.mxu0 0.0
    %824 = vmatprep.subr.mxu0 0.0
    %825 = vmatpush1.msra.mxu0 0.0
    %826 = vmatprep.subr.mxu0 0.0
    %827 = vmatpush1.msra.mxu0 0.0
    %828 = vmatprep.subr.mxu0 0.0
    %829 = vmatpush1.msra.mxu0 0.0
    %830 = vmatprep.subr.mxu0 0.0
    %831 = vmatpush1.msra.mxu0 0.0
    %832 = vmatprep.subr.mxu0 0.0
    %833 = vmatpush1.msra.mxu0 0.0
    %834 = vmatprep.mubr.f32.mxu0 0.0
    %835 = vmatmul.mubr.f32.gmra.mrb[0].mxu0 %v768
    %v836 = vpop.f32.mrb[0].mxu0
    %v837 = vadd.f32 %v75, %v836
    %v838 = vpop.f32.mrb[0].mxu0
    %839 = vdwg.mxu0
    %v840 = vsel %vm94, %v663, 0
    %842 = vmatprep.subr.mxu0 0.0
    %843 = vmatpush1.msra.mxu0 %v62
    %844 = vmatprep.subr.mxu0 0.0
    %845 = vmatpush1.msra.mxu0 %v63
    %846 = vmatprep.subr.mxu0 0.0
    %847 = vmatpush1.msra.mxu0 %v64
    %848 = vmatprep.subr.mxu0 0.0
    %849 = vmatpush1.msra.mxu0 %v65
    %850 = vmatprep.subr.mxu0 0.0
    %851 = vmatpush1.msra.mxu0 0.0
    %852 = vmatprep.subr.mxu0 0.0
    %853 = vmatpush1.msra.mxu0 0.0
    %854 = vmatprep.subr.mxu0 0.0
    %855 = vmatpush1.msra.mxu0 0.0
    %856 = vmatprep.subr.mxu0 0.0
    %857 = vmatpush1.msra.mxu0 0.0
    %858 = vmatprep.subr.mxu0 0.0
    %859 = vmatpush1.msra.mxu0 0.0
    %860 = vmatprep.subr.mxu0 0.0
    %861 = vmatpush1.msra.mxu0 0.0
    %862 = vmatprep.subr.mxu0 0.0
    %863 = vmatpush1.msra.mxu0 0.0
    %864 = vmatprep.subr.mxu0 0.0
    %865 = vmatpush1.msra.mxu0 0.0
    %866 = vmatprep.subr.mxu0 0.0
    %867 = vmatpush1.msra.mxu0 0.0
    %868 = vmatprep.subr.mxu0 0.0
    %869 = vmatpush1.msra.mxu0 0.0
    %870 = vmatprep.subr.mxu0 0.0
    %871 = vmatpush1.msra.mxu0 0.0
    %872 = vmatprep.subr.mxu0 0.0
    %873 = vmatpush1.msra.mxu0 0.0
    %874 = vmatprep.subr.mxu0 0.0
    %875 = vmatpush1.msra.mxu0 0.0
    %876 = vmatprep.subr.mxu0 0.0
    %877 = vmatpush1.msra.mxu0 0.0
    %878 = vmatprep.subr.mxu0 0.0
    %879 = vmatpush1.msra.mxu0 0.0
    %880 = vmatprep.subr.mxu0 0.0
    %881 = vmatpush1.msra.mxu0 0.0
    %882 = vmatprep.subr.mxu0 0.0
    %883 = vmatpush1.msra.mxu0 0.0
    %884 = vmatprep.subr.mxu0 0.0
    %885 = vmatpush1.msra.mxu0 0.0
    %886 = vmatprep.subr.mxu0 0.0
    %887 = vmatpush1.msra.mxu0 0.0
    %888 = vmatprep.subr.mxu0 0.0
    %889 = vmatpush1.msra.mxu0 0.0
    %890 = vmatprep.subr.mxu0 0.0
    %891 = vmatpush1.msra.mxu0 0.0
    %892 = vmatprep.subr.mxu0 0.0
    %893 = vmatpush1.msra.mxu0 0.0
    %894 = vmatprep.subr.mxu0 0.0
    %895 = vmatpush1.msra.mxu0 0.0
    %896 = vmatprep.subr.mxu0 0.0
    %897 = vmatpush1.msra.mxu0 0.0
    %898 = vmatprep.subr.mxu0 0.0
    %899 = vmatpush1.msra.mxu0 0.0
    %900 = vmatprep.subr.mxu0 0.0
    %901 = vmatpush1.msra.mxu0 0.0
    %902 = vmatprep.subr.mxu0 0.0
    %903 = vmatpush1.msra.mxu0 0.0
    %904 = vmatprep.subr.mxu0 0.0
    %905 = vmatpush1.msra.mxu0 0.0
    %906 = vmatprep.mubr.f32.mxu0 0.0
    %907 = vmatmul.mubr.f32.gmra.mrb[0].mxu0 %v840
    %v908 = vpop.f32.mrb[0].mxu0
    %v909 = vadd.f32 0.0, %v908
    %v910 = vpop.f32.mrb[0].mxu0
    %911 = vdwg.mxu0
    %v912 = vadd.f32 %v837, %v909
    %v913 = vxor.u32 %v912, 2147483648
    %v914 = vmul.f32 %v913, 1.442695
    %v915 = vpow.pop %v914
    %v916 = vadd.f32 %v915, 1.0
    %v917 = vrcp.pop %v916
    %v918 = vmul.f32 1.0, %v917
    %v919 = vadd.f32 %v909, %v357
    %921 = vrot.lane.b32.xlu0 %v919, 64
    %v922 = vpop.permute.xlu0 %921
    %v924 = vmul.f32 %v918, %v922
    %926 = vrot.lane.b32.xlu0 %v924, 64
    %v927 = vpop.permute.xlu0 %926
    %v929 = vadd.f32 %v837, %v927
    %v930 = vtanh.pop %v929
    %v931 = vsub.f32 1.0, %v918
    %933 = vrot.lane.b32.xlu0 %v930, 96
    %v934 = vpop.permute.xlu0 %933
    %v936 = vmul.f32 %v931, %v934
    %v937 = vmul.f32 %v918, %v660
    %v938 = vadd.f32 %v936, %v937
    %940 = vrot.lane.b32.xlu0 %v938, 96
    %v941 = vpop.permute.xlu0 %940
    %943 = vst.msk [vmem:[#allocation2 + $0x8] sm:$0xf] %vm386, %v941
    %s944 = scalar_lea.vmem %s0, 12
    %v945 = vld [vmem:[%s944] sm:$0xf]
    %946 = vmatprep.subr.mxu0 0.0
    %947 = vmatpush1.msra.mxu0 %v57
    %948 = vmatprep.subr.mxu0 0.0
    %949 = vmatpush1.msra.mxu0 %v58
    %950 = vmatprep.subr.mxu0 0.0
    %951 = vmatpush1.msra.mxu0 %v59
    %952 = vmatprep.subr.mxu0 0.0
    %953 = vmatpush1.msra.mxu0 %v60
    %954 = vmatprep.subr.mxu0 0.0
    %955 = vmatpush1.msra.mxu0 0.0
    %956 = vmatprep.subr.mxu0 0.0
    %957 = vmatpush1.msra.mxu0 0.0
    %958 = vmatprep.subr.mxu0 0.0
    %959 = vmatpush1.msra.mxu0 0.0
    %960 = vmatprep.subr.mxu0 0.0
    %961 = vmatpush1.msra.mxu0 0.0
    %962 = vmatprep.subr.mxu0 0.0
    %963 = vmatpush1.msra.mxu0 0.0
    %964 = vmatprep.subr.mxu0 0.0
    %965 = vmatpush1.msra.mxu0 0.0
    %966 = vmatprep.subr.mxu0 0.0
    %967 = vmatpush1.msra.mxu0 0.0
    %968 = vmatprep.subr.mxu0 0.0
    %969 = vmatpush1.msra.mxu0 0.0
    %970 = vmatprep.subr.mxu0 0.0
    %971 = vmatpush1.msra.mxu0 0.0
    %972 = vmatprep.subr.mxu0 0.0
    %973 = vmatpush1.msra.mxu0 0.0
    %974 = vmatprep.subr.mxu0 0.0
    %975 = vmatpush1.msra.mxu0 0.0
    %976 = vmatprep.subr.mxu0 0.0
    %977 = vmatpush1.msra.mxu0 0.0
    %978 = vmatprep.subr.mxu0 0.0
    %979 = vmatpush1.msra.mxu0 0.0
    %980 = vmatprep.subr.mxu0 0.0
    %981 = vmatpush1.msra.mxu0 0.0
    %982 = vmatprep.subr.mxu0 0.0
    %983 = vmatpush1.msra.mxu0 0.0
    %984 = vmatprep.subr.mxu0 0.0
    %985 = vmatpush1.msra.mxu0 0.0
    %986 = vmatprep.subr.mxu0 0.0
    %987 = vmatpush1.msra.mxu0 0.0
    %988 = vmatprep.subr.mxu0 0.0
    %989 = vmatpush1.msra.mxu0 0.0
    %990 = vmatprep.subr.mxu0 0.0
    %991 = vmatpush1.msra.mxu0 0.0
    %992 = vmatprep.subr.mxu0 0.0
    %993 = vmatpush1.msra.mxu0 0.0
    %994 = vmatprep.subr.mxu0 0.0
    %995 = vmatpush1.msra.mxu0 0.0
    %996 = vmatprep.subr.mxu0 0.0
    %997 = vmatpush1.msra.mxu0 0.0
    %998 = vmatprep.subr.mxu0 0.0
    %999 = vmatpush1.msra.mxu0 0.0
    %1000 = vmatprep.subr.mxu0 0.0
    %1001 = vmatpush1.msra.mxu0 0.0
    %1002 = vmatprep.subr.mxu0 0.0
    %1003 = vmatpush1.msra.mxu0 0.0
    %1004 = vmatprep.subr.mxu0 0.0
    %1005 = vmatpush1.msra.mxu0 0.0
    %1006 = vmatprep.subr.mxu0 0.0
    %1007 = vmatpush1.msra.mxu0 0.0
    %1008 = vmatprep.subr.mxu0 0.0
    %1009 = vmatpush1.msra.mxu0 0.0
    %1010 = vmatprep.mubr.f32.mxu0 0.0
    %1011 = vmatmul.mubr.f32.gmra.mrb[0].mxu0 %v768
    %v1012 = vpop.f32.mrb[0].mxu0
    %v1013 = vadd.f32 0.0, %v1012
    %v1014 = vpop.f32.mrb[0].mxu0
    %1015 = vdwg.mxu0
    %v1016 = vadd.f32 %v945, %v1013
    %v1017 = vxor.u32 %v1016, 2147483648
    %v1018 = vmul.f32 %v1017, 1.442695
    %v1019 = vpow.pop %v1018
    %v1020 = vadd.f32 %v1019, 1.0
    %v1021 = vrcp.pop %v1020
    %v1022 = vmul.f32 1.0, %v1021
    %v1023 = vadd.f32 %v1013, %v176
    %1025 = vrot.lane.b32.xlu0 %v1023, 64
    %v1026 = vpop.permute.xlu0 %1025
    %v1028 = vmul.f32 %v1022, %v1026
    %1030 = vrot.lane.b32.xlu0 %v1028, 64
    %v1031 = vpop.permute.xlu0 %1030
    %v1033 = vadd.f32 %v945, %v1031
    %v1034 = vtanh.pop %v1033
    %v1035 = vsub.f32 1.0, %v1022
    %1037 = vrot.lane.b32.xlu0 %v1034, 96
    %v1038 = vpop.permute.xlu0 %1037
    %v1040 = vmul.f32 %v1035, %v1038
    %v1041 = vmul.f32 %v1022, %v764
    %v1042 = vadd.f32 %v1040, %v1041
    %1044 = vrot.lane.b32.xlu0 %v1042, 96
    %v1045 = vpop.permute.xlu0 %1044
    %v1046 = vsel %vm94, %v1045, 0
    %1048 = vmatprep.subr.mxu0 0.0
    %1049 = vmatpush1.msra.mxu0 %v66
    %1050 = vmatprep.subr.mxu0 0.0
    %1051 = vmatpush1.msra.mxu0 %v67
    %1052 = vmatprep.subr.mxu0 0.0
    %1053 = vmatpush1.msra.mxu0 %v68
    %1054 = vmatprep.subr.mxu0 0.0
    %1055 = vmatpush1.msra.mxu0 %v69
    %1056 = vmatprep.subr.mxu0 0.0
    %1057 = vmatpush1.msra.mxu0 0.0
    %1058 = vmatprep.subr.mxu0 0.0
    %1059 = vmatpush1.msra.mxu0 0.0
    %1060 = vmatprep.subr.mxu0 0.0
    %1061 = vmatpush1.msra.mxu0 0.0
    %1062 = vmatprep.subr.mxu0 0.0
    %1063 = vmatpush1.msra.mxu0 0.0
    %1064 = vmatprep.subr.mxu0 0.0
    %1065 = vmatpush1.msra.mxu0 0.0
    %1066 = vmatprep.subr.mxu0 0.0
    %1067 = vmatpush1.msra.mxu0 0.0
    %1068 = vmatprep.subr.mxu0 0.0
    %1069 = vmatpush1.msra.mxu0 0.0
    %1070 = vmatprep.subr.mxu0 0.0
    %1071 = vmatpush1.msra.mxu0 0.0
    %1072 = vmatprep.subr.mxu0 0.0
    %1073 = vmatpush1.msra.mxu0 0.0
    %1074 = vmatprep.subr.mxu0 0.0
    %1075 = vmatpush1.msra.mxu0 0.0
    %1076 = vmatprep.subr.mxu0 0.0
    %1077 = vmatpush1.msra.mxu0 0.0
    %1078 = vmatprep.subr.mxu0 0.0
    %1079 = vmatpush1.msra.mxu0 0.0
    %1080 = vmatprep.subr.mxu0 0.0
    %1081 = vmatpush1.msra.mxu0 0.0
    %1082 = vmatprep.subr.mxu0 0.0
    %1083 = vmatpush1.msra.mxu0 0.0
    %1084 = vmatprep.subr.mxu0 0.0
    %1085 = vmatpush1.msra.mxu0 0.0
    %1086 = vmatprep.subr.mxu0 0.0
    %1087 = vmatpush1.msra.mxu0 0.0
    %1088 = vmatprep.subr.mxu0 0.0
    %1089 = vmatpush1.msra.mxu0 0.0
    %1090 = vmatprep.subr.mxu0 0.0
    %1091 = vmatpush1.msra.mxu0 0.0
    %1092 = vmatprep.subr.mxu0 0.0
    %1093 = vmatpush1.msra.mxu0 0.0
    %1094 = vmatprep.subr.mxu0 0.0
    %1095 = vmatpush1.msra.mxu0 0.0
    %1096 = vmatprep.subr.mxu0 0.0
    %1097 = vmatpush1.msra.mxu0 0.0
    %1098 = vmatprep.subr.mxu0 0.0
    %1099 = vmatpush1.msra.mxu0 0.0
    %1100 = vmatprep.subr.mxu0 0.0
    %1101 = vmatpush1.msra.mxu0 0.0
    %1102 = vmatprep.subr.mxu0 0.0
    %1103 = vmatpush1.msra.mxu0 0.0
    %1104 = vmatprep.subr.mxu0 0.0
    %1105 = vmatpush1.msra.mxu0 0.0
    %1106 = vmatprep.subr.mxu0 0.0
    %1107 = vmatpush1.msra.mxu0 0.0
    %1108 = vmatprep.subr.mxu0 0.0
    %1109 = vmatpush1.msra.mxu0 0.0
    %1110 = vmatprep.subr.mxu0 0.0
    %1111 = vmatpush1.msra.mxu0 0.0
    %1112 = vmatprep.mubr.f32.mxu0 0.0
    %1113 = vmatmul.mubr.f32.gmra.mrb[0].mxu0 %v1046
    %v1114 = vpop.f32.mrb[0].mxu0
    %v1115 = vadd.f32 %v75, %v1114
    %v1116 = vpop.f32.mrb[0].mxu0
    %1117 = vdwg.mxu0
    %v1118 = vsel %vm94, %v941, 0
    %1120 = vmatprep.subr.mxu0 0.0
    %1121 = vmatpush1.msra.mxu0 %v62
    %1122 = vmatprep.subr.mxu0 0.0
    %1123 = vmatpush1.msra.mxu0 %v63
    %1124 = vmatprep.subr.mxu0 0.0
    %1125 = vmatpush1.msra.mxu0 %v64
    %1126 = vmatprep.subr.mxu0 0.0
    %1127 = vmatpush1.msra.mxu0 %v65
    %1128 = vmatprep.subr.mxu0 0.0
    %1129 = vmatpush1.msra.mxu0 0.0
    %1130 = vmatprep.subr.mxu0 0.0
    %1131 = vmatpush1.msra.mxu0 0.0
    %1132 = vmatprep.subr.mxu0 0.0
    %1133 = vmatpush1.msra.mxu0 0.0
    %1134 = vmatprep.subr.mxu0 0.0
    %1135 = vmatpush1.msra.mxu0 0.0
    %1136 = vmatprep.subr.mxu0 0.0
    %1137 = vmatpush1.msra.mxu0 0.0
    %1138 = vmatprep.subr.mxu0 0.0
    %1139 = vmatpush1.msra.mxu0 0.0
    %1140 = vmatprep.subr.mxu0 0.0
    %1141 = vmatpush1.msra.mxu0 0.0
    %1142 = vmatprep.subr.mxu0 0.0
    %1143 = vmatpush1.msra.mxu0 0.0
    %1144 = vmatprep.subr.mxu0 0.0
    %1145 = vmatpush1.msra.mxu0 0.0
    %1146 = vmatprep.subr.mxu0 0.0
    %1147 = vmatpush1.msra.mxu0 0.0
    %1148 = vmatprep.subr.mxu0 0.0
    %1149 = vmatpush1.msra.mxu0 0.0
    %1150 = vmatprep.subr.mxu0 0.0
    %1151 = vmatpush1.msra.mxu0 0.0
    %1152 = vmatprep.subr.mxu0 0.0
    %1153 = vmatpush1.msra.mxu0 0.0
    %1154 = vmatprep.subr.mxu0 0.0
    %1155 = vmatpush1.msra.mxu0 0.0
    %1156 = vmatprep.subr.mxu0 0.0
    %1157 = vmatpush1.msra.mxu0 0.0
    %1158 = vmatprep.subr.mxu0 0.0
    %1159 = vmatpush1.msra.mxu0 0.0
    %1160 = vmatprep.subr.mxu0 0.0
    %1161 = vmatpush1.msra.mxu0 0.0
    %1162 = vmatprep.subr.mxu0 0.0
    %1163 = vmatpush1.msra.mxu0 0.0
    %1164 = vmatprep.subr.mxu0 0.0
    %1165 = vmatpush1.msra.mxu0 0.0
    %1166 = vmatprep.subr.mxu0 0.0
    %1167 = vmatpush1.msra.mxu0 0.0
    %1168 = vmatprep.subr.mxu0 0.0
    %1169 = vmatpush1.msra.mxu0 0.0
    %1170 = vmatprep.subr.mxu0 0.0
    %1171 = vmatpush1.msra.mxu0 0.0
    %1172 = vmatprep.subr.mxu0 0.0
    %1173 = vmatpush1.msra.mxu0 0.0
    %1174 = vmatprep.subr.mxu0 0.0
    %1175 = vmatpush1.msra.mxu0 0.0
    %1176 = vmatprep.subr.mxu0 0.0
    %1177 = vmatpush1.msra.mxu0 0.0
    %1178 = vmatprep.subr.mxu0 0.0
    %1179 = vmatpush1.msra.mxu0 0.0
    %1180 = vmatprep.subr.mxu0 0.0
    %1181 = vmatpush1.msra.mxu0 0.0
    %1182 = vmatprep.subr.mxu0 0.0
    %1183 = vmatpush1.msra.mxu0 0.0
    %1184 = vmatprep.mubr.f32.mxu0 0.0
    %1185 = vmatmul.mubr.f32.gmra.mrb[0].mxu0 %v1118
    %v1186 = vpop.f32.mrb[0].mxu0
    %v1187 = vadd.f32 0.0, %v1186
    %v1188 = vpop.f32.mrb[0].mxu0
    %1189 = vdwg.mxu0
    %v1190 = vadd.f32 %v1115, %v1187
    %v1191 = vxor.u32 %v1190, 2147483648
    %v1192 = vmul.f32 %v1191, 1.442695
    %v1193 = vpow.pop %v1192
    %v1194 = vadd.f32 %v1193, 1.0
    %v1195 = vrcp.pop %v1194
    %v1196 = vmul.f32 1.0, %v1195
    %v1197 = vadd.f32 %v1187, %v357
    %1199 = vrot.lane.b32.xlu0 %v1197, 64
    %v1200 = vpop.permute.xlu0 %1199
    %v1202 = vmul.f32 %v1196, %v1200
    %1204 = vrot.lane.b32.xlu0 %v1202, 64
    %v1205 = vpop.permute.xlu0 %1204
    %v1207 = vadd.f32 %v1115, %v1205
    %v1208 = vtanh.pop %v1207
    %v1209 = vsub.f32 1.0, %v1196
    %1211 = vrot.lane.b32.xlu0 %v1208, 96
    %v1212 = vpop.permute.xlu0 %1211
    %v1214 = vmul.f32 %v1209, %v1212
    %v1215 = vmul.f32 %v1196, %v938
    %v1216 = vadd.f32 %v1214, %v1215
    %1218 = vrot.lane.b32.xlu0 %v1216, 96
    %v1219 = vpop.permute.xlu0 %1218
    %1221 = vst.msk [vmem:[#allocation2 + $0xc] sm:$0xf] %vm386, %v1219
    %s1222 = scalar_lea.vmem %s0, 16
    %v1223 = vld [vmem:[%s1222] sm:$0xf]
    %1224 = vmatprep.subr.mxu0 0.0
    %1225 = vmatpush1.msra.mxu0 %v57
    %1226 = vmatprep.subr.mxu0 0.0
    %1227 = vmatpush1.msra.mxu0 %v58
    %1228 = vmatprep.subr.mxu0 0.0
    %1229 = vmatpush1.msra.mxu0 %v59
    %1230 = vmatprep.subr.mxu0 0.0
    %1231 = vmatpush1.msra.mxu0 %v60
    %1232 = vmatprep.subr.mxu0 0.0
    %1233 = vmatpush1.msra.mxu0 0.0
    %1234 = vmatprep.subr.mxu0 0.0
    %1235 = vmatpush1.msra.mxu0 0.0
    %1236 = vmatprep.subr.mxu0 0.0
    %1237 = vmatpush1.msra.mxu0 0.0
    %1238 = vmatprep.subr.mxu0 0.0
    %1239 = vmatpush1.msra.mxu0 0.0
    %1240 = vmatprep.subr.mxu0 0.0
    %1241 = vmatpush1.msra.mxu0 0.0
    %1242 = vmatprep.subr.mxu0 0.0
    %1243 = vmatpush1.msra.mxu0 0.0
    %1244 = vmatprep.subr.mxu0 0.0
    %1245 = vmatpush1.msra.mxu0 0.0
    %1246 = vmatprep.subr.mxu0 0.0
    %1247 = vmatpush1.msra.mxu0 0.0
    %1248 = vmatprep.subr.mxu0 0.0
    %1249 = vmatpush1.msra.mxu0 0.0
    %1250 = vmatprep.subr.mxu0 0.0
    %1251 = vmatpush1.msra.mxu0 0.0
    %1252 = vmatprep.subr.mxu0 0.0
    %1253 = vmatpush1.msra.mxu0 0.0
    %1254 = vmatprep.subr.mxu0 0.0
    %1255 = vmatpush1.msra.mxu0 0.0
    %1256 = vmatprep.subr.mxu0 0.0
    %1257 = vmatpush1.msra.mxu0 0.0
    %1258 = vmatprep.subr.mxu0 0.0
    %1259 = vmatpush1.msra.mxu0 0.0
    %1260 = vmatprep.subr.mxu0 0.0
    %1261 = vmatpush1.msra.mxu0 0.0
    %1262 = vmatprep.subr.mxu0 0.0
    %1263 = vmatpush1.msra.mxu0 0.0
    %1264 = vmatprep.subr.mxu0 0.0
    %1265 = vmatpush1.msra.mxu0 0.0
    %1266 = vmatprep.subr.mxu0 0.0
    %1267 = vmatpush1.msra.mxu0 0.0
    %1268 = vmatprep.subr.mxu0 0.0
    %1269 = vmatpush1.msra.mxu0 0.0
    %1270 = vmatprep.subr.mxu0 0.0
    %1271 = vmatpush1.msra.mxu0 0.0
    %1272 = vmatprep.subr.mxu0 0.0
    %1273 = vmatpush1.msra.mxu0 0.0
    %1274 = vmatprep.subr.mxu0 0.0
    %1275 = vmatpush1.msra.mxu0 0.0
    %1276 = vmatprep.subr.mxu0 0.0
    %1277 = vmatpush1.msra.mxu0 0.0
    %1278 = vmatprep.subr.mxu0 0.0
    %1279 = vmatpush1.msra.mxu0 0.0
    %1280 = vmatprep.subr.mxu0 0.0
    %1281 = vmatpush1.msra.mxu0 0.0
    %1282 = vmatprep.subr.mxu0 0.0
    %1283 = vmatpush1.msra.mxu0 0.0
    %1284 = vmatprep.subr.mxu0 0.0
    %1285 = vmatpush1.msra.mxu0 0.0
    %1286 = vmatprep.subr.mxu0 0.0
    %1287 = vmatpush1.msra.mxu0 0.0
    %1288 = vmatprep.mubr.f32.mxu0 0.0
    %1289 = vmatmul.mubr.f32.gmra.mrb[0].mxu0 %v1046
    %v1290 = vpop.f32.mrb[0].mxu0
    %v1291 = vadd.f32 0.0, %v1290
    %v1292 = vpop.f32.mrb[0].mxu0
    %1293 = vdwg.mxu0
    %v1294 = vadd.f32 %v1223, %v1291
    %v1295 = vxor.u32 %v1294, 2147483648
    %v1296 = vmul.f32 %v1295, 1.442695
    %v1297 = vpow.pop %v1296
    %v1298 = vadd.f32 %v1297, 1.0
    %v1299 = vrcp.pop %v1298
    %v1300 = vmul.f32 1.0, %v1299
    %v1301 = vadd.f32 %v1291, %v176
    %1303 = vrot.lane.b32.xlu0 %v1301, 64
    %v1304 = vpop.permute.xlu0 %1303
    %v1306 = vmul.f32 %v1300, %v1304
    %1308 = vrot.lane.b32.xlu0 %v1306, 64
    %v1309 = vpop.permute.xlu0 %1308
    %v1311 = vadd.f32 %v1223, %v1309
    %v1312 = vtanh.pop %v1311
    %v1313 = vsub.f32 1.0, %v1300
    %1315 = vrot.lane.b32.xlu0 %v1312, 96
    %v1316 = vpop.permute.xlu0 %1315
    %v1318 = vmul.f32 %v1313, %v1316
    %v1319 = vmul.f32 %v1300, %v1042
    %v1320 = vadd.f32 %v1318, %v1319
    %1322 = vrot.lane.b32.xlu0 %v1320, 96
    %v1323 = vpop.permute.xlu0 %1322
    %v1324 = vsel %vm94, %v1323, 0
    %1326 = vmatprep.subr.mxu0 0.0
    %1327 = vmatpush1.msra.mxu0 %v66
    %1328 = vmatprep.subr.mxu0 0.0
    %1329 = vmatpush1.msra.mxu0 %v67
    %1330 = vmatprep.subr.mxu0 0.0
    %1331 = vmatpush1.msra.mxu0 %v68
    %1332 = vmatprep.subr.mxu0 0.0
    %1333 = vmatpush1.msra.mxu0 %v69
    %1334 = vmatprep.subr.mxu0 0.0
    %1335 = vmatpush1.msra.mxu0 0.0
    %1336 = vmatprep.subr.mxu0 0.0
    %1337 = vmatpush1.msra.mxu0 0.0
    %1338 = vmatprep.subr.mxu0 0.0
    %1339 = vmatpush1.msra.mxu0 0.0
    %1340 = vmatprep.subr.mxu0 0.0
    %1341 = vmatpush1.msra.mxu0 0.0
    %1342 = vmatprep.subr.mxu0 0.0
    %1343 = vmatpush1.msra.mxu0 0.0
    %1344 = vmatprep.subr.mxu0 0.0
    %1345 = vmatpush1.msra.mxu0 0.0
    %1346 = vmatprep.subr.mxu0 0.0
    %1347 = vmatpush1.msra.mxu0 0.0
    %1348 = vmatprep.subr.mxu0 0.0
    %1349 = vmatpush1.msra.mxu0 0.0
    %1350 = vmatprep.subr.mxu0 0.0
    %1351 = vmatpush1.msra.mxu0 0.0
    %1352 = vmatprep.subr.mxu0 0.0
    %1353 = vmatpush1.msra.mxu0 0.0
    %1354 = vmatprep.subr.mxu0 0.0
    %1355 = vmatpush1.msra.mxu0 0.0
    %1356 = vmatprep.subr.mxu0 0.0
    %1357 = vmatpush1.msra.mxu0 0.0
    %1358 = vmatprep.subr.mxu0 0.0
    %1359 = vmatpush1.msra.mxu0 0.0
    %1360 = vmatprep.subr.mxu0 0.0
    %1361 = vmatpush1.msra.mxu0 0.0
    %1362 = vmatprep.subr.mxu0 0.0
    %1363 = vmatpush1.msra.mxu0 0.0
    %1364 = vmatprep.subr.mxu0 0.0
    %1365 = vmatpush1.msra.mxu0 0.0
    %1366 = vmatprep.subr.mxu0 0.0
    %1367 = vmatpush1.msra.mxu0 0.0
    %1368 = vmatprep.subr.mxu0 0.0
    %1369 = vmatpush1.msra.mxu0 0.0
    %1370 = vmatprep.subr.mxu0 0.0
    %1371 = vmatpush1.msra.mxu0 0.0
    %1372 = vmatprep.subr.mxu0 0.0
    %1373 = vmatpush1.msra.mxu0 0.0
    %1374 = vmatprep.subr.mxu0 0.0
    %1375 = vmatpush1.msra.mxu0 0.0
    %1376 = vmatprep.subr.mxu0 0.0
    %1377 = vmatpush1.msra.mxu0 0.0
    %1378 = vmatprep.subr.mxu0 0.0
    %1379 = vmatpush1.msra.mxu0 0.0
    %1380 = vmatprep.subr.mxu0 0.0
    %1381 = vmatpush1.msra.mxu0 0.0
    %1382 = vmatprep.subr.mxu0 0.0
    %1383 = vmatpush1.msra.mxu0 0.0
    %1384 = vmatprep.subr.mxu0 0.0
    %1385 = vmatpush1.msra.mxu0 0.0
    %1386 = vmatprep.subr.mxu0 0.0
    %1387 = vmatpush1.msra.mxu0 0.0
    %1388 = vmatprep.subr.mxu0 0.0
    %1389 = vmatpush1.msra.mxu0 0.0
    %1390 = vmatprep.mubr.f32.mxu0 0.0
    %1391 = vmatmul.mubr.f32.gmra.mrb[0].mxu0 %v1324
    %v1392 = vpop.f32.mrb[0].mxu0
    %v1393 = vadd.f32 %v75, %v1392
    %v1394 = vpop.f32.mrb[0].mxu0
    %1395 = vdwg.mxu0
    %v1396 = vsel %vm94, %v1219, 0
    %1398 = vmatprep.subr.mxu0 0.0
    %1399 = vmatpush1.msra.mxu0 %v62
    %1400 = vmatprep.subr.mxu0 0.0
    %1401 = vmatpush1.msra.mxu0 %v63
    %1402 = vmatprep.subr.mxu0 0.0
    %1403 = vmatpush1.msra.mxu0 %v64
    %1404 = vmatprep.subr.mxu0 0.0
    %1405 = vmatpush1.msra.mxu0 %v65
    %1406 = vmatprep.subr.mxu0 0.0
    %1407 = vmatpush1.msra.mxu0 0.0
    %1408 = vmatprep.subr.mxu0 0.0
    %1409 = vmatpush1.msra.mxu0 0.0
    %1410 = vmatprep.subr.mxu0 0.0
    %1411 = vmatpush1.msra.mxu0 0.0
    %1412 = vmatprep.subr.mxu0 0.0
    %1413 = vmatpush1.msra.mxu0 0.0
    %1414 = vmatprep.subr.mxu0 0.0
    %1415 = vmatpush1.msra.mxu0 0.0
    %1416 = vmatprep.subr.mxu0 0.0
    %1417 = vmatpush1.msra.mxu0 0.0
    %1418 = vmatprep.subr.mxu0 0.0
    %1419 = vmatpush1.msra.mxu0 0.0
    %1420 = vmatprep.subr.mxu0 0.0
    %1421 = vmatpush1.msra.mxu0 0.0
    %1422 = vmatprep.subr.mxu0 0.0
    %1423 = vmatpush1.msra.mxu0 0.0
    %1424 = vmatprep.subr.mxu0 0.0
    %1425 = vmatpush1.msra.mxu0 0.0
    %1426 = vmatprep.subr.mxu0 0.0
    %1427 = vmatpush1.msra.mxu0 0.0
    %1428 = vmatprep.subr.mxu0 0.0
    %1429 = vmatpush1.msra.mxu0 0.0
    %1430 = vmatprep.subr.mxu0 0.0
    %1431 = vmatpush1.msra.mxu0 0.0
    %1432 = vmatprep.subr.mxu0 0.0
    %1433 = vmatpush1.msra.mxu0 0.0
    %1434 = vmatprep.subr.mxu0 0.0
    %1435 = vmatpush1.msra.mxu0 0.0
    %1436 = vmatprep.subr.mxu0 0.0
    %1437 = vmatpush1.msra.mxu0 0.0
    %1438 = vmatprep.subr.mxu0 0.0
    %1439 = vmatpush1.msra.mxu0 0.0
    %1440 = vmatprep.subr.mxu0 0.0
    %1441 = vmatpush1.msra.mxu0 0.0
    %1442 = vmatprep.subr.mxu0 0.0
    %1443 = vmatpush1.msra.mxu0 0.0
    %1444 = vmatprep.subr.mxu0 0.0
    %1445 = vmatpush1.msra.mxu0 0.0
    %1446 = vmatprep.subr.mxu0 0.0
    %1447 = vmatpush1.msra.mxu0 0.0
    %1448 = vmatprep.subr.mxu0 0.0
    %1449 = vmatpush1.msra.mxu0 0.0
    %1450 = vmatprep.subr.mxu0 0.0
    %1451 = vmatpush1.msra.mxu0 0.0
    %1452 = vmatprep.subr.mxu0 0.0
    %1453 = vmatpush1.msra.mxu0 0.0
    %1454 = vmatprep.subr.mxu0 0.0
    %1455 = vmatpush1.msra.mxu0 0.0
    %1456 = vmatprep.subr.mxu0 0.0
    %1457 = vmatpush1.msra.mxu0 0.0
    %1458 = vmatprep.subr.mxu0 0.0
    %1459 = vmatpush1.msra.mxu0 0.0
    %1460 = vmatprep.subr.mxu0 0.0
    %1461 = vmatpush1.msra.mxu0 0.0
    %1462 = vmatprep.mubr.f32.mxu0 0.0
    %1463 = vmatmul.mubr.f32.gmra.mrb[0].mxu0 %v1396
    %v1464 = vpop.f32.mrb[0].mxu0
    %v1465 = vadd.f32 0.0, %v1464
    %v1466 = vpop.f32.mrb[0].mxu0
    %1467 = vdwg.mxu0
    %v1468 = vadd.f32 %v1393, %v1465
    %v1469 = vxor.u32 %v1468, 2147483648
    %v1470 = vmul.f32 %v1469, 1.442695
    %v1471 = vpow.pop %v1470
    %v1472 = vadd.f32 %v1471, 1.0
    %v1473 = vrcp.pop %v1472
    %v1474 = vmul.f32 1.0, %v1473
    %v1475 = vadd.f32 %v1465, %v357
    %1477 = vrot.lane.b32.xlu0 %v1475, 64
    %v1478 = vpop.permute.xlu0 %1477
    %v1480 = vmul.f32 %v1474, %v1478
    %1482 = vrot.lane.b32.xlu0 %v1480, 64
    %v1483 = vpop.permute.xlu0 %1482
    %v1485 = vadd.f32 %v1393, %v1483
    %v1486 = vtanh.pop %v1485
    %v1487 = vsub.f32 1.0, %v1474
    %1489 = vrot.lane.b32.xlu0 %v1486, 96
    %v1490 = vpop.permute.xlu0 %1489
    %v1492 = vmul.f32 %v1487, %v1490
    %v1493 = vmul.f32 %v1474, %v1216
    %v1494 = vadd.f32 %v1492, %v1493
    %1496 = vrot.lane.b32.xlu0 %v1494, 96
    %v1497 = vpop.permute.xlu0 %1496
    %1499 = vst.msk [vmem:[#allocation2 + $0x10] sm:$0xf] %vm386, %v1497
    %s1500 = scalar_lea.vmem %s0, 20
    %v1501 = vld [vmem:[%s1500] sm:$0xf]
    %1502 = vmatprep.subr.mxu0 0.0
    %1503 = vmatpush1.msra.mxu0 %v57
    %1504 = vmatprep.subr.mxu0 0.0
    %1505 = vmatpush1.msra.mxu0 %v58
    %1506 = vmatprep.subr.mxu0 0.0
    %1507 = vmatpush1.msra.mxu0 %v59
    %1508 = vmatprep.subr.mxu0 0.0
    %1509 = vmatpush1.msra.mxu0 %v60
    %1510 = vmatprep.subr.mxu0 0.0
    %1511 = vmatpush1.msra.mxu0 0.0
    %1512 = vmatprep.subr.mxu0 0.0
    %1513 = vmatpush1.msra.mxu0 0.0
    %1514 = vmatprep.subr.mxu0 0.0
    %1515 = vmatpush1.msra.mxu0 0.0
    %1516 = vmatprep.subr.mxu0 0.0
    %1517 = vmatpush1.msra.mxu0 0.0
    %1518 = vmatprep.subr.mxu0 0.0
    %1519 = vmatpush1.msra.mxu0 0.0
    %1520 = vmatprep.subr.mxu0 0.0
    %1521 = vmatpush1.msra.mxu0 0.0
    %1522 = vmatprep.subr.mxu0 0.0
    %1523 = vmatpush1.msra.mxu0 0.0
    %1524 = vmatprep.subr.mxu0 0.0
    %1525 = vmatpush1.msra.mxu0 0.0
    %1526 = vmatprep.subr.mxu0 0.0
    %1527 = vmatpush1.msra.mxu0 0.0
    %1528 = vmatprep.subr.mxu0 0.0
    %1529 = vmatpush1.msra.mxu0 0.0
    %1530 = vmatprep.subr.mxu0 0.0
    %1531 = vmatpush1.msra.mxu0 0.0
    %1532 = vmatprep.subr.mxu0 0.0
    %1533 = vmatpush1.msra.mxu0 0.0
    %1534 = vmatprep.subr.mxu0 0.0
    %1535 = vmatpush1.msra.mxu0 0.0
    %1536 = vmatprep.subr.mxu0 0.0
    %1537 = vmatpush1.msra.mxu0 0.0
    %1538 = vmatprep.subr.mxu0 0.0
    %1539 = vmatpush1.msra.mxu0 0.0
    %1540 = vmatprep.subr.mxu0 0.0
    %1541 = vmatpush1.msra.mxu0 0.0
    %1542 = vmatprep.subr.mxu0 0.0
    %1543 = vmatpush1.msra.mxu0 0.0
    %1544 = vmatprep.subr.mxu0 0.0
    %1545 = vmatpush1.msra.mxu0 0.0
    %1546 = vmatprep.subr.mxu0 0.0
    %1547 = vmatpush1.msra.mxu0 0.0
    %1548 = vmatprep.subr.mxu0 0.0
    %1549 = vmatpush1.msra.mxu0 0.0
    %1550 = vmatprep.subr.mxu0 0.0
    %1551 = vmatpush1.msra.mxu0 0.0
    %1552 = vmatprep.subr.mxu0 0.0
    %1553 = vmatpush1.msra.mxu0 0.0
    %1554 = vmatprep.subr.mxu0 0.0
    %1555 = vmatpush1.msra.mxu0 0.0
    %1556 = vmatprep.subr.mxu0 0.0
    %1557 = vmatpush1.msra.mxu0 0.0
    %1558 = vmatprep.subr.mxu0 0.0
    %1559 = vmatpush1.msra.mxu0 0.0
    %1560 = vmatprep.subr.mxu0 0.0
    %1561 = vmatpush1.msra.mxu0 0.0
    %1562 = vmatprep.subr.mxu0 0.0
    %1563 = vmatpush1.msra.mxu0 0.0
    %1564 = vmatprep.subr.mxu0 0.0
    %1565 = vmatpush1.msra.mxu0 0.0
    %1566 = vmatprep.mubr.f32.mxu0 0.0
    %1567 = vmatmul.mubr.f32.gmra.mrb[0].mxu0 %v1324
    %v1568 = vpop.f32.mrb[0].mxu0
    %v1569 = vadd.f32 0.0, %v1568
    %v1570 = vpop.f32.mrb[0].mxu0
    %1571 = vdwg.mxu0
    %v1572 = vadd.f32 %v1501, %v1569
    %v1573 = vxor.u32 %v1572, 2147483648
    %v1574 = vmul.f32 %v1573, 1.442695
    %v1575 = vpow.pop %v1574
    %v1576 = vadd.f32 %v1575, 1.0
    %v1577 = vrcp.pop %v1576
    %v1578 = vmul.f32 1.0, %v1577
    %v1579 = vadd.f32 %v1569, %v176
    %1581 = vrot.lane.b32.xlu0 %v1579, 64
    %v1582 = vpop.permute.xlu0 %1581
    %v1584 = vmul.f32 %v1578, %v1582
    %1586 = vrot.lane.b32.xlu0 %v1584, 64
    %v1587 = vpop.permute.xlu0 %1586
    %v1589 = vadd.f32 %v1501, %v1587
    %v1590 = vtanh.pop %v1589
    %v1591 = vsub.f32 1.0, %v1578
    %1593 = vrot.lane.b32.xlu0 %v1590, 96
    %v1594 = vpop.permute.xlu0 %1593
    %v1596 = vmul.f32 %v1591, %v1594
    %v1597 = vmul.f32 %v1578, %v1320
    %v1598 = vadd.f32 %v1596, %v1597
    %1600 = vrot.lane.b32.xlu0 %v1598, 96
    %v1601 = vpop.permute.xlu0 %1600
    %v1602 = vsel %vm94, %v1601, 0
    %1604 = vmatprep.subr.mxu0 0.0
    %1605 = vmatpush1.msra.mxu0 %v66
    %1606 = vmatprep.subr.mxu0 0.0
    %1607 = vmatpush1.msra.mxu0 %v67
    %1608 = vmatprep.subr.mxu0 0.0
    %1609 = vmatpush1.msra.mxu0 %v68
    %1610 = vmatprep.subr.mxu0 0.0
    %1611 = vmatpush1.msra.mxu0 %v69
    %1612 = vmatprep.subr.mxu0 0.0
    %1613 = vmatpush1.msra.mxu0 0.0
    %1614 = vmatprep.subr.mxu0 0.0
    %1615 = vmatpush1.msra.mxu0 0.0
    %1616 = vmatprep.subr.mxu0 0.0
    %1617 = vmatpush1.msra.mxu0 0.0
    %1618 = vmatprep.subr.mxu0 0.0
    %1619 = vmatpush1.msra.mxu0 0.0
    %1620 = vmatprep.subr.mxu0 0.0
    %1621 = vmatpush1.msra.mxu0 0.0
    %1622 = vmatprep.subr.mxu0 0.0
    %1623 = vmatpush1.msra.mxu0 0.0
    %1624 = vmatprep.subr.mxu0 0.0
    %1625 = vmatpush1.msra.mxu0 0.0
    %1626 = vmatprep.subr.mxu0 0.0
    %1627 = vmatpush1.msra.mxu0 0.0
    %1628 = vmatprep.subr.mxu0 0.0
    %1629 = vmatpush1.msra.mxu0 0.0
    %1630 = vmatprep.subr.mxu0 0.0
    %1631 = vmatpush1.msra.mxu0 0.0
    %1632 = vmatprep.subr.mxu0 0.0
    %1633 = vmatpush1.msra.mxu0 0.0
    %1634 = vmatprep.subr.mxu0 0.0
    %1635 = vmatpush1.msra.mxu0 0.0
    %1636 = vmatprep.subr.mxu0 0.0
    %1637 = vmatpush1.msra.mxu0 0.0
    %1638 = vmatprep.subr.mxu0 0.0
    %1639 = vmatpush1.msra.mxu0 0.0
    %1640 = vmatprep.subr.mxu0 0.0
    %1641 = vmatpush1.msra.mxu0 0.0
    %1642 = vmatprep.subr.mxu0 0.0
    %1643 = vmatpush1.msra.mxu0 0.0
    %1644 = vmatprep.subr.mxu0 0.0
    %1645 = vmatpush1.msra.mxu0 0.0
    %1646 = vmatprep.subr.mxu0 0.0
    %1647 = vmatpush1.msra.mxu0 0.0
    %1648 = vmatprep.subr.mxu0 0.0
    %1649 = vmatpush1.msra.mxu0 0.0
    %1650 = vmatprep.subr.mxu0 0.0
    %1651 = vmatpush1.msra.mxu0 0.0
    %1652 = vmatprep.subr.mxu0 0.0
    %1653 = vmatpush1.msra.mxu0 0.0
    %1654 = vmatprep.subr.mxu0 0.0
    %1655 = vmatpush1.msra.mxu0 0.0
    %1656 = vmatprep.subr.mxu0 0.0
    %1657 = vmatpush1.msra.mxu0 0.0
    %1658 = vmatprep.subr.mxu0 0.0
    %1659 = vmatpush1.msra.mxu0 0.0
    %1660 = vmatprep.subr.mxu0 0.0
    %1661 = vmatpush1.msra.mxu0 0.0
    %1662 = vmatprep.subr.mxu0 0.0
    %1663 = vmatpush1.msra.mxu0 0.0
    %1664 = vmatprep.subr.mxu0 0.0
    %1665 = vmatpush1.msra.mxu0 0.0
    %1666 = vmatprep.subr.mxu0 0.0
    %1667 = vmatpush1.msra.mxu0 0.0
    %1668 = vmatprep.mubr.f32.mxu0 0.0
    %1669 = vmatmul.mubr.f32.gmra.mrb[0].mxu0 %v1602
    %v1670 = vpop.f32.mrb[0].mxu0
    %v1671 = vadd.f32 %v75, %v1670
    %v1672 = vpop.f32.mrb[0].mxu0
    %1673 = vdwg.mxu0
    %v1674 = vsel %vm94, %v1497, 0
    %1676 = vmatprep.subr.mxu0 0.0
    %1677 = vmatpush1.msra.mxu0 %v62
    %1678 = vmatprep.subr.mxu0 0.0
    %1679 = vmatpush1.msra.mxu0 %v63
    %1680 = vmatprep.subr.mxu0 0.0
    %1681 = vmatpush1.msra.mxu0 %v64
    %1682 = vmatprep.subr.mxu0 0.0
    %1683 = vmatpush1.msra.mxu0 %v65
    %1684 = vmatprep.subr.mxu0 0.0
    %1685 = vmatpush1.msra.mxu0 0.0
    %1686 = vmatprep.subr.mxu0 0.0
    %1687 = vmatpush1.msra.mxu0 0.0
    %1688 = vmatprep.subr.mxu0 0.0
    %1689 = vmatpush1.msra.mxu0 0.0
    %1690 = vmatprep.subr.mxu0 0.0
    %1691 = vmatpush1.msra.mxu0 0.0
    %1692 = vmatprep.subr.mxu0 0.0
    %1693 = vmatpush1.msra.mxu0 0.0
    %1694 = vmatprep.subr.mxu0 0.0
    %1695 = vmatpush1.msra.mxu0 0.0
    %1696 = vmatprep.subr.mxu0 0.0
    %1697 = vmatpush1.msra.mxu0 0.0
    %1698 = vmatprep.subr.mxu0 0.0
    %1699 = vmatpush1.msra.mxu0 0.0
    %1700 = vmatprep.subr.mxu0 0.0
    %1701 = vmatpush1.msra.mxu0 0.0
    %1702 = vmatprep.subr.mxu0 0.0
    %1703 = vmatpush1.msra.mxu0 0.0
    %1704 = vmatprep.subr.mxu0 0.0
    %1705 = vmatpush1.msra.mxu0 0.0
    %1706 = vmatprep.subr.mxu0 0.0
    %1707 = vmatpush1.msra.mxu0 0.0
    %1708 = vmatprep.subr.mxu0 0.0
    %1709 = vmatpush1.msra.mxu0 0.0
    %1710 = vmatprep.subr.mxu0 0.0
    %1711 = vmatpush1.msra.mxu0 0.0
    %1712 = vmatprep.subr.mxu0 0.0
    %1713 = vmatpush1.msra.mxu0 0.0
    %1714 = vmatprep.subr.mxu0 0.0
    %1715 = vmatpush1.msra.mxu0 0.0
    %1716 = vmatprep.subr.mxu0 0.0
    %1717 = vmatpush1.msra.mxu0 0.0
    %1718 = vmatprep.subr.mxu0 0.0
    %1719 = vmatpush1.msra.mxu0 0.0
    %1720 = vmatprep.subr.mxu0 0.0
    %1721 = vmatpush1.msra.mxu0 0.0
    %1722 = vmatprep.subr.mxu0 0.0
    %1723 = vmatpush1.msra.mxu0 0.0
    %1724 = vmatprep.subr.mxu0 0.0
    %1725 = vmatpush1.msra.mxu0 0.0
    %1726 = vmatprep.subr.mxu0 0.0
    %1727 = vmatpush1.msra.mxu0 0.0
    %1728 = vmatprep.subr.mxu0 0.0
    %1729 = vmatpush1.msra.mxu0 0.0
    %1730 = vmatprep.subr.mxu0 0.0
    %1731 = vmatpush1.msra.mxu0 0.0
    %1732 = vmatprep.subr.mxu0 0.0
    %1733 = vmatpush1.msra.mxu0 0.0
    %1734 = vmatprep.subr.mxu0 0.0
    %1735 = vmatpush1.msra.mxu0 0.0
    %1736 = vmatprep.subr.mxu0 0.0
    %1737 = vmatpush1.msra.mxu0 0.0
    %1738 = vmatprep.subr.mxu0 0.0
    %1739 = vmatpush1.msra.mxu0 0.0
    %1740 = vmatprep.mubr.f32.mxu0 0.0
    %1741 = vmatmul.mubr.f32.gmra.mrb[0].mxu0 %v1674
    %v1742 = vpop.f32.mrb[0].mxu0
    %v1743 = vadd.f32 0.0, %v1742
    %v1744 = vpop.f32.mrb[0].mxu0
    %1745 = vdwg.mxu0
    %v1746 = vadd.f32 %v1671, %v1743
    %v1747 = vxor.u32 %v1746, 2147483648
    %v1748 = vmul.f32 %v1747, 1.442695
    %v1749 = vpow.pop %v1748
    %v1750 = vadd.f32 %v1749, 1.0
    %v1751 = vrcp.pop %v1750
    %v1752 = vmul.f32 1.0, %v1751
    %v1753 = vadd.f32 %v1743, %v357
    %1755 = vrot.lane.b32.xlu0 %v1753, 64
    %v1756 = vpop.permute.xlu0 %1755
    %v1758 = vmul.f32 %v1752, %v1756
    %1760 = vrot.lane.b32.xlu0 %v1758, 64
    %v1761 = vpop.permute.xlu0 %1760
    %v1763 = vadd.f32 %v1671, %v1761
    %v1764 = vtanh.pop %v1763
    %v1765 = vsub.f32 1.0, %v1752
    %1767 = vrot.lane.b32.xlu0 %v1764, 96
    %v1768 = vpop.permute.xlu0 %1767
    %v1770 = vmul.f32 %v1765, %v1768
    %v1771 = vmul.f32 %v1752, %v1494
    %v1772 = vadd.f32 %v1770, %v1771
    %1774 = vrot.lane.b32.xlu0 %v1772, 96
    %v1775 = vpop.permute.xlu0 %1774
    %1777 = vst.msk [vmem:[#allocation2 + $0x14] sm:$0xf] %vm386, %v1775
    %s1778 = scalar_lea.vmem %s0, 24
    %v1779 = vld [vmem:[%s1778] sm:$0xf]
    %1780 = vmatprep.subr.mxu0 0.0
    %1781 = vmatpush1.msra.mxu0 %v57
    %1782 = vmatprep.subr.mxu0 0.0
    %1783 = vmatpush1.msra.mxu0 %v58
    %1784 = vmatprep.subr.mxu0 0.0
    %1785 = vmatpush1.msra.mxu0 %v59
    %1786 = vmatprep.subr.mxu0 0.0
    %1787 = vmatpush1.msra.mxu0 %v60
    %1788 = vmatprep.subr.mxu0 0.0
    %1789 = vmatpush1.msra.mxu0 0.0
    %1790 = vmatprep.subr.mxu0 0.0
    %1791 = vmatpush1.msra.mxu0 0.0
    %1792 = vmatprep.subr.mxu0 0.0
    %1793 = vmatpush1.msra.mxu0 0.0
    %1794 = vmatprep.subr.mxu0 0.0
    %1795 = vmatpush1.msra.mxu0 0.0
    %1796 = vmatprep.subr.mxu0 0.0
    %1797 = vmatpush1.msra.mxu0 0.0
    %1798 = vmatprep.subr.mxu0 0.0
    %1799 = vmatpush1.msra.mxu0 0.0
    %1800 = vmatprep.subr.mxu0 0.0
    %1801 = vmatpush1.msra.mxu0 0.0
    %1802 = vmatprep.subr.mxu0 0.0
    %1803 = vmatpush1.msra.mxu0 0.0
    %1804 = vmatprep.subr.mxu0 0.0
    %1805 = vmatpush1.msra.mxu0 0.0
    %1806 = vmatprep.subr.mxu0 0.0
    %1807 = vmatpush1.msra.mxu0 0.0
    %1808 = vmatprep.subr.mxu0 0.0
    %1809 = vmatpush1.msra.mxu0 0.0
    %1810 = vmatprep.subr.mxu0 0.0
    %1811 = vmatpush1.msra.mxu0 0.0
    %1812 = vmatprep.subr.mxu0 0.0
    %1813 = vmatpush1.msra.mxu0 0.0
    %1814 = vmatprep.subr.mxu0 0.0
    %1815 = vmatpush1.msra.mxu0 0.0
    %1816 = vmatprep.subr.mxu0 0.0
    %1817 = vmatpush1.msra.mxu0 0.0
    %1818 = vmatprep.subr.mxu0 0.0
    %1819 = vmatpush1.msra.mxu0 0.0
    %1820 = vmatprep.subr.mxu0 0.0
    %1821 = vmatpush1.msra.mxu0 0.0
    %1822 = vmatprep.subr.mxu0 0.0
    %1823 = vmatpush1.msra.mxu0 0.0
    %1824 = vmatprep.subr.mxu0 0.0
    %1825 = vmatpush1.msra.mxu0 0.0
    %1826 = vmatprep.subr.mxu0 0.0
    %1827 = vmatpush1.msra.mxu0 0.0
    %1828 = vmatprep.subr.mxu0 0.0
    %1829 = vmatpush1.msra.mxu0 0.0
    %1830 = vmatprep.subr.mxu0 0.0
    %1831 = vmatpush1.msra.mxu0 0.0
    %1832 = vmatprep.subr.mxu0 0.0
    %1833 = vmatpush1.msra.mxu0 0.0
    %1834 = vmatprep.subr.mxu0 0.0
    %1835 = vmatpush1.msra.mxu0 0.0
    %1836 = vmatprep.subr.mxu0 0.0
    %1837 = vmatpush1.msra.mxu0 0.0
    %1838 = vmatprep.subr.mxu0 0.0
    %1839 = vmatpush1.msra.mxu0 0.0
    %1840 = vmatprep.subr.mxu0 0.0
    %1841 = vmatpush1.msra.mxu0 0.0
    %1842 = vmatprep.subr.mxu0 0.0
    %1843 = vmatpush1.msra.mxu0 0.0
    %1844 = vmatprep.mubr.f32.mxu0 0.0
    %1845 = vmatmul.mubr.f32.gmra.mrb[0].mxu0 %v1602
    %v1846 = vpop.f32.mrb[0].mxu0
    %v1847 = vadd.f32 0.0, %v1846
    %v1848 = vpop.f32.mrb[0].mxu0
    %1849 = vdwg.mxu0
    %v1850 = vadd.f32 %v1779, %v1847
    %v1851 = vxor.u32 %v1850, 2147483648
    %v1852 = vmul.f32 %v1851, 1.442695
    %v1853 = vpow.pop %v1852
    %v1854 = vadd.f32 %v1853, 1.0
    %v1855 = vrcp.pop %v1854
    %v1856 = vmul.f32 1.0, %v1855
    %v1857 = vadd.f32 %v1847, %v176
    %1859 = vrot.lane.b32.xlu0 %v1857, 64
    %v1860 = vpop.permute.xlu0 %1859
    %v1862 = vmul.f32 %v1856, %v1860
    %1864 = vrot.lane.b32.xlu0 %v1862, 64
    %v1865 = vpop.permute.xlu0 %1864
    %v1867 = vadd.f32 %v1779, %v1865
    %v1868 = vtanh.pop %v1867
    %v1869 = vsub.f32 1.0, %v1856
    %1871 = vrot.lane.b32.xlu0 %v1868, 96
    %v1872 = vpop.permute.xlu0 %1871
    %v1874 = vmul.f32 %v1869, %v1872
    %v1875 = vmul.f32 %v1856, %v1598
    %v1876 = vadd.f32 %v1874, %v1875
    %1878 = vrot.lane.b32.xlu0 %v1876, 96
    %v1879 = vpop.permute.xlu0 %1878
    %v1880 = vsel %vm94, %v1879, 0
    %1882 = vmatprep.subr.mxu0 0.0
    %1883 = vmatpush1.msra.mxu0 %v66
    %1884 = vmatprep.subr.mxu0 0.0
    %1885 = vmatpush1.msra.mxu0 %v67
    %1886 = vmatprep.subr.mxu0 0.0
    %1887 = vmatpush1.msra.mxu0 %v68
    %1888 = vmatprep.subr.mxu0 0.0
    %1889 = vmatpush1.msra.mxu0 %v69
    %1890 = vmatprep.subr.mxu0 0.0
    %1891 = vmatpush1.msra.mxu0 0.0
    %1892 = vmatprep.subr.mxu0 0.0
    %1893 = vmatpush1.msra.mxu0 0.0
    %1894 = vmatprep.subr.mxu0 0.0
    %1895 = vmatpush1.msra.mxu0 0.0
    %1896 = vmatprep.subr.mxu0 0.0
    %1897 = vmatpush1.msra.mxu0 0.0
    %1898 = vmatprep.subr.mxu0 0.0
    %1899 = vmatpush1.msra.mxu0 0.0
    %1900 = vmatprep.subr.mxu0 0.0
    %1901 = vmatpush1.msra.mxu0 0.0
    %1902 = vmatprep.subr.mxu0 0.0
    %1903 = vmatpush1.msra.mxu0 0.0
    %1904 = vmatprep.subr.mxu0 0.0
    %1905 = vmatpush1.msra.mxu0 0.0
    %1906 = vmatprep.subr.mxu0 0.0
    %1907 = vmatpush1.msra.mxu0 0.0
    %1908 = vmatprep.subr.mxu0 0.0
    %1909 = vmatpush1.msra.mxu0 0.0
    %1910 = vmatprep.subr.mxu0 0.0
    %1911 = vmatpush1.msra.mxu0 0.0
    %1912 = vmatprep.subr.mxu0 0.0
    %1913 = vmatpush1.msra.mxu0 0.0
    %1914 = vmatprep.subr.mxu0 0.0
    %1915 = vmatpush1.msra.mxu0 0.0
    %1916 = vmatprep.subr.mxu0 0.0
    %1917 = vmatpush1.msra.mxu0 0.0
    %1918 = vmatprep.subr.mxu0 0.0
    %1919 = vmatpush1.msra.mxu0 0.0
    %1920 = vmatprep.subr.mxu0 0.0
    %1921 = vmatpush1.msra.mxu0 0.0
    %1922 = vmatprep.subr.mxu0 0.0
    %1923 = vmatpush1.msra.mxu0 0.0
    %1924 = vmatprep.subr.mxu0 0.0
    %1925 = vmatpush1.msra.mxu0 0.0
    %1926 = vmatprep.subr.mxu0 0.0
    %1927 = vmatpush1.msra.mxu0 0.0
    %1928 = vmatprep.subr.mxu0 0.0
    %1929 = vmatpush1.msra.mxu0 0.0
    %1930 = vmatprep.subr.mxu0 0.0
    %1931 = vmatpush1.msra.mxu0 0.0
    %1932 = vmatprep.subr.mxu0 0.0
    %1933 = vmatpush1.msra.mxu0 0.0
    %1934 = vmatprep.subr.mxu0 0.0
    %1935 = vmatpush1.msra.mxu0 0.0
    %1936 = vmatprep.subr.mxu0 0.0
    %1937 = vmatpush1.msra.mxu0 0.0
    %1938 = vmatprep.subr.mxu0 0.0
    %1939 = vmatpush1.msra.mxu0 0.0
    %1940 = vmatprep.subr.mxu0 0.0
    %1941 = vmatpush1.msra.mxu0 0.0
    %1942 = vmatprep.subr.mxu0 0.0
    %1943 = vmatpush1.msra.mxu0 0.0
    %1944 = vmatprep.subr.mxu0 0.0
    %1945 = vmatpush1.msra.mxu0 0.0
    %1946 = vmatprep.mubr.f32.mxu0 0.0
    %1947 = vmatmul.mubr.f32.gmra.mrb[0].mxu0 %v1880
    %v1948 = vpop.f32.mrb[0].mxu0
    %v1949 = vadd.f32 %v75, %v1948
    %v1950 = vpop.f32.mrb[0].mxu0
    %1951 = vdwg.mxu0
    %v1952 = vsel %vm94, %v1775, 0
    %1954 = vmatprep.subr.mxu0 0.0
    %1955 = vmatpush1.msra.mxu0 %v62
    %1956 = vmatprep.subr.mxu0 0.0
    %1957 = vmatpush1.msra.mxu0 %v63
    %1958 = vmatprep.subr.mxu0 0.0
    %1959 = vmatpush1.msra.mxu0 %v64
    %1960 = vmatprep.subr.mxu0 0.0
    %1961 = vmatpush1.msra.mxu0 %v65
    %1962 = vmatprep.subr.mxu0 0.0
    %1963 = vmatpush1.msra.mxu0 0.0
    %1964 = vmatprep.subr.mxu0 0.0
    %1965 = vmatpush1.msra.mxu0 0.0
    %1966 = vmatprep.subr.mxu0 0.0
    %1967 = vmatpush1.msra.mxu0 0.0
    %1968 = vmatprep.subr.mxu0 0.0
    %1969 = vmatpush1.msra.mxu0 0.0
    %1970 = vmatprep.subr.mxu0 0.0
    %1971 = vmatpush1.msra.mxu0 0.0
    %1972 = vmatprep.subr.mxu0 0.0
    %1973 = vmatpush1.msra.mxu0 0.0
    %1974 = vmatprep.subr.mxu0 0.0
    %1975 = vmatpush1.msra.mxu0 0.0
    %1976 = vmatprep.subr.mxu0 0.0
    %1977 = vmatpush1.msra.mxu0 0.0
    %1978 = vmatprep.subr.mxu0 0.0
    %1979 = vmatpush1.msra.mxu0 0.0
    %1980 = vmatprep.subr.mxu0 0.0
    %1981 = vmatpush1.msra.mxu0 0.0
    %1982 = vmatprep.subr.mxu0 0.0
    %1983 = vmatpush1.msra.mxu0 0.0
    %1984 = vmatprep.subr.mxu0 0.0
    %1985 = vmatpush1.msra.mxu0 0.0
    %1986 = vmatprep.subr.mxu0 0.0
    %1987 = vmatpush1.msra.mxu0 0.0
    %1988 = vmatprep.subr.mxu0 0.0
    %1989 = vmatpush1.msra.mxu0 0.0
    %1990 = vmatprep.subr.mxu0 0.0
    %1991 = vmatpush1.msra.mxu0 0.0
    %1992 = vmatprep.subr.mxu0 0.0
    %1993 = vmatpush1.msra.mxu0 0.0
    %1994 = vmatprep.subr.mxu0 0.0
    %1995 = vmatpush1.msra.mxu0 0.0
    %1996 = vmatprep.subr.mxu0 0.0
    %1997 = vmatpush1.msra.mxu0 0.0
    %1998 = vmatprep.subr.mxu0 0.0
    %1999 = vmatpush1.msra.mxu0 0.0
    %2000 = vmatprep.subr.mxu0 0.0
    %2001 = vmatpush1.msra.mxu0 0.0
    %2002 = vmatprep.subr.mxu0 0.0
    %2003 = vmatpush1.msra.mxu0 0.0
    %2004 = vmatprep.subr.mxu0 0.0
    %2005 = vmatpush1.msra.mxu0 0.0
    %2006 = vmatprep.subr.mxu0 0.0
    %2007 = vmatpush1.msra.mxu0 0.0
    %2008 = vmatprep.subr.mxu0 0.0
    %2009 = vmatpush1.msra.mxu0 0.0
    %2010 = vmatprep.subr.mxu0 0.0
    %2011 = vmatpush1.msra.mxu0 0.0
    %2012 = vmatprep.subr.mxu0 0.0
    %2013 = vmatpush1.msra.mxu0 0.0
    %2014 = vmatprep.subr.mxu0 0.0
    %2015 = vmatpush1.msra.mxu0 0.0
    %2016 = vmatprep.subr.mxu0 0.0
    %2017 = vmatpush1.msra.mxu0 0.0
    %2018 = vmatprep.mubr.f32.mxu0 0.0
    %2019 = vmatmul.mubr.f32.gmra.mrb[0].mxu0 %v1952
    %v2020 = vpop.f32.mrb[0].mxu0
    %v2021 = vadd.f32 0.0, %v2020
    %v2022 = vpop.f32.mrb[0].mxu0
    %2023 = vdwg.mxu0
    %v2024 = vadd.f32 %v1949, %v2021
    %v2025 = vxor.u32 %v2024, 2147483648
    %v2026 = vmul.f32 %v2025, 1.442695
    %v2027 = vpow.pop %v2026
    %v2028 = vadd.f32 %v2027, 1.0
    %v2029 = vrcp.pop %v2028
    %v2030 = vmul.f32 1.0, %v2029
    %v2031 = vadd.f32 %v2021, %v357
    %2033 = vrot.lane.b32.xlu0 %v2031, 64
    %v2034 = vpop.permute.xlu0 %2033
    %v2036 = vmul.f32 %v2030, %v2034
    %2038 = vrot.lane.b32.xlu0 %v2036, 64
    %v2039 = vpop.permute.xlu0 %2038
    %v2041 = vadd.f32 %v1949, %v2039
    %v2042 = vtanh.pop %v2041
    %v2043 = vsub.f32 1.0, %v2030
    %2045 = vrot.lane.b32.xlu0 %v2042, 96
    %v2046 = vpop.permute.xlu0 %2045
    %v2048 = vmul.f32 %v2043, %v2046
    %v2049 = vmul.f32 %v2030, %v1772
    %v2050 = vadd.f32 %v2048, %v2049
    %2052 = vrot.lane.b32.xlu0 %v2050, 96
    %v2053 = vpop.permute.xlu0 %2052
    %2055 = vst.msk [vmem:[#allocation2 + $0x18] sm:$0xf] %vm386, %v2053
    %s2056 = scalar_lea.vmem %s0, 28
    %v2057 = vld [vmem:[%s2056] sm:$0xf]
    %2058 = vmatprep.subr.mxu0 0.0
    %2059 = vmatpush1.msra.mxu0 %v57
    %2060 = vmatprep.subr.mxu0 0.0
    %2061 = vmatpush1.msra.mxu0 %v58
    %2062 = vmatprep.subr.mxu0 0.0
    %2063 = vmatpush1.msra.mxu0 %v59
    %2064 = vmatprep.subr.mxu0 0.0
    %2065 = vmatpush1.msra.mxu0 %v60
    %2066 = vmatprep.subr.mxu0 0.0
    %2067 = vmatpush1.msra.mxu0 0.0
    %2068 = vmatprep.subr.mxu0 0.0
    %2069 = vmatpush1.msra.mxu0 0.0
    %2070 = vmatprep.subr.mxu0 0.0
    %2071 = vmatpush1.msra.mxu0 0.0
    %2072 = vmatprep.subr.mxu0 0.0
    %2073 = vmatpush1.msra.mxu0 0.0
    %2074 = vmatprep.subr.mxu0 0.0
    %2075 = vmatpush1.msra.mxu0 0.0
    %2076 = vmatprep.subr.mxu0 0.0
    %2077 = vmatpush1.msra.mxu0 0.0
    %2078 = vmatprep.subr.mxu0 0.0
    %2079 = vmatpush1.msra.mxu0 0.0
    %2080 = vmatprep.subr.mxu0 0.0
    %2081 = vmatpush1.msra.mxu0 0.0
    %2082 = vmatprep.subr.mxu0 0.0
    %2083 = vmatpush1.msra.mxu0 0.0
    %2084 = vmatprep.subr.mxu0 0.0
    %2085 = vmatpush1.msra.mxu0 0.0
    %2086 = vmatprep.subr.mxu0 0.0
    %2087 = vmatpush1.msra.mxu0 0.0
    %2088 = vmatprep.subr.mxu0 0.0
    %2089 = vmatpush1.msra.mxu0 0.0
    %2090 = vmatprep.subr.mxu0 0.0
    %2091 = vmatpush1.msra.mxu0 0.0
    %2092 = vmatprep.subr.mxu0 0.0
    %2093 = vmatpush1.msra.mxu0 0.0
    %2094 = vmatprep.subr.mxu0 0.0
    %2095 = vmatpush1.msra.mxu0 0.0
    %2096 = vmatprep.subr.mxu0 0.0
    %2097 = vmatpush1.msra.mxu0 0.0
    %2098 = vmatprep.subr.mxu0 0.0
    %2099 = vmatpush1.msra.mxu0 0.0
    %2100 = vmatprep.subr.mxu0 0.0
    %2101 = vmatpush1.msra.mxu0 0.0
    %2102 = vmatprep.subr.mxu0 0.0
    %2103 = vmatpush1.msra.mxu0 0.0
    %2104 = vmatprep.subr.mxu0 0.0
    %2105 = vmatpush1.msra.mxu0 0.0
    %2106 = vmatprep.subr.mxu0 0.0
    %2107 = vmatpush1.msra.mxu0 0.0
    %2108 = vmatprep.subr.mxu0 0.0
    %2109 = vmatpush1.msra.mxu0 0.0
    %2110 = vmatprep.subr.mxu0 0.0
    %2111 = vmatpush1.msra.mxu0 0.0
    %2112 = vmatprep.subr.mxu0 0.0
    %2113 = vmatpush1.msra.mxu0 0.0
    %2114 = vmatprep.subr.mxu0 0.0
    %2115 = vmatpush1.msra.mxu0 0.0
    %2116 = vmatprep.subr.mxu0 0.0
    %2117 = vmatpush1.msra.mxu0 0.0
    %2118 = vmatprep.subr.mxu0 0.0
    %2119 = vmatpush1.msra.mxu0 0.0
    %2120 = vmatprep.subr.mxu0 0.0
    %2121 = vmatpush1.msra.mxu0 0.0
    %2122 = vmatprep.mubr.f32.mxu0 0.0
    %2123 = vmatmul.mubr.f32.gmra.mrb[0].mxu0 %v1880
    %v2124 = vpop.f32.mrb[0].mxu0
    %v2125 = vadd.f32 0.0, %v2124
    %v2126 = vpop.f32.mrb[0].mxu0
    %2127 = vdwg.mxu0
    %v2128 = vadd.f32 %v2057, %v2125
    %v2129 = vxor.u32 %v2128, 2147483648
    %v2130 = vmul.f32 %v2129, 1.442695
    %v2131 = vpow.pop %v2130
    %v2132 = vadd.f32 %v2131, 1.0
    %v2133 = vrcp.pop %v2132
    %v2134 = vmul.f32 1.0, %v2133
    %v2135 = vadd.f32 %v2125, %v176
    %2137 = vrot.lane.b32.xlu0 %v2135, 64
    %v2138 = vpop.permute.xlu0 %2137
    %v2140 = vmul.f32 %v2134, %v2138
    %2142 = vrot.lane.b32.xlu0 %v2140, 64
    %v2143 = vpop.permute.xlu0 %2142
    %v2145 = vadd.f32 %v2057, %v2143
    %v2146 = vtanh.pop %v2145
    %v2147 = vsub.f32 1.0, %v2134
    %2149 = vrot.lane.b32.xlu0 %v2146, 96
    %v2150 = vpop.permute.xlu0 %2149
    %v2152 = vmul.f32 %v2147, %v2150
    %v2153 = vmul.f32 %v2134, %v1876
    %v2154 = vadd.f32 %v2152, %v2153
    %2156 = vrot.lane.b32.xlu0 %v2154, 96
    %v2157 = vpop.permute.xlu0 %2156
    %v2158 = vsel %vm94, %v2157, 0
    %2160 = vmatprep.subr.mxu0 0.0
    %2161 = vmatpush1.msra.mxu0 %v66
    %2162 = vmatprep.subr.mxu0 0.0
    %2163 = vmatpush1.msra.mxu0 %v67
    %2164 = vmatprep.subr.mxu0 0.0
    %2165 = vmatpush1.msra.mxu0 %v68
    %2166 = vmatprep.subr.mxu0 0.0
    %2167 = vmatpush1.msra.mxu0 %v69
    %2168 = vmatprep.subr.mxu0 0.0
    %2169 = vmatpush1.msra.mxu0 0.0
    %2170 = vmatprep.subr.mxu0 0.0
    %2171 = vmatpush1.msra.mxu0 0.0
    %2172 = vmatprep.subr.mxu0 0.0
    %2173 = vmatpush1.msra.mxu0 0.0
    %2174 = vmatprep.subr.mxu0 0.0
    %2175 = vmatpush1.msra.mxu0 0.0
    %2176 = vmatprep.subr.mxu0 0.0
    %2177 = vmatpush1.msra.mxu0 0.0
    %2178 = vmatprep.subr.mxu0 0.0
    %2179 = vmatpush1.msra.mxu0 0.0
    %2180 = vmatprep.subr.mxu0 0.0
    %2181 = vmatpush1.msra.mxu0 0.0
    %2182 = vmatprep.subr.mxu0 0.0
    %2183 = vmatpush1.msra.mxu0 0.0
    %2184 = vmatprep.subr.mxu0 0.0
    %2185 = vmatpush1.msra.mxu0 0.0
    %2186 = vmatprep.subr.mxu0 0.0
    %2187 = vmatpush1.msra.mxu0 0.0
    %2188 = vmatprep.subr.mxu0 0.0
    %2189 = vmatpush1.msra.mxu0 0.0
    %2190 = vmatprep.subr.mxu0 0.0
    %2191 = vmatpush1.msra.mxu0 0.0
    %2192 = vmatprep.subr.mxu0 0.0
    %2193 = vmatpush1.msra.mxu0 0.0
    %2194 = vmatprep.subr.mxu0 0.0
    %2195 = vmatpush1.msra.mxu0 0.0
    %2196 = vmatprep.subr.mxu0 0.0
    %2197 = vmatpush1.msra.mxu0 0.0
    %2198 = vmatprep.subr.mxu0 0.0
    %2199 = vmatpush1.msra.mxu0 0.0
    %2200 = vmatprep.subr.mxu0 0.0
    %2201 = vmatpush1.msra.mxu0 0.0
    %2202 = vmatprep.subr.mxu0 0.0
    %2203 = vmatpush1.msra.mxu0 0.0
    %2204 = vmatprep.subr.mxu0 0.0
    %2205 = vmatpush1.msra.mxu0 0.0
    %2206 = vmatprep.subr.mxu0 0.0
    %2207 = vmatpush1.msra.mxu0 0.0
    %2208 = vmatprep.subr.mxu0 0.0
    %2209 = vmatpush1.msra.mxu0 0.0
    %2210 = vmatprep.subr.mxu0 0.0
    %2211 = vmatpush1.msra.mxu0 0.0
    %2212 = vmatprep.subr.mxu0 0.0
    %2213 = vmatpush1.msra.mxu0 0.0
    %2214 = vmatprep.subr.mxu0 0.0
    %2215 = vmatpush1.msra.mxu0 0.0
    %2216 = vmatprep.subr.mxu0 0.0
    %2217 = vmatpush1.msra.mxu0 0.0
    %2218 = vmatprep.subr.mxu0 0.0
    %2219 = vmatpush1.msra.mxu0 0.0
    %2220 = vmatprep.subr.mxu0 0.0
    %2221 = vmatpush1.msra.mxu0 0.0
    %2222 = vmatprep.subr.mxu0 0.0
    %2223 = vmatpush1.msra.mxu0 0.0
    %2224 = vmatprep.mubr.f32.mxu0 0.0
    %2225 = vmatmul.mubr.f32.gmra.mrb[0].mxu0 %v2158
    %v2226 = vpop.f32.mrb[0].mxu0
    %v2227 = vadd.f32 %v75, %v2226
    %v2228 = vpop.f32.mrb[0].mxu0
    %2229 = vdwg.mxu0
    %v2230 = vsel %vm94, %v2053, 0
    %2232 = vmatprep.subr.mxu0 0.0
    %2233 = vmatpush1.msra.mxu0 %v62
    %2234 = vmatprep.subr.mxu0 0.0
    %2235 = vmatpush1.msra.mxu0 %v63
    %2236 = vmatprep.subr.mxu0 0.0
    %2237 = vmatpush1.msra.mxu0 %v64
    %2238 = vmatprep.subr.mxu0 0.0
    %2239 = vmatpush1.msra.mxu0 %v65
    %2240 = vmatprep.subr.mxu0 0.0
    %2241 = vmatpush1.msra.mxu0 0.0
    %2242 = vmatprep.subr.mxu0 0.0
    %2243 = vmatpush1.msra.mxu0 0.0
    %2244 = vmatprep.subr.mxu0 0.0
    %2245 = vmatpush1.msra.mxu0 0.0
    %2246 = vmatprep.subr.mxu0 0.0
    %2247 = vmatpush1.msra.mxu0 0.0
    %2248 = vmatprep.subr.mxu0 0.0
    %2249 = vmatpush1.msra.mxu0 0.0
    %2250 = vmatprep.subr.mxu0 0.0
    %2251 = vmatpush1.msra.mxu0 0.0
    %2252 = vmatprep.subr.mxu0 0.0
    %2253 = vmatpush1.msra.mxu0 0.0
    %2254 = vmatprep.subr.mxu0 0.0
    %2255 = vmatpush1.msra.mxu0 0.0
    %2256 = vmatprep.subr.mxu0 0.0
    %2257 = vmatpush1.msra.mxu0 0.0
    %2258 = vmatprep.subr.mxu0 0.0
    %2259 = vmatpush1.msra.mxu0 0.0
    %2260 = vmatprep.subr.mxu0 0.0
    %2261 = vmatpush1.msra.mxu0 0.0
    %2262 = vmatprep.subr.mxu0 0.0
    %2263 = vmatpush1.msra.mxu0 0.0
    %2264 = vmatprep.subr.mxu0 0.0
    %2265 = vmatpush1.msra.mxu0 0.0
    %2266 = vmatprep.subr.mxu0 0.0
    %2267 = vmatpush1.msra.mxu0 0.0
    %2268 = vmatprep.subr.mxu0 0.0
    %2269 = vmatpush1.msra.mxu0 0.0
    %2270 = vmatprep.subr.mxu0 0.0
    %2271 = vmatpush1.msra.mxu0 0.0
    %2272 = vmatprep.subr.mxu0 0.0
    %2273 = vmatpush1.msra.mxu0 0.0
    %2274 = vmatprep.subr.mxu0 0.0
    %2275 = vmatpush1.msra.mxu0 0.0
    %2276 = vmatprep.subr.mxu0 0.0
    %2277 = vmatpush1.msra.mxu0 0.0
    %2278 = vmatprep.subr.mxu0 0.0
    %2279 = vmatpush1.msra.mxu0 0.0
    %2280 = vmatprep.subr.mxu0 0.0
    %2281 = vmatpush1.msra.mxu0 0.0
    %2282 = vmatprep.subr.mxu0 0.0
    %2283 = vmatpush1.msra.mxu0 0.0
    %2284 = vmatprep.subr.mxu0 0.0
    %2285 = vmatpush1.msra.mxu0 0.0
    %2286 = vmatprep.subr.mxu0 0.0
    %2287 = vmatpush1.msra.mxu0 0.0
    %2288 = vmatprep.subr.mxu0 0.0
    %2289 = vmatpush1.msra.mxu0 0.0
    %2290 = vmatprep.subr.mxu0 0.0
    %2291 = vmatpush1.msra.mxu0 0.0
    %2292 = vmatprep.subr.mxu0 0.0
    %2293 = vmatpush1.msra.mxu0 0.0
    %2294 = vmatprep.subr.mxu0 0.0
    %2295 = vmatpush1.msra.mxu0 0.0
    %2296 = vmatprep.mubr.f32.mxu0 0.0
    %2297 = vmatmul.mubr.f32.gmra.mrb[0].mxu0 %v2230
    %v2298 = vpop.f32.mrb[0].mxu0
    %v2299 = vadd.f32 0.0, %v2298
    %v2300 = vpop.f32.mrb[0].mxu0
    %2301 = vdwg.mxu0
    %v2302 = vadd.f32 %v2227, %v2299
    %v2303 = vxor.u32 %v2302, 2147483648
    %v2304 = vmul.f32 %v2303, 1.442695
    %v2305 = vpow.pop %v2304
    %v2306 = vadd.f32 %v2305, 1.0
    %v2307 = vrcp.pop %v2306
    %v2308 = vmul.f32 1.0, %v2307
    %v2309 = vadd.f32 %v2299, %v357
    %2311 = vrot.lane.b32.xlu0 %v2309, 64
    %v2312 = vpop.permute.xlu0 %2311
    %v2314 = vmul.f32 %v2308, %v2312
    %2316 = vrot.lane.b32.xlu0 %v2314, 64
    %v2317 = vpop.permute.xlu0 %2316
    %v2319 = vadd.f32 %v2227, %v2317
    %v2320 = vtanh.pop %v2319
    %v2321 = vsub.f32 1.0, %v2308
    %2323 = vrot.lane.b32.xlu0 %v2320, 96
    %v2324 = vpop.permute.xlu0 %2323
    %v2326 = vmul.f32 %v2321, %v2324
    %v2327 = vmul.f32 %v2308, %v2050
    %v2328 = vadd.f32 %v2326, %v2327
    %2330 = vrot.lane.b32.xlu0 %v2328, 96
    %v2331 = vpop.permute.xlu0 %2330
    %2333 = vst.msk [vmem:[#allocation2 + $0x1c] sm:$0xf] %vm386, %v2331
    %v2334 = vld [vmem:[#allocation2] sm:$0xff]
    %v2335 = vld [vmem:[#allocation2 + $0x8] sm:$0xff]
    %v2336 = vld [vmem:[#allocation2 + $0x10] sm:$0xff]
    %v2337 = vld [vmem:[#allocation2 + $0x18] sm:$0xff]
    %v2338 = vld [vmem:[%s6] sm:$0xff]
    %v2339 = vld [vmem:[%s6 + $0x8] sm:$0xff]
    %v2340 = vld [vmem:[%s6 + $0x10] sm:$0xff]
    %v2341 = vld [vmem:[%s6 + $0x18] sm:$0xff]
    %v2342 = vld [vmem:[%s7] sm:$0x1]
    %v2344 = vlaneseq
    %v2345 = vshrl.u32 %v2344, 7
    %v2346 = vsub.s32 0, %v2345
    %v2347 = vrot.slane %v2342, %v2346
    %v2350 = vsel %vm94, %v2334, 0
    %v2353 = vsel %vm94, %v2335, 0
    %v2356 = vsel %vm94, %v2336, 0
    %v2359 = vsel %vm94, %v2337, 0
    %2361 = vmatprep.subr.mxu0 0.0
    %2362 = vmatpush1.msra.mxu0 %v2338
    %2363 = vmatprep.subr.mxu0 0.0
    %2364 = vmatpush1.msra.mxu0 %v2339
    %2365 = vmatprep.subr.mxu0 0.0
    %2366 = vmatpush1.msra.mxu0 %v2340
    %2367 = vmatprep.subr.mxu0 0.0
    %2368 = vmatpush1.msra.mxu0 %v2341
    %2369 = vmatprep.subr.mxu0 0.0
    %2370 = vmatpush1.msra.mxu0 0.0
    %2371 = vmatprep.subr.mxu0 0.0
    %2372 = vmatpush1.msra.mxu0 0.0
    %2373 = vmatprep.subr.mxu0 0.0
    %2374 = vmatpush1.msra.mxu0 0.0
    %2375 = vmatprep.subr.mxu0 0.0
    %2376 = vmatpush1.msra.mxu0 0.0
    %2377 = vmatprep.subr.mxu0 0.0
    %2378 = vmatpush1.msra.mxu0 0.0
    %2379 = vmatprep.subr.mxu0 0.0
    %2380 = vmatpush1.msra.mxu0 0.0
    %2381 = vmatprep.subr.mxu0 0.0
    %2382 = vmatpush1.msra.mxu0 0.0
    %2383 = vmatprep.subr.mxu0 0.0
    %2384 = vmatpush1.msra.mxu0 0.0
    %2385 = vmatprep.subr.mxu0 0.0
    %2386 = vmatpush1.msra.mxu0 0.0
    %2387 = vmatprep.subr.mxu0 0.0
    %2388 = vmatpush1.msra.mxu0 0.0
    %2389 = vmatprep.subr.mxu0 0.0
    %2390 = vmatpush1.msra.mxu0 0.0
    %2391 = vmatprep.subr.mxu0 0.0
    %2392 = vmatpush1.msra.mxu0 0.0
    %2393 = vmatprep.subr.mxu0 0.0
    %2394 = vmatpush1.msra.mxu0 0.0
    %2395 = vmatprep.subr.mxu0 0.0
    %2396 = vmatpush1.msra.mxu0 0.0
    %2397 = vmatprep.subr.mxu0 0.0
    %2398 = vmatpush1.msra.mxu0 0.0
    %2399 = vmatprep.subr.mxu0 0.0
    %2400 = vmatpush1.msra.mxu0 0.0
    %2401 = vmatprep.subr.mxu0 0.0
    %2402 = vmatpush1.msra.mxu0 0.0
    %2403 = vmatprep.subr.mxu0 0.0
    %2404 = vmatpush1.msra.mxu0 0.0
    %2405 = vmatprep.subr.mxu0 0.0
    %2406 = vmatpush1.msra.mxu0 0.0
    %2407 = vmatprep.subr.mxu0 0.0
    %2408 = vmatpush1.msra.mxu0 0.0
    %2409 = vmatprep.subr.mxu0 0.0
    %2410 = vmatpush1.msra.mxu0 0.0
    %2411 = vmatprep.subr.mxu0 0.0
    %2412 = vmatpush1.msra.mxu0 0.0
    %2413 = vmatprep.subr.mxu0 0.0
    %2414 = vmatpush1.msra.mxu0 0.0
    %2415 = vmatprep.subr.mxu0 0.0
    %2416 = vmatpush1.msra.mxu0 0.0
    %2417 = vmatprep.subr.mxu0 0.0
    %2418 = vmatpush1.msra.mxu0 0.0
    %2419 = vmatprep.subr.mxu0 0.0
    %2420 = vmatpush1.msra.mxu0 0.0
    %2421 = vmatprep.subr.mxu0 0.0
    %2422 = vmatpush1.msra.mxu0 0.0
    %2423 = vmatprep.subr.mxu0 0.0
    %2424 = vmatpush1.msra.mxu0 0.0
    %2425 = vmatprep.mubr.f32.mxu0 0.0
    %2426 = vmatmul.mubr.f32.gmra.mrb[0].mxu0 %v2350
    %v2427 = vpop.f32.mrb[0].mxu0
    %v2428 = vadd.f32 %v2347, %v2427
    %v2429 = vpop.f32.mrb[0].mxu0
    %2430 = vmatprep.mubr.f32.mxu0 0.0
    %2431 = vmatmul.mubr.f32.gmra.mrb[0].mxu0 %v2353
    %v2432 = vpop.f32.mrb[0].mxu0
    %v2433 = vadd.f32 %v2347, %v2432
    %v2434 = vpop.f32.mrb[0].mxu0
    %2435 = vmatprep.mubr.f32.mxu0 0.0
    %2436 = vmatmul.mubr.f32.gmra.mrb[0].mxu0 %v2356
    %v2437 = vpop.f32.mrb[0].mxu0
    %v2438 = vadd.f32 %v2347, %v2437
    %v2439 = vpop.f32.mrb[0].mxu0
    %2440 = vmatprep.mubr.f32.mxu0 0.0
    %2441 = vmatmul.mubr.f32.gmra.mrb[0].mxu0 %v2359
    %v2442 = vpop.f32.mrb[0].mxu0
    %v2443 = vadd.f32 %v2347, %v2442
    %v2444 = vpop.f32.mrb[0].mxu0
    %2445 = vdwg.mxu0
    %vm2446 = vcmask 130048
    %2447 = vst.msk [vmem:[%s8] sm:$0xff] %vm2446, %v2428
    %2448 = vst.msk [vmem:[%s8 + $0x8] sm:$0xff] %vm2446, %v2433
    %2449 = vst.msk [vmem:[%s8 + $0x10] sm:$0xff] %vm2446, %v2438
    %2450 = vst.msk [vmem:[%s8 + $0x18] sm:$0xff] %vm2446, %v2443
    // Predicated region
    $region42: #{tpu_custom_call.1} parent=1 // pred_check
      _
    $region43: #{tpu_custom_call.1} parent=1 // pred_check_branch
      %2452 = sbr.rel (0) target = $region45
    $region44: #{tpu_custom_call.1} parent=1 // pred_region
      _
    $region45: #{tpu_custom_call.1} parent=1 // pred_fallthru
      _
    // Predicated region
    $region46: #{tpu_custom_call.1} parent=1 // pred_check
      _
    $region47: #{tpu_custom_call.1} parent=1 // pred_check_branch
      %2454 = sbr.rel (0) target = $region49
    $region48: #{tpu_custom_call.1} parent=1 // pred_region
      _
    $region49: #{tpu_custom_call.1} parent=1 // pred_fallthru
      _
    %2455 = vsyncpa [#allocation4], 1
    %2456 = vsyncpa [#allocation6], 1

</llo_original>
